<compile_context>
chip_gen: v7x
topology: tpu7x:2x2x1
jax: 0.10.0
libtpu: 0.0.40
codegen_flags: <defaults>
</compile_context>

<pallas_src>
import functools

import jax
import jax.numpy as jnp
from jax import lax
from jax.experimental import pallas as pl
from jax.experimental.pallas import tpu as pltpu

N_PAD = 128  # lane-pad the action dimension to one full lane tile


def _dqn_kernel(x_ref, w_ref, b_ref, q_ref, a_ref, *, action_space):
    # x_ref: (TB, K) f32   w_ref: (K, N_PAD) bf16   b_ref: (1, N_PAD) f32
    # q_ref: (TB, N_PAD) f32   a_ref: (TB, 1) int32
    x_bf = x_ref[...].astype(jnp.bfloat16)  # cast in-kernel (VPU), f32 never re-written to HBM
    logits = lax.dot_general(
        x_bf,
        w_ref[...],
        dimension_numbers=(((1,), (0,)), ((), ())),  # canonical (M,K)@(K,N)
        preferred_element_type=jnp.float32,
    ) + b_ref[...]                                   # f32 epilogue (v5e-friendly)
    q_ref[...] = logits                              # lane-dense (TB, 128) store

    # Fused greedy argmax over the real (un-padded) action lanes.
    col = lax.broadcasted_iota(jnp.int32, logits.shape, 1)
    masked = jnp.where(col < action_space, logits, jnp.float32(-jnp.inf))
    row_max = jnp.max(masked, axis=-1, keepdims=True)
    idx_or_big = jnp.where(masked == row_max, col, jnp.int32(logits.shape[1]))
    a_ref[...] = jnp.min(idx_or_big, axis=-1, keepdims=True)  # first max index (torch .max(1)[1])


def prepare_dqn_params(weight, bias):
    """One-time parameter prep (do NOT call per forward).

    weight: (action_space, 7056) PyTorch layout -> transposed + lane-padded (7056, 128) bf16.
    bias:   (action_space,) -> (1, 128) f32 (zero-padded).
    """
    n, k = weight.shape
    w_pad = jnp.zeros((k, N_PAD), jnp.bfloat16).at[:, :n].set(weight.T.astype(jnp.bfloat16))
    b_pad = jnp.zeros((1, N_PAD), jnp.float32).at[0, :n].set(bias.astype(jnp.float32))
    return w_pad, b_pad


def dqn_forward(x, w_pad, b_pad, action_space):
    """x: (B, C, H, W) or (B, 7056) f32.

    Returns (q_values (B, action_space) f32, greedy_action (B,) int32).
    """
    b = x.shape[0]
    x_flat = x.reshape(b, -1)                 # free view, stays f32 (cast happens in-kernel)
    k = x_flat.shape[1]

    # Batch tiling: full-array block for small B; 512-row tiles (parallel across
    # v7x's 2 TCs, double-buffered) for large training batches.
    tb = 512 if (b >= 512 and b % 512 == 0) else b
    grid = (b // tb,)

    # VMEM budget: double-buffered x tiles + resident weight + outputs (+ margin),
    # clamped to v7x's 64 MiB physical VMEM.
    vmem_bytes = (2 * tb * k * 4) + (2 * k * N_PAD * 2) + (2 * tb * N_PAD * 4) \
                 + (2 * tb * 4) + (1 << 20)
    vmem_bytes = int(min(max(vmem_bytes, 16 * 1024 * 1024), 64 * 1024 * 1024))

    cost = pl.CostEstimate(
        flops=2 * b * k * N_PAD,
        transcendentals=0,
        bytes_accessed=b * k * 4 + k * N_PAD * 2 + N_PAD * 4 + b * N_PAD * 4 + b * 4,
    )

    q_pad, act = pl.pallas_call(
        functools.partial(_dqn_kernel, action_space=action_space),
        out_shape=(
            jax.ShapeDtypeStruct((b, N_PAD), jnp.float32),
            jax.ShapeDtypeStruct((b, 1), jnp.int32),
        ),
        grid_spec=pltpu.PrefetchScalarGridSpec(
            num_scalar_prefetch=0,
            grid=grid,
            in_specs=[
                pl.BlockSpec((tb, k), lambda i: (i, 0)),        # x tile
                pl.BlockSpec((k, N_PAD), lambda i: (0, 0)),     # weight, resident
                pl.BlockSpec((1, N_PAD), lambda i: (0, 0)),     # bias, resident
            ],
            out_specs=[
                pl.BlockSpec((tb, N_PAD), lambda i: (i, 0)),    # lane-dense Q tile
                pl.BlockSpec((tb, 1), lambda i: (i, 0)),        # greedy action
            ],
        ),
        compiler_params=pltpu.CompilerParams(
            dimension_semantics=("parallel",),
            vmem_limit_bytes=vmem_bytes,
        ),
        cost_estimate=cost,
    )(x_flat, w_pad, b_pad)

    return q_pad[:, :action_space], act[:, 0]


if __name__ == "__main__":
    key = jax.random.PRNGKey(0)
    k_x, k_w, k_b = jax.random.split(key, 3)

    B, C, H, W = 2, 1, 84, 84            # 1*84*84 = 7056, matching nn.Linear(7056, n)
    action_space = 6                      # e.g. Pong action space

    # Deterministic init mimicking nn.Linear default: U(-1/sqrt(fan_in), 1/sqrt(fan_in))
    fan_in = C * H * W
    bound = 1.0 / (fan_in ** 0.5)
    weight = jax.random.uniform(k_w, (action_space, fan_in), jnp.float32, -bound, bound)
    bias = jax.random.uniform(k_b, (action_space,), jnp.float32, -bound, bound)
    x = jax.random.normal(k_x, (B, C, H, W), jnp.float32)

    # One-time parameter prep (hoisted out of the forward path).
    w_pad, b_pad = prepare_dqn_params(weight, bias)

    q_vals, greedy = dqn_forward(x, w_pad, b_pad, action_space)
    q_vals, greedy = jax.block_until_ready((q_vals, greedy))

    # Reference with the same effective (bf16-rounded) operands, f32 accumulation.
    x_eff = x.reshape(B, -1).astype(jnp.bfloat16).astype(jnp.float32)
    w_eff = w_pad[:, :action_space].astype(jnp.float32)
    ref = jnp.dot(x_eff, w_eff, precision=lax.Precision.HIGHEST) + bias

    assert q_vals.shape == (B, action_space)
    assert greedy.shape == (B,) and greedy.dtype == jnp.int32
    assert jnp.allclose(q_vals, ref, atol=5e-3, rtol=5e-3), float(jnp.max(jnp.abs(q_vals - ref)))
    # Fused argmax must agree exactly with argmax over the kernel's own Q-values.
    assert jnp.array_equal(greedy, jnp.argmax(q_vals, axis=-1).astype(jnp.int32))

    # TODO(synk): DQN.act()'s epsilon-greedy branch (host-side python `random` + .item())
    # is host control flow; only the greedy argmax is fused into the kernel.
    print("KERNEL_OK")
</pallas_src>

<mosaic_0001>
module attributes {stable_mosaic.version = 11 : i64} {
  func.func @_dqn_kernel(%arg0: i32, %arg1: memref<2x7056xf32, #tpu.memory_space<vmem>>, %arg2: memref<7056x128xbf16, #tpu.memory_space<vmem>>, %arg3: memref<1x128xf32, #tpu.memory_space<vmem>>, %arg4: memref<2x128xf32, #tpu.memory_space<vmem>>, %arg5: memref<2x1xi32, #tpu.memory_space<vmem>>) attributes {dimension_semantics = [#tpu.dimension_semantics<parallel>], iteration_bounds = array<i64: 1>, scalar_prefetch = 0 : i64, scratch_operands = 0 : i64, tpu.core_type = #tpu.core_type<tc>, window_params = [{transform_indices = @transform_0, window_bounds = array<i64: 2, 7056>}, {pipeline_mode = #tpu.pipeline_mode<synchronous>, transform_indices = @transform_1, window_bounds = array<i64: 7056, 128>}, {pipeline_mode = #tpu.pipeline_mode<synchronous>, transform_indices = @transform_2, window_bounds = array<i64: 1, 128>}, {transform_indices = @transform_3, window_bounds = array<i64: 2, 128>}, {transform_indices = @transform_4, window_bounds = array<i64: 2, 1>}]} {
    %c0 = arith.constant 0 : index
    %c0_0 = arith.constant 0 : index
    %0 = vector.load %arg1[%c0, %c0_0] : memref<2x7056xf32, #tpu.memory_space<vmem>>, vector<2x7056xf32>
    %1 = arith.truncf %0 : vector<2x7056xf32> to vector<2x7056xbf16>
    %c0_1 = arith.constant 0 : index
    %c0_2 = arith.constant 0 : index
    %2 = vector.load %arg2[%c0_1, %c0_2] : memref<7056x128xbf16, #tpu.memory_space<vmem>>, vector<7056x128xbf16>
    %cst = arith.constant dense<0.000000e+00> : vector<2x128xf32>
    %3 = tpu.matmul %1, %2, %cst {dimension_numbers = #tpu.dot_dimension_numbers<[1], [0], [0], [1], [0, 0, 1, 1], [], []>} : vector<2x7056xbf16>, vector<7056x128xbf16>, vector<2x128xf32> -> vector<2x128xf32>
    %c0_3 = arith.constant 0 : index
    %c0_4 = arith.constant 0 : index
    %4 = vector.load %arg3[%c0_3, %c0_4] : memref<1x128xf32, #tpu.memory_space<vmem>>, vector<1x128xf32>
    %5 = vector.broadcast %4 : vector<1x128xf32> to vector<2x128xf32>
    %6 = arith.addf %3, %5 : vector<2x128xf32>
    %c0_5 = arith.constant 0 : index
    %c0_6 = arith.constant 0 : index
    %7 = vector.load %arg4[%c0_5, %c0_6] : memref<2x128xf32, #tpu.memory_space<vmem>>, vector<2x128xf32>
    tpu.vector_store %arg4[%c0_5, %c0_6], %6 {strides = array<i32>} : memref<2x128xf32, #tpu.memory_space<vmem>>, vector<2x128xf32>,
    %8 = tpu.iota {dimensions = array<i32: 1>} : vector<2x128xi32>
    %c6_i32 = arith.constant 6 : i32
    %9 = vector.broadcast %c6_i32 : i32 to vector<2x128xi32>
    %10 = arith.cmpi slt, %8, %9 : vector<2x128xi32>
    %cst_7 = arith.constant 0xFF800000 : f32
    %11 = vector.broadcast %cst_7 : f32 to vector<2x128xf32>
    %12 = arith.select %10, %6, %11 : vector<2x128xi1>, vector<2x128xf32>
    %cst_8 = arith.constant dense<0xFF800000> : vector<2xf32>
    %13 = vector.multi_reduction <maximumf>, %12, %cst_8 [1] : vector<2x128xf32> to vector<2xf32>
    %14 = vector.shape_cast %13 : vector<2xf32> to vector<2x1xf32>
    %15 = vector.broadcast %14 : vector<2x1xf32> to vector<2x128xf32>
    %16 = arith.cmpf oeq, %12, %15 : vector<2x128xf32>
    %c128_i32 = arith.constant 128 : i32
    %17 = vector.broadcast %c128_i32 : i32 to vector<2x128xi32>
    %18 = arith.select %16, %8, %17 : vector<2x128xi1>, vector<2x128xi32>
    %cst_9 = arith.constant dense<2147483647> : vector<2xi32>
    %19 = vector.multi_reduction <minsi>, %18, %cst_9 [1] : vector<2x128xi32> to vector<2xi32>
    %20 = vector.shape_cast %19 : vector<2xi32> to vector<2x1xi32>
    %c0_10 = arith.constant 0 : index
    %c0_11 = arith.constant 0 : index
    %21 = vector.load %arg5[%c0_10, %c0_11] : memref<2x1xi32, #tpu.memory_space<vmem>>, vector<2x1xi32>
    tpu.vector_store %arg5[%c0_10, %c0_11], %20 {strides = array<i32>} : memref<2x1xi32, #tpu.memory_space<vmem>>, vector<2x1xi32>,
    return
  }
  func.func @transform_0(%arg0: i32) -> (i32, i32) {
    %c0_i32 = arith.constant 0 : i32
    %c0_i32_0 = arith.constant 0 : i32
    return %arg0, %c0_i32 : i32, i32
  }
  func.func @transform_1(%arg0: i32) -> (i32, i32) {
    %c0_i32 = arith.constant 0 : i32
    %c0_i32_0 = arith.constant 0 : i32
    %c0_i32_1 = arith.constant 0 : i32
    return %c0_i32, %c0_i32_0 : i32, i32
  }
  func.func @transform_2(%arg0: i32) -> (i32, i32) {
    %c0_i32 = arith.constant 0 : i32
    %c0_i32_0 = arith.constant 0 : i32
    %c0_i32_1 = arith.constant 0 : i32
    return %c0_i32, %c0_i32_0 : i32, i32
  }
  func.func @transform_3(%arg0: i32) -> (i32, i32) {
    %c0_i32 = arith.constant 0 : i32
    %c0_i32_0 = arith.constant 0 : i32
    return %arg0, %c0_i32 : i32, i32
  }
  func.func @transform_4(%arg0: i32) -> (i32, i32) {
    %c0_i32 = arith.constant 0 : i32
    %c0_i32_0 = arith.constant 0 : i32
    return %arg0, %c0_i32 : i32, i32
  }
}

</mosaic_0001>

<llo_original>
// kernel: tpu_custom_call.1
$region0: #{tpu_custom_call.1}
  #allocation0 [shape = 'u32[]', space=smem, size = 0x4, offset = 0x4, fixed_abs, tag = 'smem constant byte address 0x4 - core index']
  #allocation1 [shape = 'u32[144,128]{1,0:T(1,128)}', space=vmem, size = 0x12000, scoped, tag = 'internal scratch']
  %s0 = inlined_call_operand.hbm [shape: f32[2,7056], index: 0, kind: input, shape index: {}]
  %s1 = inlined_call_operand.hbm [shape: bf16[7056,128], index: 1, kind: input, shape index: {}]
  %s2 = inlined_call_operand.hbm [shape: f32[1,128], index: 2, kind: input, shape index: {}]
  %s3 = inlined_call_operand.hbm [shape: f32[2,128], index: 3, kind: output, shape index: {0}]
  %s4 = inlined_call_operand.vmem [shape: s32[2,1], index: 4, kind: output, shape index: {1}]
  %5 = xla_tuple %s3, %s4
  %s6 = sld [smem:[#allocation0]]
  $region42: #{tpu_custom_call.1} parent=0
    _
  %s8 = ssub.s32 1, %s6
  %s9 = scalar_select 0, %s8, %s6
  $region1: #{tpu_custom_call.1} parent=0
    #allocation2 [shape = 'u8[57344]{0}', space=vmem, size = 0xe000, scoped, tag = 'input window, operand 0, single buffered']
    #allocation3 [shape = 's32[1]{0}', space=sflag, size = 0x4, scoped, tag = 'scoped memory for tpu_custom_call.1']
    #allocation4 [shape = 's32[1]{0}', space=sflag, size = 0x4, scoped, tag = 'scoped memory for tpu_custom_call.1']
    #allocation5 [shape = 'u8[1806336]{0}', space=vmem, size = 0x1b9000, scoped, tag = 'input window, operand 1, single buffered']
    #allocation6 [shape = 's32[1]{0}', space=sflag, size = 0x4, scoped, tag = 'scoped memory for tpu_custom_call.1']
    #allocation7 [shape = 'u8[512]{0}', space=vmem, size = 0x400, scoped, tag = 'input window, operand 2, single buffered']
    #allocation8 [shape = 'u8[1024]{0}', space=vmem, size = 0x400, scoped, tag = 'output window, operand 0, single buffered']
    %10 = vsyncpa [#allocation3], 0
    %11 = vsyncpa [#allocation6], 0
    %12 = vsyncpa [#allocation4], 0
    // Predicated region
    $region2: #{tpu_custom_call.1} parent=1 // pred_check
      _
    $region3: #{tpu_custom_call.1} parent=1 // pred_check_branch
      %14 = sbr.rel (0) target = $region5
    $region4: #{tpu_custom_call.1} parent=1 // pred_region
      %s16 = ssub.s32 1792, 1792
      %17 = vsyncadd [#allocation3], %s16
      %s19 = sshll.u32 [#allocation2], 4
      %s20 = int_to_ptr.vmem [resolvable:$true] %s19
      %22 = dma.hbm_to_vmem [thread:$0]  %s0, 1792, %s20, [#allocation3]
    $region5: #{tpu_custom_call.1} parent=1 // pred_fallthru
      _
    // Predicated region
    $region6: #{tpu_custom_call.1} parent=1 // pred_check
      _
    $region7: #{tpu_custom_call.1} parent=1 // pred_check_branch
      %24 = sbr.rel (0) target = $region9
    $region8: #{tpu_custom_call.1} parent=1 // pred_region
      %s26 = ssub.s32 56448, 56448
      %27 = vsyncadd [#allocation6], %s26
      %s28 = sshll.u32 [#allocation5], 4
      %s29 = int_to_ptr.vmem [resolvable:$true] %s28
      %34 = dma.hbm_to_vmem [thread:$0]  %s1, 56448, %s29, [#allocation6], 64, 64, 4
    $region9: #{tpu_custom_call.1} parent=1 // pred_fallthru
      _
    // Predicated region
    $region10: #{tpu_custom_call.1} parent=1 // pred_check
      _
    $region11: #{tpu_custom_call.1} parent=1 // pred_check_branch
      %36 = sbr.rel (0) target = $region13
    $region12: #{tpu_custom_call.1} parent=1 // pred_region
      %s38 = ssub.s32 16, 16
      %39 = vsyncadd [#allocation6], %s38
      %s41 = sshll.u32 [#allocation7], 4
      %s42 = int_to_ptr.vmem [resolvable:$true] %s41
      %44 = dma.hbm_to_vmem [thread:$0]  %s2, 16, %s42, [#allocation6]
    $region13: #{tpu_custom_call.1} parent=1 // pred_fallthru
      _
    // Predicated region
    $region14: #{tpu_custom_call.1} parent=1 // pred_check
      _
    $region15: #{tpu_custom_call.1} parent=1 // pred_check_branch
      %46 = sbr.rel (0) target = $region17
    $region16: #{tpu_custom_call.1} parent=1 // pred_region
      %47 = dma.done [#allocation3], 1792
    $region17: #{tpu_custom_call.1} parent=1 // pred_fallthru
      _
    // Predicated region
    $region18: #{tpu_custom_call.1} parent=1 // pred_check
      _
    $region19: #{tpu_custom_call.1} parent=1 // pred_check_branch
      %49 = sbr.rel (0) target = $region21
    $region20: #{tpu_custom_call.1} parent=1 // pred_region
      %50 = dma.done [#allocation6], 56448
    $region21: #{tpu_custom_call.1} parent=1 // pred_fallthru
      _
    // Predicated region
    $region22: #{tpu_custom_call.1} parent=1 // pred_check
      _
    $region23: #{tpu_custom_call.1} parent=1 // pred_check_branch
      %52 = sbr.rel (0) target = $region25
    $region24: #{tpu_custom_call.1} parent=1 // pred_region
      %53 = dma.done [#allocation6], 16
    $region25: #{tpu_custom_call.1} parent=1 // pred_fallthru
      _
    %v55 = vld [vmem:[#allocation2] sm:$0xff]
    %v56 = vld [vmem:[#allocation2 + $0x8] sm:$0xff]
    %v57 = vld [vmem:[#allocation2 + $0x10] sm:$0xff]
    %v58 = vld [vmem:[#allocation2 + $0x18] sm:$0xff]
    %v59 = vld [vmem:[#allocation2 + $0x20] sm:$0xff]
    %v60 = vld [vmem:[#allocation2 + $0x28] sm:$0xff]
    %v61 = vld [vmem:[#allocation2 + $0x30] sm:$0xff]
    %v62 = vld [vmem:[#allocation2 + $0x38] sm:$0xff]
    %v63 = vld [vmem:[#allocation2 + $0x40] sm:$0xff]
    %v64 = vld [vmem:[#allocation2 + $0x48] sm:$0xff]
    %v65 = vld [vmem:[#allocation2 + $0x50] sm:$0xff]
    %v66 = vld [vmem:[#allocation2 + $0x58] sm:$0xff]
    %v67 = vld [vmem:[#allocation2 + $0x60] sm:$0xff]
    %v68 = vld [vmem:[#allocation2 + $0x68] sm:$0xff]
    %v83 = vcombine.high %v55, %v55
    %v85 = vunpack.c.l.s4 1983009808
    %v86 = vunpack.c.0.s8 %v85
    %v87 = vlaneseq
    %v88 = vshrl.u32 %v87, 7
    %v89 = vsub.s32 %v86, %v88
    %v90 = vrot.slane %v55, %v89
    %v92 = vunpack.c.l.s4 1983009808
    %v93 = vunpack.c.0.s8 %v92
    %v94 = vlaneseq
    %v95 = vshrl.u32 %v94, 7
    %v96 = vsub.s32 %v93, %v95
    %v97 = vrot.slane %v83, %v96
    %v98 = vcombine.high %v90, %v90
    %v99 = vcombine.high %v97, %v97
    %v100 = vcombine.high %v56, %v56
    %v102 = vunpack.c.l.s4 1983009808
    %v103 = vunpack.c.0.s8 %v102
    %v104 = vlaneseq
    %v105 = vshrl.u32 %v104, 7
    %v106 = vsub.s32 %v103, %v105
    %v107 = vrot.slane %v56, %v106
    %v109 = vunpack.c.l.s4 1983009808
    %v110 = vunpack.c.0.s8 %v109
    %v111 = vlaneseq
    %v112 = vshrl.u32 %v111, 7
    %v113 = vsub.s32 %v110, %v112
    %v114 = vrot.slane %v100, %v113
    %v115 = vcombine.high %v107, %v107
    %v116 = vcombine.high %v114, %v114
    %v117 = vcombine.high %v57, %v57
    %v119 = vunpack.c.l.s4 1983009808
    %v120 = vunpack.c.0.s8 %v119
    %v121 = vlaneseq
    %v122 = vshrl.u32 %v121, 7
    %v123 = vsub.s32 %v120, %v122
    %v124 = vrot.slane %v57, %v123
    %v126 = vunpack.c.l.s4 1983009808
    %v127 = vunpack.c.0.s8 %v126
    %v128 = vlaneseq
    %v129 = vshrl.u32 %v128, 7
    %v130 = vsub.s32 %v127, %v129
    %v131 = vrot.slane %v117, %v130
    %v132 = vcombine.high %v124, %v124
    %v133 = vcombine.high %v131, %v131
    %v134 = vcombine.high %v58, %v58
    %v136 = vunpack.c.l.s4 1983009808
    %v137 = vunpack.c.0.s8 %v136
    %v138 = vlaneseq
    %v139 = vshrl.u32 %v138, 7
    %v140 = vsub.s32 %v137, %v139
    %v141 = vrot.slane %v58, %v140
    %v143 = vunpack.c.l.s4 1983009808
    %v144 = vunpack.c.0.s8 %v143
    %v145 = vlaneseq
    %v146 = vshrl.u32 %v145, 7
    %v147 = vsub.s32 %v144, %v146
    %v148 = vrot.slane %v134, %v147
    %v149 = vcombine.high %v141, %v141
    %v150 = vcombine.high %v148, %v148
    %v151 = vcombine.high %v59, %v59
    %v153 = vunpack.c.l.s4 1983009808
    %v154 = vunpack.c.0.s8 %v153
    %v155 = vlaneseq
    %v156 = vshrl.u32 %v155, 7
    %v157 = vsub.s32 %v154, %v156
    %v158 = vrot.slane %v59, %v157
    %v160 = vunpack.c.l.s4 1983009808
    %v161 = vunpack.c.0.s8 %v160
    %v162 = vlaneseq
    %v163 = vshrl.u32 %v162, 7
    %v164 = vsub.s32 %v161, %v163
    %v165 = vrot.slane %v151, %v164
    %v166 = vcombine.high %v158, %v158
    %v167 = vcombine.high %v165, %v165
    %v168 = vcombine.high %v60, %v60
    %v170 = vunpack.c.l.s4 1983009808
    %v171 = vunpack.c.0.s8 %v170
    %v172 = vlaneseq
    %v173 = vshrl.u32 %v172, 7
    %v174 = vsub.s32 %v171, %v173
    %v175 = vrot.slane %v60, %v174
    %v177 = vunpack.c.l.s4 1983009808
    %v178 = vunpack.c.0.s8 %v177
    %v179 = vlaneseq
    %v180 = vshrl.u32 %v179, 7
    %v181 = vsub.s32 %v178, %v180
    %v182 = vrot.slane %v168, %v181
    %v183 = vcombine.high %v175, %v175
    %v184 = vcombine.high %v182, %v182
    %v185 = vcombine.high %v61, %v61
    %v187 = vunpack.c.l.s4 1983009808
    %v188 = vunpack.c.0.s8 %v187
    %v189 = vlaneseq
    %v190 = vshrl.u32 %v189, 7
    %v191 = vsub.s32 %v188, %v190
    %v192 = vrot.slane %v61, %v191
    %v194 = vunpack.c.l.s4 1983009808
    %v195 = vunpack.c.0.s8 %v194
    %v196 = vlaneseq
    %v197 = vshrl.u32 %v196, 7
    %v198 = vsub.s32 %v195, %v197
    %v199 = vrot.slane %v185, %v198
    %v200 = vcombine.high %v192, %v192
    %v201 = vcombine.high %v199, %v199
    %v202 = vcombine.high %v62, %v62
    %v204 = vunpack.c.l.s4 1983009808
    %v205 = vunpack.c.0.s8 %v204
    %v206 = vlaneseq
    %v207 = vshrl.u32 %v206, 7
    %v208 = vsub.s32 %v205, %v207
    %v209 = vrot.slane %v62, %v208
    %v211 = vunpack.c.l.s4 1983009808
    %v212 = vunpack.c.0.s8 %v211
    %v213 = vlaneseq
    %v214 = vshrl.u32 %v213, 7
    %v215 = vsub.s32 %v212, %v214
    %v216 = vrot.slane %v202, %v215
    %v217 = vcombine.high %v209, %v209
    %v218 = vcombine.high %v216, %v216
    %v219 = vcombine.high %v63, %v63
    %v221 = vunpack.c.l.s4 1983009808
    %v222 = vunpack.c.0.s8 %v221
    %v223 = vlaneseq
    %v224 = vshrl.u32 %v223, 7
    %v225 = vsub.s32 %v222, %v224
    %v226 = vrot.slane %v63, %v225
    %v228 = vunpack.c.l.s4 1983009808
    %v229 = vunpack.c.0.s8 %v228
    %v230 = vlaneseq
    %v231 = vshrl.u32 %v230, 7
    %v232 = vsub.s32 %v229, %v231
    %v233 = vrot.slane %v219, %v232
    %v234 = vcombine.high %v226, %v226
    %v235 = vcombine.high %v233, %v233
    %v236 = vcombine.high %v64, %v64
    %v238 = vunpack.c.l.s4 1983009808
    %v239 = vunpack.c.0.s8 %v238
    %v240 = vlaneseq
    %v241 = vshrl.u32 %v240, 7
    %v242 = vsub.s32 %v239, %v241
    %v243 = vrot.slane %v64, %v242
    %v245 = vunpack.c.l.s4 1983009808
    %v246 = vunpack.c.0.s8 %v245
    %v247 = vlaneseq
    %v248 = vshrl.u32 %v247, 7
    %v249 = vsub.s32 %v246, %v248
    %v250 = vrot.slane %v236, %v249
    %v251 = vcombine.high %v243, %v243
    %v252 = vcombine.high %v250, %v250
    %v253 = vcombine.high %v65, %v65
    %v255 = vunpack.c.l.s4 1983009808
    %v256 = vunpack.c.0.s8 %v255
    %v257 = vlaneseq
    %v258 = vshrl.u32 %v257, 7
    %v259 = vsub.s32 %v256, %v258
    %v260 = vrot.slane %v65, %v259
    %v262 = vunpack.c.l.s4 1983009808
    %v263 = vunpack.c.0.s8 %v262
    %v264 = vlaneseq
    %v265 = vshrl.u32 %v264, 7
    %v266 = vsub.s32 %v263, %v265
    %v267 = vrot.slane %v253, %v266
    %v268 = vcombine.high %v260, %v260
    %v269 = vcombine.high %v267, %v267
    %v270 = vcombine.high %v66, %v66
    %v272 = vunpack.c.l.s4 1983009808
    %v273 = vunpack.c.0.s8 %v272
    %v274 = vlaneseq
    %v275 = vshrl.u32 %v274, 7
    %v276 = vsub.s32 %v273, %v275
    %v277 = vrot.slane %v66, %v276
    %v279 = vunpack.c.l.s4 1983009808
    %v280 = vunpack.c.0.s8 %v279
    %v281 = vlaneseq
    %v282 = vshrl.u32 %v281, 7
    %v283 = vsub.s32 %v280, %v282
    %v284 = vrot.slane %v270, %v283
    %v285 = vcombine.high %v277, %v277
    %v286 = vcombine.high %v284, %v284
    %v287 = vcombine.high %v67, %v67
    %v289 = vunpack.c.l.s4 1983009808
    %v290 = vunpack.c.0.s8 %v289
    %v291 = vlaneseq
    %v292 = vshrl.u32 %v291, 7
    %v293 = vsub.s32 %v290, %v292
    %v294 = vrot.slane %v67, %v293
    %v296 = vunpack.c.l.s4 1983009808
    %v297 = vunpack.c.0.s8 %v296
    %v298 = vlaneseq
    %v299 = vshrl.u32 %v298, 7
    %v300 = vsub.s32 %v297, %v299
    %v301 = vrot.slane %v287, %v300
    %v302 = vcombine.high %v294, %v294
    %v303 = vcombine.high %v301, %v301
    %v304 = vcombine.high %v68, %v68
    %v306 = vunpack.c.l.s4 1983009808
    %v307 = vunpack.c.0.s8 %v306
    %v308 = vlaneseq
    %v309 = vshrl.u32 %v308, 7
    %v310 = vsub.s32 %v307, %v309
    %v311 = vrot.slane %v68, %v310
    %v313 = vunpack.c.l.s4 1983009808
    %v314 = vunpack.c.0.s8 %v313
    %v315 = vlaneseq
    %v316 = vshrl.u32 %v315, 7
    %v317 = vsub.s32 %v314, %v316
    %v318 = vrot.slane %v304, %v317
    %v319 = vcombine.high %v311, %v311
    %v320 = vcombine.high %v318, %v318
    %v377 = vpack.c.bf16 %v90, %v90
    %v378 = vpack.c.bf16 %v98, %v98
    %v379 = vpack.c.bf16 %v97, %v97
    %v380 = vpack.c.bf16 %v99, %v99
    %v381 = vpack.c.bf16 %v107, %v107
    %v382 = vpack.c.bf16 %v115, %v115
    %v383 = vpack.c.bf16 %v114, %v114
    %v384 = vpack.c.bf16 %v116, %v116
    %v385 = vpack.c.bf16 %v124, %v124
    %v386 = vpack.c.bf16 %v132, %v132
    %v387 = vpack.c.bf16 %v131, %v131
    %v388 = vpack.c.bf16 %v133, %v133
    %v389 = vpack.c.bf16 %v141, %v141
    %v390 = vpack.c.bf16 %v149, %v149
    %v391 = vpack.c.bf16 %v148, %v148
    %v392 = vpack.c.bf16 %v150, %v150
    %v393 = vpack.c.bf16 %v158, %v158
    %v394 = vpack.c.bf16 %v166, %v166
    %v395 = vpack.c.bf16 %v165, %v165
    %v396 = vpack.c.bf16 %v167, %v167
    %v397 = vpack.c.bf16 %v175, %v175
    %v398 = vpack.c.bf16 %v183, %v183
    %v399 = vpack.c.bf16 %v182, %v182
    %v400 = vpack.c.bf16 %v184, %v184
    %v401 = vpack.c.bf16 %v192, %v192
    %v402 = vpack.c.bf16 %v200, %v200
    %v403 = vpack.c.bf16 %v199, %v199
    %v404 = vpack.c.bf16 %v201, %v201
    %v405 = vpack.c.bf16 %v209, %v209
    %v406 = vpack.c.bf16 %v217, %v217
    %v407 = vpack.c.bf16 %v216, %v216
    %v408 = vpack.c.bf16 %v218, %v218
    %v409 = vpack.c.bf16 %v226, %v226
    %v410 = vpack.c.bf16 %v234, %v234
    %v411 = vpack.c.bf16 %v233, %v233
    %v412 = vpack.c.bf16 %v235, %v235
    %v413 = vpack.c.bf16 %v243, %v243
    %v414 = vpack.c.bf16 %v251, %v251
    %v415 = vpack.c.bf16 %v250, %v250
    %v416 = vpack.c.bf16 %v252, %v252
    %v417 = vpack.c.bf16 %v260, %v260
    %v418 = vpack.c.bf16 %v268, %v268
    %v419 = vpack.c.bf16 %v267, %v267
    %v420 = vpack.c.bf16 %v269, %v269
    %v421 = vpack.c.bf16 %v277, %v277
    %v422 = vpack.c.bf16 %v285, %v285
    %v423 = vpack.c.bf16 %v284, %v284
    %v424 = vpack.c.bf16 %v286, %v286
    %v425 = vpack.c.bf16 %v294, %v294
    %v426 = vpack.c.bf16 %v302, %v302
    %v427 = vpack.c.bf16 %v301, %v301
    %v428 = vpack.c.bf16 %v303, %v303
    %v429 = vpack.c.bf16 %v311, %v311
    %v430 = vpack.c.bf16 %v319, %v319
    %v431 = vpack.c.bf16 %v318, %v318
    %v432 = vpack.c.bf16 %v320, %v320
    %v433 = vld [vmem:[#allocation5] sm:$0xf]
    %v434 = vld [vmem:[#allocation5 + $0x4] sm:$0xf]
    %v435 = vld [vmem:[#allocation5 + $0x8] sm:$0xf]
    %v436 = vld [vmem:[#allocation5 + $0xc] sm:$0xf]
    %v437 = vld [vmem:[#allocation5 + $0x10] sm:$0xf]
    %v438 = vld [vmem:[#allocation5 + $0x14] sm:$0xf]
    %v439 = vld [vmem:[#allocation5 + $0x18] sm:$0xf]
    %v440 = vld [vmem:[#allocation5 + $0x1c] sm:$0xf]
    %v441 = vld [vmem:[#allocation5 + $0x20] sm:$0xf]
    %v442 = vld [vmem:[#allocation5 + $0x24] sm:$0xf]
    %v443 = vld [vmem:[#allocation5 + $0x28] sm:$0xf]
    %v444 = vld [vmem:[#allocation5 + $0x2c] sm:$0xf]
    %v445 = vld [vmem:[#allocation5 + $0x30] sm:$0xf]
    %v446 = vld [vmem:[#allocation5 + $0x34] sm:$0xf]
    %v447 = vld [vmem:[#allocation5 + $0x38] sm:$0xf]
    %v448 = vld [vmem:[#allocation5 + $0x3c] sm:$0xf]
    %v449 = vld [vmem:[#allocation5 + $0x40] sm:$0xf]
    %v450 = vld [vmem:[#allocation5 + $0x44] sm:$0xf]
    %v451 = vld [vmem:[#allocation5 + $0x48] sm:$0xf]
    %v452 = vld [vmem:[#allocation5 + $0x4c] sm:$0xf]
    %v453 = vld [vmem:[#allocation5 + $0x50] sm:$0xf]
    %v454 = vld [vmem:[#allocation5 + $0x54] sm:$0xf]
    %v455 = vld [vmem:[#allocation5 + $0x58] sm:$0xf]
    %v456 = vld [vmem:[#allocation5 + $0x5c] sm:$0xf]
    %v457 = vld [vmem:[#allocation5 + $0x60] sm:$0xf]
    %v458 = vld [vmem:[#allocation5 + $0x64] sm:$0xf]
    %v459 = vld [vmem:[#allocation5 + $0x68] sm:$0xf]
    %v460 = vld [vmem:[#allocation5 + $0x6c] sm:$0xf]
    %v461 = vld [vmem:[#allocation5 + $0x70] sm:$0xf]
    %v462 = vld [vmem:[#allocation5 + $0x74] sm:$0xf]
    %v463 = vld [vmem:[#allocation5 + $0x78] sm:$0xf]
    %v464 = vld [vmem:[#allocation5 + $0x7c] sm:$0xf]
    %v465 = vld [vmem:[#allocation5 + $0x80] sm:$0xf]
    %v466 = vld [vmem:[#allocation5 + $0x84] sm:$0xf]
    %v467 = vld [vmem:[#allocation5 + $0x88] sm:$0xf]
    %v468 = vld [vmem:[#allocation5 + $0x8c] sm:$0xf]
    %v469 = vld [vmem:[#allocation5 + $0x90] sm:$0xf]
    %v470 = vld [vmem:[#allocation5 + $0x94] sm:$0xf]
    %v471 = vld [vmem:[#allocation5 + $0x98] sm:$0xf]
    %v472 = vld [vmem:[#allocation5 + $0x9c] sm:$0xf]
    %v473 = vld [vmem:[#allocation5 + $0xa0] sm:$0xf]
    %v474 = vld [vmem:[#allocation5 + $0xa4] sm:$0xf]
    %v475 = vld [vmem:[#allocation5 + $0xa8] sm:$0xf]
    %v476 = vld [vmem:[#allocation5 + $0xac] sm:$0xf]
    %v477 = vld [vmem:[#allocation5 + $0xb0] sm:$0xf]
    %v478 = vld [vmem:[#allocation5 + $0xb4] sm:$0xf]
    %v479 = vld [vmem:[#allocation5 + $0xb8] sm:$0xf]
    %v480 = vld [vmem:[#allocation5 + $0xbc] sm:$0xf]
    %v481 = vld [vmem:[#allocation5 + $0xc0] sm:$0xf]
    %v482 = vld [vmem:[#allocation5 + $0xc4] sm:$0xf]
    %v483 = vld [vmem:[#allocation5 + $0xc8] sm:$0xf]
    %v484 = vld [vmem:[#allocation5 + $0xcc] sm:$0xf]
    %v485 = vld [vmem:[#allocation5 + $0xd0] sm:$0xf]
    %v486 = vld [vmem:[#allocation5 + $0xd4] sm:$0xf]
    %v487 = vld [vmem:[#allocation5 + $0xd8] sm:$0xf]
    %v488 = vld [vmem:[#allocation5 + $0xdc] sm:$0xf]
    %v489 = vld [vmem:[#allocation5 + $0xe0] sm:$0xf]
    %v490 = vld [vmem:[#allocation5 + $0xe4] sm:$0xf]
    %v491 = vld [vmem:[#allocation5 + $0xe8] sm:$0xf]
    %v492 = vld [vmem:[#allocation5 + $0xec] sm:$0xf]
    %v493 = vld [vmem:[#allocation5 + $0xf0] sm:$0xf]
    %v494 = vld [vmem:[#allocation5 + $0xf4] sm:$0xf]
    %v495 = vld [vmem:[#allocation5 + $0xf8] sm:$0xf]
    %v496 = vld [vmem:[#allocation5 + $0xfc] sm:$0xf]
    %v497 = vld [vmem:[#allocation5 + $0x100] sm:$0xf]
    %v498 = vld [vmem:[#allocation5 + $0x104] sm:$0xf]
    %v499 = vld [vmem:[#allocation5 + $0x108] sm:$0xf]
    %v500 = vld [vmem:[#allocation5 + $0x10c] sm:$0xf]
    %v501 = vld [vmem:[#allocation5 + $0x110] sm:$0xf]
    %v502 = vld [vmem:[#allocation5 + $0x114] sm:$0xf]
    %v503 = vld [vmem:[#allocation5 + $0x118] sm:$0xf]
    %v504 = vld [vmem:[#allocation5 + $0x11c] sm:$0xf]
    %v505 = vld [vmem:[#allocation5 + $0x120] sm:$0xf]
    %v506 = vld [vmem:[#allocation5 + $0x124] sm:$0xf]
    %v507 = vld [vmem:[#allocation5 + $0x128] sm:$0xf]
    %v508 = vld [vmem:[#allocation5 + $0x12c] sm:$0xf]
    %v509 = vld [vmem:[#allocation5 + $0x130] sm:$0xf]
    %v510 = vld [vmem:[#allocation5 + $0x134] sm:$0xf]
    %v511 = vld [vmem:[#allocation5 + $0x138] sm:$0xf]
    %v512 = vld [vmem:[#allocation5 + $0x13c] sm:$0xf]
    %v513 = vld [vmem:[#allocation5 + $0x140] sm:$0xf]
    %v514 = vld [vmem:[#allocation5 + $0x144] sm:$0xf]
    %v515 = vld [vmem:[#allocation5 + $0x148] sm:$0xf]
    %v516 = vld [vmem:[#allocation5 + $0x14c] sm:$0xf]
    %v517 = vld [vmem:[#allocation5 + $0x150] sm:$0xf]
    %v518 = vld [vmem:[#allocation5 + $0x154] sm:$0xf]
    %v519 = vld [vmem:[#allocation5 + $0x158] sm:$0xf]
    %v520 = vld [vmem:[#allocation5 + $0x15c] sm:$0xf]
    %v521 = vld [vmem:[#allocation5 + $0x160] sm:$0xf]
    %v522 = vld [vmem:[#allocation5 + $0x164] sm:$0xf]
    %v523 = vld [vmem:[#allocation5 + $0x168] sm:$0xf]
    %v524 = vld [vmem:[#allocation5 + $0x16c] sm:$0xf]
    %v525 = vld [vmem:[#allocation5 + $0x170] sm:$0xf]
    %v526 = vld [vmem:[#allocation5 + $0x174] sm:$0xf]
    %v527 = vld [vmem:[#allocation5 + $0x178] sm:$0xf]
    %v528 = vld [vmem:[#allocation5 + $0x17c] sm:$0xf]
    %v529 = vld [vmem:[#allocation5 + $0x180] sm:$0xf]
    %v530 = vld [vmem:[#allocation5 + $0x184] sm:$0xf]
    %v531 = vld [vmem:[#allocation5 + $0x188] sm:$0xf]
    %v532 = vld [vmem:[#allocation5 + $0x18c] sm:$0xf]
    %v533 = vld [vmem:[#allocation5 + $0x190] sm:$0xf]
    %v534 = vld [vmem:[#allocation5 + $0x194] sm:$0xf]
    %v535 = vld [vmem:[#allocation5 + $0x198] sm:$0xf]
    %v536 = vld [vmem:[#allocation5 + $0x19c] sm:$0xf]
    %v537 = vld [vmem:[#allocation5 + $0x1a0] sm:$0xf]
    %v538 = vld [vmem:[#allocation5 + $0x1a4] sm:$0xf]
    %v539 = vld [vmem:[#allocation5 + $0x1a8] sm:$0xf]
    %v540 = vld [vmem:[#allocation5 + $0x1ac] sm:$0xf]
    %v541 = vld [vmem:[#allocation5 + $0x1b0] sm:$0xf]
    %v542 = vld [vmem:[#allocation5 + $0x1b4] sm:$0xf]
    %v543 = vld [vmem:[#allocation5 + $0x1b8] sm:$0xf]
    %v544 = vld [vmem:[#allocation5 + $0x1bc] sm:$0xf]
    %v545 = vld [vmem:[#allocation5 + $0x1c0] sm:$0xf]
    %v546 = vld [vmem:[#allocation5 + $0x1c4] sm:$0xf]
    %v547 = vld [vmem:[#allocation5 + $0x1c8] sm:$0xf]
    %v548 = vld [vmem:[#allocation5 + $0x1cc] sm:$0xf]
    %v549 = vld [vmem:[#allocation5 + $0x1d0] sm:$0xf]
    %v550 = vld [vmem:[#allocation5 + $0x1d4] sm:$0xf]
    %v551 = vld [vmem:[#allocation5 + $0x1d8] sm:$0xf]
    %v552 = vld [vmem:[#allocation5 + $0x1dc] sm:$0xf]
    %v553 = vld [vmem:[#allocation5 + $0x1e0] sm:$0xf]
    %v554 = vld [vmem:[#allocation5 + $0x1e4] sm:$0xf]
    %v555 = vld [vmem:[#allocation5 + $0x1e8] sm:$0xf]
    %v556 = vld [vmem:[#allocation5 + $0x1ec] sm:$0xf]
    %v557 = vld [vmem:[#allocation5 + $0x1f0] sm:$0xf]
    %v558 = vld [vmem:[#allocation5 + $0x1f4] sm:$0xf]
    %v559 = vld [vmem:[#allocation5 + $0x1f8] sm:$0xf]
    %v560 = vld [vmem:[#allocation5 + $0x1fc] sm:$0xf]
    %v561 = vld [vmem:[#allocation5 + $0x200] sm:$0xf]
    %v562 = vld [vmem:[#allocation5 + $0x204] sm:$0xf]
    %v563 = vld [vmem:[#allocation5 + $0x208] sm:$0xf]
    %v564 = vld [vmem:[#allocation5 + $0x20c] sm:$0xf]
    %v565 = vld [vmem:[#allocation5 + $0x210] sm:$0xf]
    %v566 = vld [vmem:[#allocation5 + $0x214] sm:$0xf]
    %v567 = vld [vmem:[#allocation5 + $0x218] sm:$0xf]
    %v568 = vld [vmem:[#allocation5 + $0x21c] sm:$0xf]
    %v569 = vld [vmem:[#allocation5 + $0x220] sm:$0xf]
    %v570 = vld [vmem:[#allocation5 + $0x224] sm:$0xf]
    %v571 = vld [vmem:[#allocation5 + $0x228] sm:$0xf]
    %v572 = vld [vmem:[#allocation5 + $0x22c] sm:$0xf]
    %v573 = vld [vmem:[#allocation5 + $0x230] sm:$0xf]
    %v574 = vld [vmem:[#allocation5 + $0x234] sm:$0xf]
    %v575 = vld [vmem:[#allocation5 + $0x238] sm:$0xf]
    %v576 = vld [vmem:[#allocation5 + $0x23c] sm:$0xf]
    %v577 = vld [vmem:[#allocation5 + $0x240] sm:$0xf]
    %v578 = vld [vmem:[#allocation5 + $0x244] sm:$0xf]
    %v579 = vld [vmem:[#allocation5 + $0x248] sm:$0xf]
    %v580 = vld [vmem:[#allocation5 + $0x24c] sm:$0xf]
    %v581 = vld [vmem:[#allocation5 + $0x250] sm:$0xf]
    %v582 = vld [vmem:[#allocation5 + $0x254] sm:$0xf]
    %v583 = vld [vmem:[#allocation5 + $0x258] sm:$0xf]
    %v584 = vld [vmem:[#allocation5 + $0x25c] sm:$0xf]
    %v585 = vld [vmem:[#allocation5 + $0x260] sm:$0xf]
    %v586 = vld [vmem:[#allocation5 + $0x264] sm:$0xf]
    %v587 = vld [vmem:[#allocation5 + $0x268] sm:$0xf]
    %v588 = vld [vmem:[#allocation5 + $0x26c] sm:$0xf]
    %v589 = vld [vmem:[#allocation5 + $0x270] sm:$0xf]
    %v590 = vld [vmem:[#allocation5 + $0x274] sm:$0xf]
    %v591 = vld [vmem:[#allocation5 + $0x278] sm:$0xf]
    %v592 = vld [vmem:[#allocation5 + $0x27c] sm:$0xf]
    %v593 = vld [vmem:[#allocation5 + $0x280] sm:$0xf]
    %v594 = vld [vmem:[#allocation5 + $0x284] sm:$0xf]
    %v595 = vld [vmem:[#allocation5 + $0x288] sm:$0xf]
    %v596 = vld [vmem:[#allocation5 + $0x28c] sm:$0xf]
    %v597 = vld [vmem:[#allocation5 + $0x290] sm:$0xf]
    %v598 = vld [vmem:[#allocation5 + $0x294] sm:$0xf]
    %v599 = vld [vmem:[#allocation5 + $0x298] sm:$0xf]
    %v600 = vld [vmem:[#allocation5 + $0x29c] sm:$0xf]
    %v601 = vld [vmem:[#allocation5 + $0x2a0] sm:$0xf]
    %v602 = vld [vmem:[#allocation5 + $0x2a4] sm:$0xf]
    %v603 = vld [vmem:[#allocation5 + $0x2a8] sm:$0xf]
    %v604 = vld [vmem:[#allocation5 + $0x2ac] sm:$0xf]
    %v605 = vld [vmem:[#allocation5 + $0x2b0] sm:$0xf]
    %v606 = vld [vmem:[#allocation5 + $0x2b4] sm:$0xf]
    %v607 = vld [vmem:[#allocation5 + $0x2b8] sm:$0xf]
    %v608 = vld [vmem:[#allocation5 + $0x2bc] sm:$0xf]
    %v609 = vld [vmem:[#allocation5 + $0x2c0] sm:$0xf]
    %v610 = vld [vmem:[#allocation5 + $0x2c4] sm:$0xf]
    %v611 = vld [vmem:[#allocation5 + $0x2c8] sm:$0xf]
    %v612 = vld [vmem:[#allocation5 + $0x2cc] sm:$0xf]
    %v613 = vld [vmem:[#allocation5 + $0x2d0] sm:$0xf]
    %v614 = vld [vmem:[#allocation5 + $0x2d4] sm:$0xf]
    %v615 = vld [vmem:[#allocation5 + $0x2d8] sm:$0xf]
    %v616 = vld [vmem:[#allocation5 + $0x2dc] sm:$0xf]
    %v617 = vld [vmem:[#allocation5 + $0x2e0] sm:$0xf]
    %v618 = vld [vmem:[#allocation5 + $0x2e4] sm:$0xf]
    %v619 = vld [vmem:[#allocation5 + $0x2e8] sm:$0xf]
    %v620 = vld [vmem:[#allocation5 + $0x2ec] sm:$0xf]
    %v621 = vld [vmem:[#allocation5 + $0x2f0] sm:$0xf]
    %v622 = vld [vmem:[#allocation5 + $0x2f4] sm:$0xf]
    %v623 = vld [vmem:[#allocation5 + $0x2f8] sm:$0xf]
    %v624 = vld [vmem:[#allocation5 + $0x2fc] sm:$0xf]
    %v625 = vld [vmem:[#allocation5 + $0x300] sm:$0xf]
    %v626 = vld [vmem:[#allocation5 + $0x304] sm:$0xf]
    %v627 = vld [vmem:[#allocation5 + $0x308] sm:$0xf]
    %v628 = vld [vmem:[#allocation5 + $0x30c] sm:$0xf]
    %v629 = vld [vmem:[#allocation5 + $0x310] sm:$0xf]
    %v630 = vld [vmem:[#allocation5 + $0x314] sm:$0xf]
    %v631 = vld [vmem:[#allocation5 + $0x318] sm:$0xf]
    %v632 = vld [vmem:[#allocation5 + $0x31c] sm:$0xf]
    %v633 = vld [vmem:[#allocation5 + $0x320] sm:$0xf]
    %v634 = vld [vmem:[#allocation5 + $0x324] sm:$0xf]
    %v635 = vld [vmem:[#allocation5 + $0x328] sm:$0xf]
    %v636 = vld [vmem:[#allocation5 + $0x32c] sm:$0xf]
    %v637 = vld [vmem:[#allocation5 + $0x330] sm:$0xf]
    %v638 = vld [vmem:[#allocation5 + $0x334] sm:$0xf]
    %v639 = vld [vmem:[#allocation5 + $0x338] sm:$0xf]
    %v640 = vld [vmem:[#allocation5 + $0x33c] sm:$0xf]
    %v641 = vld [vmem:[#allocation5 + $0x340] sm:$0xf]
    %v642 = vld [vmem:[#allocation5 + $0x344] sm:$0xf]
    %v643 = vld [vmem:[#allocation5 + $0x348] sm:$0xf]
    %v644 = vld [vmem:[#allocation5 + $0x34c] sm:$0xf]
    %v645 = vld [vmem:[#allocation5 + $0x350] sm:$0xf]
    %v646 = vld [vmem:[#allocation5 + $0x354] sm:$0xf]
    %v647 = vld [vmem:[#allocation5 + $0x358] sm:$0xf]
    %v648 = vld [vmem:[#allocation5 + $0x35c] sm:$0xf]
    %v649 = vld [vmem:[#allocation5 + $0x360] sm:$0xf]
    %v650 = vld [vmem:[#allocation5 + $0x364] sm:$0xf]
    %v651 = vld [vmem:[#allocation5 + $0x368] sm:$0xf]
    %v652 = vld [vmem:[#allocation5 + $0x36c] sm:$0xf]
    %v653 = vld [vmem:[#allocation5 + $0x370] sm:$0xf]
    %v654 = vld [vmem:[#allocation5 + $0x374] sm:$0xf]
    %v655 = vld [vmem:[#allocation5 + $0x378] sm:$0xf]
    %v656 = vld [vmem:[#allocation5 + $0x37c] sm:$0xf]
    %v657 = vld [vmem:[#allocation5 + $0x380] sm:$0xf]
    %v658 = vld [vmem:[#allocation5 + $0x384] sm:$0xf]
    %v659 = vld [vmem:[#allocation5 + $0x388] sm:$0xf]
    %v660 = vld [vmem:[#allocation5 + $0x38c] sm:$0xf]
    %v661 = vld [vmem:[#allocation5 + $0x390] sm:$0xf]
    %v662 = vld [vmem:[#allocation5 + $0x394] sm:$0xf]
    %v663 = vld [vmem:[#allocation5 + $0x398] sm:$0xf]
    %v664 = vld [vmem:[#allocation5 + $0x39c] sm:$0xf]
    %v665 = vld [vmem:[#allocation5 + $0x3a0] sm:$0xf]
    %v666 = vld [vmem:[#allocation5 + $0x3a4] sm:$0xf]
    %v667 = vld [vmem:[#allocation5 + $0x3a8] sm:$0xf]
    %v668 = vld [vmem:[#allocation5 + $0x3ac] sm:$0xf]
    %v669 = vld [vmem:[#allocation5 + $0x3b0] sm:$0xf]
    %v670 = vld [vmem:[#allocation5 + $0x3b4] sm:$0xf]
    %v671 = vld [vmem:[#allocation5 + $0x3b8] sm:$0xf]
    %v672 = vld [vmem:[#allocation5 + $0x3bc] sm:$0xf]
    %v673 = vld [vmem:[#allocation5 + $0x3c0] sm:$0xf]
    %v674 = vld [vmem:[#allocation5 + $0x3c4] sm:$0xf]
    %v675 = vld [vmem:[#allocation5 + $0x3c8] sm:$0xf]
    %v676 = vld [vmem:[#allocation5 + $0x3cc] sm:$0xf]
    %v677 = vld [vmem:[#allocation5 + $0x3d0] sm:$0xf]
    %v678 = vld [vmem:[#allocation5 + $0x3d4] sm:$0xf]
    %v679 = vld [vmem:[#allocation5 + $0x3d8] sm:$0xf]
    %v680 = vld [vmem:[#allocation5 + $0x3dc] sm:$0xf]
    %v681 = vld [vmem:[#allocation5 + $0x3e0] sm:$0xf]
    %v682 = vld [vmem:[#allocation5 + $0x3e4] sm:$0xf]
    %v683 = vld [vmem:[#allocation5 + $0x3e8] sm:$0xf]
    %v684 = vld [vmem:[#allocation5 + $0x3ec] sm:$0xf]
    %v685 = vld [vmem:[#allocation5 + $0x3f0] sm:$0xf]
    %v686 = vld [vmem:[#allocation5 + $0x3f4] sm:$0xf]
    %v687 = vld [vmem:[#allocation5 + $0x3f8] sm:$0xf]
    %v688 = vld [vmem:[#allocation5 + $0x3fc] sm:$0xf]
    %v689 = vld [vmem:[#allocation5 + $0x400] sm:$0xf]
    %v690 = vld [vmem:[#allocation5 + $0x404] sm:$0xf]
    %v691 = vld [vmem:[#allocation5 + $0x408] sm:$0xf]
    %v692 = vld [vmem:[#allocation5 + $0x40c] sm:$0xf]
    %v693 = vld [vmem:[#allocation5 + $0x410] sm:$0xf]
    %v694 = vld [vmem:[#allocation5 + $0x414] sm:$0xf]
    %v695 = vld [vmem:[#allocation5 + $0x418] sm:$0xf]
    %v696 = vld [vmem:[#allocation5 + $0x41c] sm:$0xf]
    %v697 = vld [vmem:[#allocation5 + $0x420] sm:$0xf]
    %v698 = vld [vmem:[#allocation5 + $0x424] sm:$0xf]
    %v699 = vld [vmem:[#allocation5 + $0x428] sm:$0xf]
    %v700 = vld [vmem:[#allocation5 + $0x42c] sm:$0xf]
    %v701 = vld [vmem:[#allocation5 + $0x430] sm:$0xf]
    %v702 = vld [vmem:[#allocation5 + $0x434] sm:$0xf]
    %v703 = vld [vmem:[#allocation5 + $0x438] sm:$0xf]
    %v704 = vld [vmem:[#allocation5 + $0x43c] sm:$0xf]
    %v705 = vld [vmem:[#allocation5 + $0x440] sm:$0xf]
    %v706 = vld [vmem:[#allocation5 + $0x444] sm:$0xf]
    %v707 = vld [vmem:[#allocation5 + $0x448] sm:$0xf]
    %v708 = vld [vmem:[#allocation5 + $0x44c] sm:$0xf]
    %v709 = vld [vmem:[#allocation5 + $0x450] sm:$0xf]
    %v710 = vld [vmem:[#allocation5 + $0x454] sm:$0xf]
    %v711 = vld [vmem:[#allocation5 + $0x458] sm:$0xf]
    %v712 = vld [vmem:[#allocation5 + $0x45c] sm:$0xf]
    %v713 = vld [vmem:[#allocation5 + $0x460] sm:$0xf]
    %v714 = vld [vmem:[#allocation5 + $0x464] sm:$0xf]
    %v715 = vld [vmem:[#allocation5 + $0x468] sm:$0xf]
    %v716 = vld [vmem:[#allocation5 + $0x46c] sm:$0xf]
    %v717 = vld [vmem:[#allocation5 + $0x470] sm:$0xf]
    %v718 = vld [vmem:[#allocation5 + $0x474] sm:$0xf]
    %v719 = vld [vmem:[#allocation5 + $0x478] sm:$0xf]
    %v720 = vld [vmem:[#allocation5 + $0x47c] sm:$0xf]
    %v721 = vld [vmem:[#allocation5 + $0x480] sm:$0xf]
    %v722 = vld [vmem:[#allocation5 + $0x484] sm:$0xf]
    %v723 = vld [vmem:[#allocation5 + $0x488] sm:$0xf]
    %v724 = vld [vmem:[#allocation5 + $0x48c] sm:$0xf]
    %v725 = vld [vmem:[#allocation5 + $0x490] sm:$0xf]
    %v726 = vld [vmem:[#allocation5 + $0x494] sm:$0xf]
    %v727 = vld [vmem:[#allocation5 + $0x498] sm:$0xf]
    %v728 = vld [vmem:[#allocation5 + $0x49c] sm:$0xf]
    %v729 = vld [vmem:[#allocation5 + $0x4a0] sm:$0xf]
    %v730 = vld [vmem:[#allocation5 + $0x4a4] sm:$0xf]
    %v731 = vld [vmem:[#allocation5 + $0x4a8] sm:$0xf]
    %v732 = vld [vmem:[#allocation5 + $0x4ac] sm:$0xf]
    %v733 = vld [vmem:[#allocation5 + $0x4b0] sm:$0xf]
    %v734 = vld [vmem:[#allocation5 + $0x4b4] sm:$0xf]
    %v735 = vld [vmem:[#allocation5 + $0x4b8] sm:$0xf]
    %v736 = vld [vmem:[#allocation5 + $0x4bc] sm:$0xf]
    %v737 = vld [vmem:[#allocation5 + $0x4c0] sm:$0xf]
    %v738 = vld [vmem:[#allocation5 + $0x4c4] sm:$0xf]
    %v739 = vld [vmem:[#allocation5 + $0x4c8] sm:$0xf]
    %v740 = vld [vmem:[#allocation5 + $0x4cc] sm:$0xf]
    %v741 = vld [vmem:[#allocation5 + $0x4d0] sm:$0xf]
    %v742 = vld [vmem:[#allocation5 + $0x4d4] sm:$0xf]
    %v743 = vld [vmem:[#allocation5 + $0x4d8] sm:$0xf]
    %v744 = vld [vmem:[#allocation5 + $0x4dc] sm:$0xf]
    %v745 = vld [vmem:[#allocation5 + $0x4e0] sm:$0xf]
    %v746 = vld [vmem:[#allocation5 + $0x4e4] sm:$0xf]
    %v747 = vld [vmem:[#allocation5 + $0x4e8] sm:$0xf]
    %v748 = vld [vmem:[#allocation5 + $0x4ec] sm:$0xf]
    %v749 = vld [vmem:[#allocation5 + $0x4f0] sm:$0xf]
    %v750 = vld [vmem:[#allocation5 + $0x4f4] sm:$0xf]
    %v751 = vld [vmem:[#allocation5 + $0x4f8] sm:$0xf]
    %v752 = vld [vmem:[#allocation5 + $0x4fc] sm:$0xf]
    %v753 = vld [vmem:[#allocation5 + $0x500] sm:$0xf]
    %v754 = vld [vmem:[#allocation5 + $0x504] sm:$0xf]
    %v755 = vld [vmem:[#allocation5 + $0x508] sm:$0xf]
    %v756 = vld [vmem:[#allocation5 + $0x50c] sm:$0xf]
    %v757 = vld [vmem:[#allocation5 + $0x510] sm:$0xf]
    %v758 = vld [vmem:[#allocation5 + $0x514] sm:$0xf]
    %v759 = vld [vmem:[#allocation5 + $0x518] sm:$0xf]
    %v760 = vld [vmem:[#allocation5 + $0x51c] sm:$0xf]
    %v761 = vld [vmem:[#allocation5 + $0x520] sm:$0xf]
    %v762 = vld [vmem:[#allocation5 + $0x524] sm:$0xf]
    %v763 = vld [vmem:[#allocation5 + $0x528] sm:$0xf]
    %v764 = vld [vmem:[#allocation5 + $0x52c] sm:$0xf]
    %v765 = vld [vmem:[#allocation5 + $0x530] sm:$0xf]
    %v766 = vld [vmem:[#allocation5 + $0x534] sm:$0xf]
    %v767 = vld [vmem:[#allocation5 + $0x538] sm:$0xf]
    %v768 = vld [vmem:[#allocation5 + $0x53c] sm:$0xf]
    %v769 = vld [vmem:[#allocation5 + $0x540] sm:$0xf]
    %v770 = vld [vmem:[#allocation5 + $0x544] sm:$0xf]
    %v771 = vld [vmem:[#allocation5 + $0x548] sm:$0xf]
    %v772 = vld [vmem:[#allocation5 + $0x54c] sm:$0xf]
    %v773 = vld [vmem:[#allocation5 + $0x550] sm:$0xf]
    %v774 = vld [vmem:[#allocation5 + $0x554] sm:$0xf]
    %v775 = vld [vmem:[#allocation5 + $0x558] sm:$0xf]
    %v776 = vld [vmem:[#allocation5 + $0x55c] sm:$0xf]
    %v777 = vld [vmem:[#allocation5 + $0x560] sm:$0xf]
    %v778 = vld [vmem:[#allocation5 + $0x564] sm:$0xf]
    %v779 = vld [vmem:[#allocation5 + $0x568] sm:$0xf]
    %v780 = vld [vmem:[#allocation5 + $0x56c] sm:$0xf]
    %v781 = vld [vmem:[#allocation5 + $0x570] sm:$0xf]
    %v782 = vld [vmem:[#allocation5 + $0x574] sm:$0xf]
    %v783 = vld [vmem:[#allocation5 + $0x578] sm:$0xf]
    %v784 = vld [vmem:[#allocation5 + $0x57c] sm:$0xf]
    %v785 = vld [vmem:[#allocation5 + $0x580] sm:$0xf]
    %v786 = vld [vmem:[#allocation5 + $0x584] sm:$0xf]
    %v787 = vld [vmem:[#allocation5 + $0x588] sm:$0xf]
    %v788 = vld [vmem:[#allocation5 + $0x58c] sm:$0xf]
    %v789 = vld [vmem:[#allocation5 + $0x590] sm:$0xf]
    %v790 = vld [vmem:[#allocation5 + $0x594] sm:$0xf]
    %v791 = vld [vmem:[#allocation5 + $0x598] sm:$0xf]
    %v792 = vld [vmem:[#allocation5 + $0x59c] sm:$0xf]
    %v793 = vld [vmem:[#allocation5 + $0x5a0] sm:$0xf]
    %v794 = vld [vmem:[#allocation5 + $0x5a4] sm:$0xf]
    %v795 = vld [vmem:[#allocation5 + $0x5a8] sm:$0xf]
    %v796 = vld [vmem:[#allocation5 + $0x5ac] sm:$0xf]
    %v797 = vld [vmem:[#allocation5 + $0x5b0] sm:$0xf]
    %v798 = vld [vmem:[#allocation5 + $0x5b4] sm:$0xf]
    %v799 = vld [vmem:[#allocation5 + $0x5b8] sm:$0xf]
    %v800 = vld [vmem:[#allocation5 + $0x5bc] sm:$0xf]
    %v801 = vld [vmem:[#allocation5 + $0x5c0] sm:$0xf]
    %v802 = vld [vmem:[#allocation5 + $0x5c4] sm:$0xf]
    %v803 = vld [vmem:[#allocation5 + $0x5c8] sm:$0xf]
    %v804 = vld [vmem:[#allocation5 + $0x5cc] sm:$0xf]
    %v805 = vld [vmem:[#allocation5 + $0x5d0] sm:$0xf]
    %v806 = vld [vmem:[#allocation5 + $0x5d4] sm:$0xf]
    %v807 = vld [vmem:[#allocation5 + $0x5d8] sm:$0xf]
    %v808 = vld [vmem:[#allocation5 + $0x5dc] sm:$0xf]
    %v809 = vld [vmem:[#allocation5 + $0x5e0] sm:$0xf]
    %v810 = vld [vmem:[#allocation5 + $0x5e4] sm:$0xf]
    %v811 = vld [vmem:[#allocation5 + $0x5e8] sm:$0xf]
    %v812 = vld [vmem:[#allocation5 + $0x5ec] sm:$0xf]
    %v813 = vld [vmem:[#allocation5 + $0x5f0] sm:$0xf]
    %v814 = vld [vmem:[#allocation5 + $0x5f4] sm:$0xf]
    %v815 = vld [vmem:[#allocation5 + $0x5f8] sm:$0xf]
    %v816 = vld [vmem:[#allocation5 + $0x5fc] sm:$0xf]
    %v817 = vld [vmem:[#allocation5 + $0x600] sm:$0xf]
    %v818 = vld [vmem:[#allocation5 + $0x604] sm:$0xf]
    %v819 = vld [vmem:[#allocation5 + $0x608] sm:$0xf]
    %v820 = vld [vmem:[#allocation5 + $0x60c] sm:$0xf]
    %v821 = vld [vmem:[#allocation5 + $0x610] sm:$0xf]
    %v822 = vld [vmem:[#allocation5 + $0x614] sm:$0xf]
    %v823 = vld [vmem:[#allocation5 + $0x618] sm:$0xf]
    %v824 = vld [vmem:[#allocation5 + $0x61c] sm:$0xf]
    %v825 = vld [vmem:[#allocation5 + $0x620] sm:$0xf]
    %v826 = vld [vmem:[#allocation5 + $0x624] sm:$0xf]
    %v827 = vld [vmem:[#allocation5 + $0x628] sm:$0xf]
    %v828 = vld [vmem:[#allocation5 + $0x62c] sm:$0xf]
    %v829 = vld [vmem:[#allocation5 + $0x630] sm:$0xf]
    %v830 = vld [vmem:[#allocation5 + $0x634] sm:$0xf]
    %v831 = vld [vmem:[#allocation5 + $0x638] sm:$0xf]
    %v832 = vld [vmem:[#allocation5 + $0x63c] sm:$0xf]
    %v833 = vld [vmem:[#allocation5 + $0x640] sm:$0xf]
    %v834 = vld [vmem:[#allocation5 + $0x644] sm:$0xf]
    %v835 = vld [vmem:[#allocation5 + $0x648] sm:$0xf]
    %v836 = vld [vmem:[#allocation5 + $0x64c] sm:$0xf]
    %v837 = vld [vmem:[#allocation5 + $0x650] sm:$0xf]
    %v838 = vld [vmem:[#allocation5 + $0x654] sm:$0xf]
    %v839 = vld [vmem:[#allocation5 + $0x658] sm:$0xf]
    %v840 = vld [vmem:[#allocation5 + $0x65c] sm:$0xf]
    %v841 = vld [vmem:[#allocation5 + $0x660] sm:$0xf]
    %v842 = vld [vmem:[#allocation5 + $0x664] sm:$0xf]
    %v843 = vld [vmem:[#allocation5 + $0x668] sm:$0xf]
    %v844 = vld [vmem:[#allocation5 + $0x66c] sm:$0xf]
    %v845 = vld [vmem:[#allocation5 + $0x670] sm:$0xf]
    %v846 = vld [vmem:[#allocation5 + $0x674] sm:$0xf]
    %v847 = vld [vmem:[#allocation5 + $0x678] sm:$0xf]
    %v848 = vld [vmem:[#allocation5 + $0x67c] sm:$0xf]
    %v849 = vld [vmem:[#allocation5 + $0x680] sm:$0xf]
    %v850 = vld [vmem:[#allocation5 + $0x684] sm:$0xf]
    %v851 = vld [vmem:[#allocation5 + $0x688] sm:$0xf]
    %v852 = vld [vmem:[#allocation5 + $0x68c] sm:$0xf]
    %v853 = vld [vmem:[#allocation5 + $0x690] sm:$0xf]
    %v854 = vld [vmem:[#allocation5 + $0x694] sm:$0xf]
    %v855 = vld [vmem:[#allocation5 + $0x698] sm:$0xf]
    %v856 = vld [vmem:[#allocation5 + $0x69c] sm:$0xf]
    %v857 = vld [vmem:[#allocation5 + $0x6a0] sm:$0xf]
    %v858 = vld [vmem:[#allocation5 + $0x6a4] sm:$0xf]
    %v859 = vld [vmem:[#allocation5 + $0x6a8] sm:$0xf]
    %v860 = vld [vmem:[#allocation5 + $0x6ac] sm:$0xf]
    %v861 = vld [vmem:[#allocation5 + $0x6b0] sm:$0xf]
    %v862 = vld [vmem:[#allocation5 + $0x6b4] sm:$0xf]
    %v863 = vld [vmem:[#allocation5 + $0x6b8] sm:$0xf]
    %v864 = vld [vmem:[#allocation5 + $0x6bc] sm:$0xf]
    %v865 = vld [vmem:[#allocation5 + $0x6c0] sm:$0xf]
    %v866 = vld [vmem:[#allocation5 + $0x6c4] sm:$0xf]
    %v867 = vld [vmem:[#allocation5 + $0x6c8] sm:$0xf]
    %v868 = vld [vmem:[#allocation5 + $0x6cc] sm:$0xf]
    %v869 = vld [vmem:[#allocation5 + $0x6d0] sm:$0xf]
    %v870 = vld [vmem:[#allocation5 + $0x6d4] sm:$0xf]
    %v871 = vld [vmem:[#allocation5 + $0x6d8] sm:$0xf]
    %v872 = vld [vmem:[#allocation5 + $0x6dc] sm:$0xf]
    %v873 = vld [vmem:[#allocation5 + $0x6e0] sm:$0xf]
    %v874 = vld [vmem:[#allocation5 + $0x6e4] sm:$0xf]
    %v875 = vld [vmem:[#allocation5 + $0x6e8] sm:$0xf]
    %v876 = vld [vmem:[#allocation5 + $0x6ec] sm:$0xf]
    %v877 = vld [vmem:[#allocation5 + $0x6f0] sm:$0xf]
    %v878 = vld [vmem:[#allocation5 + $0x6f4] sm:$0xf]
    %v879 = vld [vmem:[#allocation5 + $0x6f8] sm:$0xf]
    %v880 = vld [vmem:[#allocation5 + $0x6fc] sm:$0xf]
    %v881 = vld [vmem:[#allocation5 + $0x700] sm:$0xf]
    %v882 = vld [vmem:[#allocation5 + $0x704] sm:$0xf]
    %v883 = vld [vmem:[#allocation5 + $0x708] sm:$0xf]
    %v884 = vld [vmem:[#allocation5 + $0x70c] sm:$0xf]
    %v885 = vld [vmem:[#allocation5 + $0x710] sm:$0xf]
    %v886 = vld [vmem:[#allocation5 + $0x714] sm:$0xf]
    %v887 = vld [vmem:[#allocation5 + $0x718] sm:$0xf]
    %v888 = vld [vmem:[#allocation5 + $0x71c] sm:$0xf]
    %v889 = vld [vmem:[#allocation5 + $0x720] sm:$0xf]
    %v890 = vld [vmem:[#allocation5 + $0x724] sm:$0xf]
    %v891 = vld [vmem:[#allocation5 + $0x728] sm:$0xf]
    %v892 = vld [vmem:[#allocation5 + $0x72c] sm:$0xf]
    %v893 = vld [vmem:[#allocation5 + $0x730] sm:$0xf]
    %v894 = vld [vmem:[#allocation5 + $0x734] sm:$0xf]
    %v895 = vld [vmem:[#allocation5 + $0x738] sm:$0xf]
    %v896 = vld [vmem:[#allocation5 + $0x73c] sm:$0xf]
    %v897 = vld [vmem:[#allocation5 + $0x740] sm:$0xf]
    %v898 = vld [vmem:[#allocation5 + $0x744] sm:$0xf]
    %v899 = vld [vmem:[#allocation5 + $0x748] sm:$0xf]
    %v900 = vld [vmem:[#allocation5 + $0x74c] sm:$0xf]
    %v901 = vld [vmem:[#allocation5 + $0x750] sm:$0xf]
    %v902 = vld [vmem:[#allocation5 + $0x754] sm:$0xf]
    %v903 = vld [vmem:[#allocation5 + $0x758] sm:$0xf]
    %v904 = vld [vmem:[#allocation5 + $0x75c] sm:$0xf]
    %v905 = vld [vmem:[#allocation5 + $0x760] sm:$0xf]
    %v906 = vld [vmem:[#allocation5 + $0x764] sm:$0xf]
    %v907 = vld [vmem:[#allocation5 + $0x768] sm:$0xf]
    %v908 = vld [vmem:[#allocation5 + $0x76c] sm:$0xf]
    %v909 = vld [vmem:[#allocation5 + $0x770] sm:$0xf]
    %v910 = vld [vmem:[#allocation5 + $0x774] sm:$0xf]
    %v911 = vld [vmem:[#allocation5 + $0x778] sm:$0xf]
    %v912 = vld [vmem:[#allocation5 + $0x77c] sm:$0xf]
    %v913 = vld [vmem:[#allocation5 + $0x780] sm:$0xf]
    %v914 = vld [vmem:[#allocation5 + $0x784] sm:$0xf]
    %v915 = vld [vmem:[#allocation5 + $0x788] sm:$0xf]
    %v916 = vld [vmem:[#allocation5 + $0x78c] sm:$0xf]
    %v917 = vld [vmem:[#allocation5 + $0x790] sm:$0xf]
    %v918 = vld [vmem:[#allocation5 + $0x794] sm:$0xf]
    %v919 = vld [vmem:[#allocation5 + $0x798] sm:$0xf]
    %v920 = vld [vmem:[#allocation5 + $0x79c] sm:$0xf]
    %v921 = vld [vmem:[#allocation5 + $0x7a0] sm:$0xf]
    %v922 = vld [vmem:[#allocation5 + $0x7a4] sm:$0xf]
    %v923 = vld [vmem:[#allocation5 + $0x7a8] sm:$0xf]
    %v924 = vld [vmem:[#allocation5 + $0x7ac] sm:$0xf]
    %v925 = vld [vmem:[#allocation5 + $0x7b0] sm:$0xf]
    %v926 = vld [vmem:[#allocation5 + $0x7b4] sm:$0xf]
    %v927 = vld [vmem:[#allocation5 + $0x7b8] sm:$0xf]
    %v928 = vld [vmem:[#allocation5 + $0x7bc] sm:$0xf]
    %v929 = vld [vmem:[#allocation5 + $0x7c0] sm:$0xf]
    %v930 = vld [vmem:[#allocation5 + $0x7c4] sm:$0xf]
    %v931 = vld [vmem:[#allocation5 + $0x7c8] sm:$0xf]
    %v932 = vld [vmem:[#allocation5 + $0x7cc] sm:$0xf]
    %v933 = vld [vmem:[#allocation5 + $0x7d0] sm:$0xf]
    %v934 = vld [vmem:[#allocation5 + $0x7d4] sm:$0xf]
    %v935 = vld [vmem:[#allocation5 + $0x7d8] sm:$0xf]
    %v936 = vld [vmem:[#allocation5 + $0x7dc] sm:$0xf]
    %v937 = vld [vmem:[#allocation5 + $0x7e0] sm:$0xf]
    %v938 = vld [vmem:[#allocation5 + $0x7e4] sm:$0xf]
    %v939 = vld [vmem:[#allocation5 + $0x7e8] sm:$0xf]
    %v940 = vld [vmem:[#allocation5 + $0x7ec] sm:$0xf]
    %v941 = vld [vmem:[#allocation5 + $0x7f0] sm:$0xf]
    %v942 = vld [vmem:[#allocation5 + $0x7f4] sm:$0xf]
    %v943 = vld [vmem:[#allocation5 + $0x7f8] sm:$0xf]
    %v944 = vld [vmem:[#allocation5 + $0x7fc] sm:$0xf]
    %v945 = vld [vmem:[#allocation5 + $0x800] sm:$0xf]
    %v946 = vld [vmem:[#allocation5 + $0x804] sm:$0xf]
    %v947 = vld [vmem:[#allocation5 + $0x808] sm:$0xf]
    %v948 = vld [vmem:[#allocation5 + $0x80c] sm:$0xf]
    %v949 = vld [vmem:[#allocation5 + $0x810] sm:$0xf]
    %v950 = vld [vmem:[#allocation5 + $0x814] sm:$0xf]
    %v951 = vld [vmem:[#allocation5 + $0x818] sm:$0xf]
    %v952 = vld [vmem:[#allocation5 + $0x81c] sm:$0xf]
    %v953 = vld [vmem:[#allocation5 + $0x820] sm:$0xf]
    %v954 = vld [vmem:[#allocation5 + $0x824] sm:$0xf]
    %v955 = vld [vmem:[#allocation5 + $0x828] sm:$0xf]
    %v956 = vld [vmem:[#allocation5 + $0x82c] sm:$0xf]
    %v957 = vld [vmem:[#allocation5 + $0x830] sm:$0xf]
    %v958 = vld [vmem:[#allocation5 + $0x834] sm:$0xf]
    %v959 = vld [vmem:[#allocation5 + $0x838] sm:$0xf]
    %v960 = vld [vmem:[#allocation5 + $0x83c] sm:$0xf]
    %v961 = vld [vmem:[#allocation5 + $0x840] sm:$0xf]
    %v962 = vld [vmem:[#allocation5 + $0x844] sm:$0xf]
    %v963 = vld [vmem:[#allocation5 + $0x848] sm:$0xf]
    %v964 = vld [vmem:[#allocation5 + $0x84c] sm:$0xf]
    %v965 = vld [vmem:[#allocation5 + $0x850] sm:$0xf]
    %v966 = vld [vmem:[#allocation5 + $0x854] sm:$0xf]
    %v967 = vld [vmem:[#allocation5 + $0x858] sm:$0xf]
    %v968 = vld [vmem:[#allocation5 + $0x85c] sm:$0xf]
    %v969 = vld [vmem:[#allocation5 + $0x860] sm:$0xf]
    %v970 = vld [vmem:[#allocation5 + $0x864] sm:$0xf]
    %v971 = vld [vmem:[#allocation5 + $0x868] sm:$0xf]
    %v972 = vld [vmem:[#allocation5 + $0x86c] sm:$0xf]
    %v973 = vld [vmem:[#allocation5 + $0x870] sm:$0xf]
    %v974 = vld [vmem:[#allocation5 + $0x874] sm:$0xf]
    %v975 = vld [vmem:[#allocation5 + $0x878] sm:$0xf]
    %v976 = vld [vmem:[#allocation5 + $0x87c] sm:$0xf]
    %v977 = vld [vmem:[#allocation5 + $0x880] sm:$0xf]
    %v978 = vld [vmem:[#allocation5 + $0x884] sm:$0xf]
    %v979 = vld [vmem:[#allocation5 + $0x888] sm:$0xf]
    %v980 = vld [vmem:[#allocation5 + $0x88c] sm:$0xf]
    %v981 = vld [vmem:[#allocation5 + $0x890] sm:$0xf]
    %v982 = vld [vmem:[#allocation5 + $0x894] sm:$0xf]
    %v983 = vld [vmem:[#allocation5 + $0x898] sm:$0xf]
    %v984 = vld [vmem:[#allocation5 + $0x89c] sm:$0xf]
    %v985 = vld [vmem:[#allocation5 + $0x8a0] sm:$0xf]
    %v986 = vld [vmem:[#allocation5 + $0x8a4] sm:$0xf]
    %v987 = vld [vmem:[#allocation5 + $0x8a8] sm:$0xf]
    %v988 = vld [vmem:[#allocation5 + $0x8ac] sm:$0xf]
    %v989 = vld [vmem:[#allocation5 + $0x8b0] sm:$0xf]
    %v990 = vld [vmem:[#allocation5 + $0x8b4] sm:$0xf]
    %v991 = vld [vmem:[#allocation5 + $0x8b8] sm:$0xf]
    %v992 = vld [vmem:[#allocation5 + $0x8bc] sm:$0xf]
    %v993 = vld [vmem:[#allocation5 + $0x8c0] sm:$0xf]
    %v994 = vld [vmem:[#allocation5 + $0x8c4] sm:$0xf]
    %v995 = vld [vmem:[#allocation5 + $0x8c8] sm:$0xf]
    %v996 = vld [vmem:[#allocation5 + $0x8cc] sm:$0xf]
    %v997 = vld [vmem:[#allocation5 + $0x8d0] sm:$0xf]
    %v998 = vld [vmem:[#allocation5 + $0x8d4] sm:$0xf]
    %v999 = vld [vmem:[#allocation5 + $0x8d8] sm:$0xf]
    %v1000 = vld [vmem:[#allocation5 + $0x8dc] sm:$0xf]
    %v1001 = vld [vmem:[#allocation5 + $0x8e0] sm:$0xf]
    %v1002 = vld [vmem:[#allocation5 + $0x8e4] sm:$0xf]
    %v1003 = vld [vmem:[#allocation5 + $0x8e8] sm:$0xf]
    %v1004 = vld [vmem:[#allocation5 + $0x8ec] sm:$0xf]
    %v1005 = vld [vmem:[#allocation5 + $0x8f0] sm:$0xf]
    %v1006 = vld [vmem:[#allocation5 + $0x8f4] sm:$0xf]
    %v1007 = vld [vmem:[#allocation5 + $0x8f8] sm:$0xf]
    %v1008 = vld [vmem:[#allocation5 + $0x8fc] sm:$0xf]
    %v1009 = vld [vmem:[#allocation5 + $0x900] sm:$0xf]
    %v1010 = vld [vmem:[#allocation5 + $0x904] sm:$0xf]
    %v1011 = vld [vmem:[#allocation5 + $0x908] sm:$0xf]
    %v1012 = vld [vmem:[#allocation5 + $0x90c] sm:$0xf]
    %v1013 = vld [vmem:[#allocation5 + $0x910] sm:$0xf]
    %v1014 = vld [vmem:[#allocation5 + $0x914] sm:$0xf]
    %v1015 = vld [vmem:[#allocation5 + $0x918] sm:$0xf]
    %v1016 = vld [vmem:[#allocation5 + $0x91c] sm:$0xf]
    %v1017 = vld [vmem:[#allocation5 + $0x920] sm:$0xf]
    %v1018 = vld [vmem:[#allocation5 + $0x924] sm:$0xf]
    %v1019 = vld [vmem:[#allocation5 + $0x928] sm:$0xf]
    %v1020 = vld [vmem:[#allocation5 + $0x92c] sm:$0xf]
    %v1021 = vld [vmem:[#allocation5 + $0x930] sm:$0xf]
    %v1022 = vld [vmem:[#allocation5 + $0x934] sm:$0xf]
    %v1023 = vld [vmem:[#allocation5 + $0x938] sm:$0xf]
    %v1024 = vld [vmem:[#allocation5 + $0x93c] sm:$0xf]
    %v1025 = vld [vmem:[#allocation5 + $0x940] sm:$0xf]
    %v1026 = vld [vmem:[#allocation5 + $0x944] sm:$0xf]
    %v1027 = vld [vmem:[#allocation5 + $0x948] sm:$0xf]
    %v1028 = vld [vmem:[#allocation5 + $0x94c] sm:$0xf]
    %v1029 = vld [vmem:[#allocation5 + $0x950] sm:$0xf]
    %v1030 = vld [vmem:[#allocation5 + $0x954] sm:$0xf]
    %v1031 = vld [vmem:[#allocation5 + $0x958] sm:$0xf]
    %v1032 = vld [vmem:[#allocation5 + $0x95c] sm:$0xf]
    %v1033 = vld [vmem:[#allocation5 + $0x960] sm:$0xf]
    %v1034 = vld [vmem:[#allocation5 + $0x964] sm:$0xf]
    %v1035 = vld [vmem:[#allocation5 + $0x968] sm:$0xf]
    %v1036 = vld [vmem:[#allocation5 + $0x96c] sm:$0xf]
    %v1037 = vld [vmem:[#allocation5 + $0x970] sm:$0xf]
    %v1038 = vld [vmem:[#allocation5 + $0x974] sm:$0xf]
    %v1039 = vld [vmem:[#allocation5 + $0x978] sm:$0xf]
    %v1040 = vld [vmem:[#allocation5 + $0x97c] sm:$0xf]
    %v1041 = vld [vmem:[#allocation5 + $0x980] sm:$0xf]
    %v1042 = vld [vmem:[#allocation5 + $0x984] sm:$0xf]
    %v1043 = vld [vmem:[#allocation5 + $0x988] sm:$0xf]
    %v1044 = vld [vmem:[#allocation5 + $0x98c] sm:$0xf]
    %v1045 = vld [vmem:[#allocation5 + $0x990] sm:$0xf]
    %v1046 = vld [vmem:[#allocation5 + $0x994] sm:$0xf]
    %v1047 = vld [vmem:[#allocation5 + $0x998] sm:$0xf]
    %v1048 = vld [vmem:[#allocation5 + $0x99c] sm:$0xf]
    %v1049 = vld [vmem:[#allocation5 + $0x9a0] sm:$0xf]
    %v1050 = vld [vmem:[#allocation5 + $0x9a4] sm:$0xf]
    %v1051 = vld [vmem:[#allocation5 + $0x9a8] sm:$0xf]
    %v1052 = vld [vmem:[#allocation5 + $0x9ac] sm:$0xf]
    %v1053 = vld [vmem:[#allocation5 + $0x9b0] sm:$0xf]
    %v1054 = vld [vmem:[#allocation5 + $0x9b4] sm:$0xf]
    %v1055 = vld [vmem:[#allocation5 + $0x9b8] sm:$0xf]
    %v1056 = vld [vmem:[#allocation5 + $0x9bc] sm:$0xf]
    %v1057 = vld [vmem:[#allocation5 + $0x9c0] sm:$0xf]
    %v1058 = vld [vmem:[#allocation5 + $0x9c4] sm:$0xf]
    %v1059 = vld [vmem:[#allocation5 + $0x9c8] sm:$0xf]
    %v1060 = vld [vmem:[#allocation5 + $0x9cc] sm:$0xf]
    %v1061 = vld [vmem:[#allocation5 + $0x9d0] sm:$0xf]
    %v1062 = vld [vmem:[#allocation5 + $0x9d4] sm:$0xf]
    %v1063 = vld [vmem:[#allocation5 + $0x9d8] sm:$0xf]
    %v1064 = vld [vmem:[#allocation5 + $0x9dc] sm:$0xf]
    %v1065 = vld [vmem:[#allocation5 + $0x9e0] sm:$0xf]
    %v1066 = vld [vmem:[#allocation5 + $0x9e4] sm:$0xf]
    %v1067 = vld [vmem:[#allocation5 + $0x9e8] sm:$0xf]
    %v1068 = vld [vmem:[#allocation5 + $0x9ec] sm:$0xf]
    %v1069 = vld [vmem:[#allocation5 + $0x9f0] sm:$0xf]
    %v1070 = vld [vmem:[#allocation5 + $0x9f4] sm:$0xf]
    %v1071 = vld [vmem:[#allocation5 + $0x9f8] sm:$0xf]
    %v1072 = vld [vmem:[#allocation5 + $0x9fc] sm:$0xf]
    %v1073 = vld [vmem:[#allocation5 + $0xa00] sm:$0xf]
    %v1074 = vld [vmem:[#allocation5 + $0xa04] sm:$0xf]
    %v1075 = vld [vmem:[#allocation5 + $0xa08] sm:$0xf]
    %v1076 = vld [vmem:[#allocation5 + $0xa0c] sm:$0xf]
    %v1077 = vld [vmem:[#allocation5 + $0xa10] sm:$0xf]
    %v1078 = vld [vmem:[#allocation5 + $0xa14] sm:$0xf]
    %v1079 = vld [vmem:[#allocation5 + $0xa18] sm:$0xf]
    %v1080 = vld [vmem:[#allocation5 + $0xa1c] sm:$0xf]
    %v1081 = vld [vmem:[#allocation5 + $0xa20] sm:$0xf]
    %v1082 = vld [vmem:[#allocation5 + $0xa24] sm:$0xf]
    %v1083 = vld [vmem:[#allocation5 + $0xa28] sm:$0xf]
    %v1084 = vld [vmem:[#allocation5 + $0xa2c] sm:$0xf]
    %v1085 = vld [vmem:[#allocation5 + $0xa30] sm:$0xf]
    %v1086 = vld [vmem:[#allocation5 + $0xa34] sm:$0xf]
    %v1087 = vld [vmem:[#allocation5 + $0xa38] sm:$0xf]
    %v1088 = vld [vmem:[#allocation5 + $0xa3c] sm:$0xf]
    %v1089 = vld [vmem:[#allocation5 + $0xa40] sm:$0xf]
    %v1090 = vld [vmem:[#allocation5 + $0xa44] sm:$0xf]
    %v1091 = vld [vmem:[#allocation5 + $0xa48] sm:$0xf]
    %v1092 = vld [vmem:[#allocation5 + $0xa4c] sm:$0xf]
    %v1093 = vld [vmem:[#allocation5 + $0xa50] sm:$0xf]
    %v1094 = vld [vmem:[#allocation5 + $0xa54] sm:$0xf]
    %v1095 = vld [vmem:[#allocation5 + $0xa58] sm:$0xf]
    %v1096 = vld [vmem:[#allocation5 + $0xa5c] sm:$0xf]
    %v1097 = vld [vmem:[#allocation5 + $0xa60] sm:$0xf]
    %v1098 = vld [vmem:[#allocation5 + $0xa64] sm:$0xf]
    %v1099 = vld [vmem:[#allocation5 + $0xa68] sm:$0xf]
    %v1100 = vld [vmem:[#allocation5 + $0xa6c] sm:$0xf]
    %v1101 = vld [vmem:[#allocation5 + $0xa70] sm:$0xf]
    %v1102 = vld [vmem:[#allocation5 + $0xa74] sm:$0xf]
    %v1103 = vld [vmem:[#allocation5 + $0xa78] sm:$0xf]
    %v1104 = vld [vmem:[#allocation5 + $0xa7c] sm:$0xf]
    %v1105 = vld [vmem:[#allocation5 + $0xa80] sm:$0xf]
    %v1106 = vld [vmem:[#allocation5 + $0xa84] sm:$0xf]
    %v1107 = vld [vmem:[#allocation5 + $0xa88] sm:$0xf]
    %v1108 = vld [vmem:[#allocation5 + $0xa8c] sm:$0xf]
    %v1109 = vld [vmem:[#allocation5 + $0xa90] sm:$0xf]
    %v1110 = vld [vmem:[#allocation5 + $0xa94] sm:$0xf]
    %v1111 = vld [vmem:[#allocation5 + $0xa98] sm:$0xf]
    %v1112 = vld [vmem:[#allocation5 + $0xa9c] sm:$0xf]
    %v1113 = vld [vmem:[#allocation5 + $0xaa0] sm:$0xf]
    %v1114 = vld [vmem:[#allocation5 + $0xaa4] sm:$0xf]
    %v1115 = vld [vmem:[#allocation5 + $0xaa8] sm:$0xf]
    %v1116 = vld [vmem:[#allocation5 + $0xaac] sm:$0xf]
    %v1117 = vld [vmem:[#allocation5 + $0xab0] sm:$0xf]
    %v1118 = vld [vmem:[#allocation5 + $0xab4] sm:$0xf]
    %v1119 = vld [vmem:[#allocation5 + $0xab8] sm:$0xf]
    %v1120 = vld [vmem:[#allocation5 + $0xabc] sm:$0xf]
    %v1121 = vld [vmem:[#allocation5 + $0xac0] sm:$0xf]
    %v1122 = vld [vmem:[#allocation5 + $0xac4] sm:$0xf]
    %v1123 = vld [vmem:[#allocation5 + $0xac8] sm:$0xf]
    %v1124 = vld [vmem:[#allocation5 + $0xacc] sm:$0xf]
    %v1125 = vld [vmem:[#allocation5 + $0xad0] sm:$0xf]
    %v1126 = vld [vmem:[#allocation5 + $0xad4] sm:$0xf]
    %v1127 = vld [vmem:[#allocation5 + $0xad8] sm:$0xf]
    %v1128 = vld [vmem:[#allocation5 + $0xadc] sm:$0xf]
    %v1129 = vld [vmem:[#allocation5 + $0xae0] sm:$0xf]
    %v1130 = vld [vmem:[#allocation5 + $0xae4] sm:$0xf]
    %v1131 = vld [vmem:[#allocation5 + $0xae8] sm:$0xf]
    %v1132 = vld [vmem:[#allocation5 + $0xaec] sm:$0xf]
    %v1133 = vld [vmem:[#allocation5 + $0xaf0] sm:$0xf]
    %v1134 = vld [vmem:[#allocation5 + $0xaf4] sm:$0xf]
    %v1135 = vld [vmem:[#allocation5 + $0xaf8] sm:$0xf]
    %v1136 = vld [vmem:[#allocation5 + $0xafc] sm:$0xf]
    %v1137 = vld [vmem:[#allocation5 + $0xb00] sm:$0xf]
    %v1138 = vld [vmem:[#allocation5 + $0xb04] sm:$0xf]
    %v1139 = vld [vmem:[#allocation5 + $0xb08] sm:$0xf]
    %v1140 = vld [vmem:[#allocation5 + $0xb0c] sm:$0xf]
    %v1141 = vld [vmem:[#allocation5 + $0xb10] sm:$0xf]
    %v1142 = vld [vmem:[#allocation5 + $0xb14] sm:$0xf]
    %v1143 = vld [vmem:[#allocation5 + $0xb18] sm:$0xf]
    %v1144 = vld [vmem:[#allocation5 + $0xb1c] sm:$0xf]
    %v1145 = vld [vmem:[#allocation5 + $0xb20] sm:$0xf]
    %v1146 = vld [vmem:[#allocation5 + $0xb24] sm:$0xf]
    %v1147 = vld [vmem:[#allocation5 + $0xb28] sm:$0xf]
    %v1148 = vld [vmem:[#allocation5 + $0xb2c] sm:$0xf]
    %v1149 = vld [vmem:[#allocation5 + $0xb30] sm:$0xf]
    %v1150 = vld [vmem:[#allocation5 + $0xb34] sm:$0xf]
    %v1151 = vld [vmem:[#allocation5 + $0xb38] sm:$0xf]
    %v1152 = vld [vmem:[#allocation5 + $0xb3c] sm:$0xf]
    %v1153 = vld [vmem:[#allocation5 + $0xb40] sm:$0xf]
    %v1154 = vld [vmem:[#allocation5 + $0xb44] sm:$0xf]
    %v1155 = vld [vmem:[#allocation5 + $0xb48] sm:$0xf]
    %v1156 = vld [vmem:[#allocation5 + $0xb4c] sm:$0xf]
    %v1157 = vld [vmem:[#allocation5 + $0xb50] sm:$0xf]
    %v1158 = vld [vmem:[#allocation5 + $0xb54] sm:$0xf]
    %v1159 = vld [vmem:[#allocation5 + $0xb58] sm:$0xf]
    %v1160 = vld [vmem:[#allocation5 + $0xb5c] sm:$0xf]
    %v1161 = vld [vmem:[#allocation5 + $0xb60] sm:$0xf]
    %v1162 = vld [vmem:[#allocation5 + $0xb64] sm:$0xf]
    %v1163 = vld [vmem:[#allocation5 + $0xb68] sm:$0xf]
    %v1164 = vld [vmem:[#allocation5 + $0xb6c] sm:$0xf]
    %v1165 = vld [vmem:[#allocation5 + $0xb70] sm:$0xf]
    %v1166 = vld [vmem:[#allocation5 + $0xb74] sm:$0xf]
    %v1167 = vld [vmem:[#allocation5 + $0xb78] sm:$0xf]
    %v1168 = vld [vmem:[#allocation5 + $0xb7c] sm:$0xf]
    %v1169 = vld [vmem:[#allocation5 + $0xb80] sm:$0xf]
    %v1170 = vld [vmem:[#allocation5 + $0xb84] sm:$0xf]
    %v1171 = vld [vmem:[#allocation5 + $0xb88] sm:$0xf]
    %v1172 = vld [vmem:[#allocation5 + $0xb8c] sm:$0xf]
    %v1173 = vld [vmem:[#allocation5 + $0xb90] sm:$0xf]
    %v1174 = vld [vmem:[#allocation5 + $0xb94] sm:$0xf]
    %v1175 = vld [vmem:[#allocation5 + $0xb98] sm:$0xf]
    %v1176 = vld [vmem:[#allocation5 + $0xb9c] sm:$0xf]
    %v1177 = vld [vmem:[#allocation5 + $0xba0] sm:$0xf]
    %v1178 = vld [vmem:[#allocation5 + $0xba4] sm:$0xf]
    %v1179 = vld [vmem:[#allocation5 + $0xba8] sm:$0xf]
    %v1180 = vld [vmem:[#allocation5 + $0xbac] sm:$0xf]
    %v1181 = vld [vmem:[#allocation5 + $0xbb0] sm:$0xf]
    %v1182 = vld [vmem:[#allocation5 + $0xbb4] sm:$0xf]
    %v1183 = vld [vmem:[#allocation5 + $0xbb8] sm:$0xf]
    %v1184 = vld [vmem:[#allocation5 + $0xbbc] sm:$0xf]
    %v1185 = vld [vmem:[#allocation5 + $0xbc0] sm:$0xf]
    %v1186 = vld [vmem:[#allocation5 + $0xbc4] sm:$0xf]
    %v1187 = vld [vmem:[#allocation5 + $0xbc8] sm:$0xf]
    %v1188 = vld [vmem:[#allocation5 + $0xbcc] sm:$0xf]
    %v1189 = vld [vmem:[#allocation5 + $0xbd0] sm:$0xf]
    %v1190 = vld [vmem:[#allocation5 + $0xbd4] sm:$0xf]
    %v1191 = vld [vmem:[#allocation5 + $0xbd8] sm:$0xf]
    %v1192 = vld [vmem:[#allocation5 + $0xbdc] sm:$0xf]
    %v1193 = vld [vmem:[#allocation5 + $0xbe0] sm:$0xf]
    %v1194 = vld [vmem:[#allocation5 + $0xbe4] sm:$0xf]
    %v1195 = vld [vmem:[#allocation5 + $0xbe8] sm:$0xf]
    %v1196 = vld [vmem:[#allocation5 + $0xbec] sm:$0xf]
    %v1197 = vld [vmem:[#allocation5 + $0xbf0] sm:$0xf]
    %v1198 = vld [vmem:[#allocation5 + $0xbf4] sm:$0xf]
    %v1199 = vld [vmem:[#allocation5 + $0xbf8] sm:$0xf]
    %v1200 = vld [vmem:[#allocation5 + $0xbfc] sm:$0xf]
    %v1201 = vld [vmem:[#allocation5 + $0xc00] sm:$0xf]
    %v1202 = vld [vmem:[#allocation5 + $0xc04] sm:$0xf]
    %v1203 = vld [vmem:[#allocation5 + $0xc08] sm:$0xf]
    %v1204 = vld [vmem:[#allocation5 + $0xc0c] sm:$0xf]
    %v1205 = vld [vmem:[#allocation5 + $0xc10] sm:$0xf]
    %v1206 = vld [vmem:[#allocation5 + $0xc14] sm:$0xf]
    %v1207 = vld [vmem:[#allocation5 + $0xc18] sm:$0xf]
    %v1208 = vld [vmem:[#allocation5 + $0xc1c] sm:$0xf]
    %v1209 = vld [vmem:[#allocation5 + $0xc20] sm:$0xf]
    %v1210 = vld [vmem:[#allocation5 + $0xc24] sm:$0xf]
    %v1211 = vld [vmem:[#allocation5 + $0xc28] sm:$0xf]
    %v1212 = vld [vmem:[#allocation5 + $0xc2c] sm:$0xf]
    %v1213 = vld [vmem:[#allocation5 + $0xc30] sm:$0xf]
    %v1214 = vld [vmem:[#allocation5 + $0xc34] sm:$0xf]
    %v1215 = vld [vmem:[#allocation5 + $0xc38] sm:$0xf]
    %v1216 = vld [vmem:[#allocation5 + $0xc3c] sm:$0xf]
    %v1217 = vld [vmem:[#allocation5 + $0xc40] sm:$0xf]
    %v1218 = vld [vmem:[#allocation5 + $0xc44] sm:$0xf]
    %v1219 = vld [vmem:[#allocation5 + $0xc48] sm:$0xf]
    %v1220 = vld [vmem:[#allocation5 + $0xc4c] sm:$0xf]
    %v1221 = vld [vmem:[#allocation5 + $0xc50] sm:$0xf]
    %v1222 = vld [vmem:[#allocation5 + $0xc54] sm:$0xf]
    %v1223 = vld [vmem:[#allocation5 + $0xc58] sm:$0xf]
    %v1224 = vld [vmem:[#allocation5 + $0xc5c] sm:$0xf]
    %v1225 = vld [vmem:[#allocation5 + $0xc60] sm:$0xf]
    %v1226 = vld [vmem:[#allocation5 + $0xc64] sm:$0xf]
    %v1227 = vld [vmem:[#allocation5 + $0xc68] sm:$0xf]
    %v1228 = vld [vmem:[#allocation5 + $0xc6c] sm:$0xf]
    %v1229 = vld [vmem:[#allocation5 + $0xc70] sm:$0xf]
    %v1230 = vld [vmem:[#allocation5 + $0xc74] sm:$0xf]
    %v1231 = vld [vmem:[#allocation5 + $0xc78] sm:$0xf]
    %v1232 = vld [vmem:[#allocation5 + $0xc7c] sm:$0xf]
    %v1233 = vld [vmem:[#allocation5 + $0xc80] sm:$0xf]
    %v1234 = vld [vmem:[#allocation5 + $0xc84] sm:$0xf]
    %v1235 = vld [vmem:[#allocation5 + $0xc88] sm:$0xf]
    %v1236 = vld [vmem:[#allocation5 + $0xc8c] sm:$0xf]
    %v1237 = vld [vmem:[#allocation5 + $0xc90] sm:$0xf]
    %v1238 = vld [vmem:[#allocation5 + $0xc94] sm:$0xf]
    %v1239 = vld [vmem:[#allocation5 + $0xc98] sm:$0xf]
    %v1240 = vld [vmem:[#allocation5 + $0xc9c] sm:$0xf]
    %v1241 = vld [vmem:[#allocation5 + $0xca0] sm:$0xf]
    %v1242 = vld [vmem:[#allocation5 + $0xca4] sm:$0xf]
    %v1243 = vld [vmem:[#allocation5 + $0xca8] sm:$0xf]
    %v1244 = vld [vmem:[#allocation5 + $0xcac] sm:$0xf]
    %v1245 = vld [vmem:[#allocation5 + $0xcb0] sm:$0xf]
    %v1246 = vld [vmem:[#allocation5 + $0xcb4] sm:$0xf]
    %v1247 = vld [vmem:[#allocation5 + $0xcb8] sm:$0xf]
    %v1248 = vld [vmem:[#allocation5 + $0xcbc] sm:$0xf]
    %v1249 = vld [vmem:[#allocation5 + $0xcc0] sm:$0xf]
    %v1250 = vld [vmem:[#allocation5 + $0xcc4] sm:$0xf]
    %v1251 = vld [vmem:[#allocation5 + $0xcc8] sm:$0xf]
    %v1252 = vld [vmem:[#allocation5 + $0xccc] sm:$0xf]
    %v1253 = vld [vmem:[#allocation5 + $0xcd0] sm:$0xf]
    %v1254 = vld [vmem:[#allocation5 + $0xcd4] sm:$0xf]
    %v1255 = vld [vmem:[#allocation5 + $0xcd8] sm:$0xf]
    %v1256 = vld [vmem:[#allocation5 + $0xcdc] sm:$0xf]
    %v1257 = vld [vmem:[#allocation5 + $0xce0] sm:$0xf]
    %v1258 = vld [vmem:[#allocation5 + $0xce4] sm:$0xf]
    %v1259 = vld [vmem:[#allocation5 + $0xce8] sm:$0xf]
    %v1260 = vld [vmem:[#allocation5 + $0xcec] sm:$0xf]
    %v1261 = vld [vmem:[#allocation5 + $0xcf0] sm:$0xf]
    %v1262 = vld [vmem:[#allocation5 + $0xcf4] sm:$0xf]
    %v1263 = vld [vmem:[#allocation5 + $0xcf8] sm:$0xf]
    %v1264 = vld [vmem:[#allocation5 + $0xcfc] sm:$0xf]
    %v1265 = vld [vmem:[#allocation5 + $0xd00] sm:$0xf]
    %v1266 = vld [vmem:[#allocation5 + $0xd04] sm:$0xf]
    %v1267 = vld [vmem:[#allocation5 + $0xd08] sm:$0xf]
    %v1268 = vld [vmem:[#allocation5 + $0xd0c] sm:$0xf]
    %v1269 = vld [vmem:[#allocation5 + $0xd10] sm:$0xf]
    %v1270 = vld [vmem:[#allocation5 + $0xd14] sm:$0xf]
    %v1271 = vld [vmem:[#allocation5 + $0xd18] sm:$0xf]
    %v1272 = vld [vmem:[#allocation5 + $0xd1c] sm:$0xf]
    %v1273 = vld [vmem:[#allocation5 + $0xd20] sm:$0xf]
    %v1274 = vld [vmem:[#allocation5 + $0xd24] sm:$0xf]
    %v1275 = vld [vmem:[#allocation5 + $0xd28] sm:$0xf]
    %v1276 = vld [vmem:[#allocation5 + $0xd2c] sm:$0xf]
    %v1277 = vld [vmem:[#allocation5 + $0xd30] sm:$0xf]
    %v1278 = vld [vmem:[#allocation5 + $0xd34] sm:$0xf]
    %v1279 = vld [vmem:[#allocation5 + $0xd38] sm:$0xf]
    %v1280 = vld [vmem:[#allocation5 + $0xd3c] sm:$0xf]
    %v1281 = vld [vmem:[#allocation5 + $0xd40] sm:$0xf]
    %v1282 = vld [vmem:[#allocation5 + $0xd44] sm:$0xf]
    %v1283 = vld [vmem:[#allocation5 + $0xd48] sm:$0xf]
    %v1284 = vld [vmem:[#allocation5 + $0xd4c] sm:$0xf]
    %v1285 = vld [vmem:[#allocation5 + $0xd50] sm:$0xf]
    %v1286 = vld [vmem:[#allocation5 + $0xd54] sm:$0xf]
    %v1287 = vld [vmem:[#allocation5 + $0xd58] sm:$0xf]
    %v1288 = vld [vmem:[#allocation5 + $0xd5c] sm:$0xf]
    %v1289 = vld [vmem:[#allocation5 + $0xd60] sm:$0xf]
    %v1290 = vld [vmem:[#allocation5 + $0xd64] sm:$0xf]
    %v1291 = vld [vmem:[#allocation5 + $0xd68] sm:$0xf]
    %v1292 = vld [vmem:[#allocation5 + $0xd6c] sm:$0xf]
    %v1293 = vld [vmem:[#allocation5 + $0xd70] sm:$0xf]
    %v1294 = vld [vmem:[#allocation5 + $0xd74] sm:$0xf]
    %v1295 = vld [vmem:[#allocation5 + $0xd78] sm:$0xf]
    %v1296 = vld [vmem:[#allocation5 + $0xd7c] sm:$0xf]
    %v1297 = vld [vmem:[#allocation5 + $0xd80] sm:$0xf]
    %v1298 = vld [vmem:[#allocation5 + $0xd84] sm:$0xf]
    %v1299 = vld [vmem:[#allocation5 + $0xd88] sm:$0xf]
    %v1300 = vld [vmem:[#allocation5 + $0xd8c] sm:$0xf]
    %v1301 = vld [vmem:[#allocation5 + $0xd90] sm:$0xf]
    %v1302 = vld [vmem:[#allocation5 + $0xd94] sm:$0xf]
    %v1303 = vld [vmem:[#allocation5 + $0xd98] sm:$0xf]
    %v1304 = vld [vmem:[#allocation5 + $0xd9c] sm:$0xf]
    %v1305 = vld [vmem:[#allocation5 + $0xda0] sm:$0xf]
    %v1306 = vld [vmem:[#allocation5 + $0xda4] sm:$0xf]
    %v1307 = vld [vmem:[#allocation5 + $0xda8] sm:$0xf]
    %v1308 = vld [vmem:[#allocation5 + $0xdac] sm:$0xf]
    %v1309 = vld [vmem:[#allocation5 + $0xdb0] sm:$0xf]
    %v1310 = vld [vmem:[#allocation5 + $0xdb4] sm:$0xf]
    %v1311 = vld [vmem:[#allocation5 + $0xdb8] sm:$0xf]
    %v1312 = vld [vmem:[#allocation5 + $0xdbc] sm:$0xf]
    %v1313 = vld [vmem:[#allocation5 + $0xdc0] sm:$0xf]
    %v1314 = vld [vmem:[#allocation5 + $0xdc4] sm:$0xf]
    %v1315 = vld [vmem:[#allocation7] sm:$0x1]
    %v1317 = vlaneseq
    %v1318 = vshrl.u32 %v1317, 7
    %v1319 = vsub.s32 0, %v1318
    %v1320 = vrot.slane %v1315, %v1319
    %v2204 = vunpack.c.l.b16 %v433
    %v2205 = vunpack.c.l.b16 %v434
    %v2206 = vunpack.c.l.b16 %v435
    %v2207 = vunpack.c.l.b16 %v436
    %v2208 = vunpack.c.l.b16 %v437
    %v2209 = vunpack.c.l.b16 %v438
    %v2210 = vunpack.c.l.b16 %v439
    %v2211 = vunpack.c.l.b16 %v440
    %v2212 = vunpack.c.l.b16 %v441
    %v2213 = vunpack.c.l.b16 %v442
    %v2214 = vunpack.c.l.b16 %v443
    %v2215 = vunpack.c.l.b16 %v444
    %v2216 = vunpack.c.l.b16 %v445
    %v2217 = vunpack.c.l.b16 %v446
    %v2218 = vunpack.c.l.b16 %v447
    %v2219 = vunpack.c.l.b16 %v448
    %v2220 = vunpack.c.l.b16 %v449
    %v2221 = vunpack.c.l.b16 %v450
    %v2222 = vunpack.c.l.b16 %v451
    %v2223 = vunpack.c.l.b16 %v452
    %v2224 = vunpack.c.l.b16 %v453
    %v2225 = vunpack.c.l.b16 %v454
    %v2226 = vunpack.c.l.b16 %v455
    %v2227 = vunpack.c.l.b16 %v456
    %v2228 = vunpack.c.l.b16 %v457
    %v2229 = vunpack.c.l.b16 %v458
    %v2230 = vunpack.c.l.b16 %v459
    %v2231 = vunpack.c.l.b16 %v460
    %v2232 = vunpack.c.l.b16 %v461
    %v2233 = vunpack.c.l.b16 %v462
    %v2234 = vunpack.c.l.b16 %v463
    %v2235 = vunpack.c.l.b16 %v464
    %v2236 = vunpack.c.l.b16 %v465
    %v2237 = vunpack.c.l.b16 %v466
    %v2238 = vunpack.c.l.b16 %v467
    %v2239 = vunpack.c.l.b16 %v468
    %v2240 = vunpack.c.l.b16 %v469
    %v2241 = vunpack.c.l.b16 %v470
    %v2242 = vunpack.c.l.b16 %v471
    %v2243 = vunpack.c.l.b16 %v472
    %v2244 = vunpack.c.l.b16 %v473
    %v2245 = vunpack.c.l.b16 %v474
    %v2246 = vunpack.c.l.b16 %v475
    %v2247 = vunpack.c.l.b16 %v476
    %v2248 = vunpack.c.l.b16 %v477
    %v2249 = vunpack.c.l.b16 %v478
    %v2250 = vunpack.c.l.b16 %v479
    %v2251 = vunpack.c.l.b16 %v480
    %v2252 = vunpack.c.l.b16 %v481
    %v2253 = vunpack.c.l.b16 %v482
    %v2254 = vunpack.c.l.b16 %v483
    %v2255 = vunpack.c.l.b16 %v484
    %v2256 = vunpack.c.l.b16 %v485
    %v2257 = vunpack.c.l.b16 %v486
    %v2258 = vunpack.c.l.b16 %v487
    %v2259 = vunpack.c.l.b16 %v488
    %v2260 = vunpack.c.l.b16 %v489
    %v2261 = vunpack.c.l.b16 %v490
    %v2262 = vunpack.c.l.b16 %v491
    %v2263 = vunpack.c.l.b16 %v492
    %v2264 = vunpack.c.l.b16 %v493
    %v2265 = vunpack.c.l.b16 %v494
    %v2266 = vunpack.c.l.b16 %v495
    %v2267 = vunpack.c.l.b16 %v496
    %v2268 = vunpack.c.l.b16 %v497
    %v2269 = vunpack.c.l.b16 %v498
    %v2270 = vunpack.c.l.b16 %v499
    %v2271 = vunpack.c.l.b16 %v500
    %v2272 = vunpack.c.l.b16 %v501
    %v2273 = vunpack.c.l.b16 %v502
    %v2274 = vunpack.c.l.b16 %v503
    %v2275 = vunpack.c.l.b16 %v504
    %v2276 = vunpack.c.l.b16 %v505
    %v2277 = vunpack.c.l.b16 %v506
    %v2278 = vunpack.c.l.b16 %v507
    %v2279 = vunpack.c.l.b16 %v508
    %v2280 = vunpack.c.l.b16 %v509
    %v2281 = vunpack.c.l.b16 %v510
    %v2282 = vunpack.c.l.b16 %v511
    %v2283 = vunpack.c.l.b16 %v512
    %v2284 = vunpack.c.l.b16 %v513
    %v2285 = vunpack.c.l.b16 %v514
    %v2286 = vunpack.c.l.b16 %v515
    %v2287 = vunpack.c.l.b16 %v516
    %v2288 = vunpack.c.l.b16 %v517
    %v2289 = vunpack.c.l.b16 %v518
    %v2290 = vunpack.c.l.b16 %v519
    %v2291 = vunpack.c.l.b16 %v520
    %v2292 = vunpack.c.l.b16 %v521
    %v2293 = vunpack.c.l.b16 %v522
    %v2294 = vunpack.c.l.b16 %v523
    %v2295 = vunpack.c.l.b16 %v524
    %v2296 = vunpack.c.l.b16 %v525
    %v2297 = vunpack.c.l.b16 %v526
    %v2298 = vunpack.c.l.b16 %v527
    %v2299 = vunpack.c.l.b16 %v528
    %v2300 = vunpack.c.l.b16 %v529
    %v2301 = vunpack.c.l.b16 %v530
    %v2302 = vunpack.c.l.b16 %v531
    %v2303 = vunpack.c.l.b16 %v532
    %v2304 = vunpack.c.l.b16 %v533
    %v2305 = vunpack.c.l.b16 %v534
    %v2306 = vunpack.c.l.b16 %v535
    %v2307 = vunpack.c.l.b16 %v536
    %v2308 = vunpack.c.l.b16 %v537
    %v2309 = vunpack.c.l.b16 %v538
    %v2310 = vunpack.c.l.b16 %v539
    %v2311 = vunpack.c.l.b16 %v540
    %v2312 = vunpack.c.l.b16 %v541
    %v2313 = vunpack.c.l.b16 %v542
    %v2314 = vunpack.c.l.b16 %v543
    %v2315 = vunpack.c.l.b16 %v544
    %v2316 = vunpack.c.l.b16 %v545
    %v2317 = vunpack.c.l.b16 %v546
    %v2318 = vunpack.c.l.b16 %v547
    %v2319 = vunpack.c.l.b16 %v548
    %v2320 = vunpack.c.l.b16 %v549
    %v2321 = vunpack.c.l.b16 %v550
    %v2322 = vunpack.c.l.b16 %v551
    %v2323 = vunpack.c.l.b16 %v552
    %v2324 = vunpack.c.l.b16 %v553
    %v2325 = vunpack.c.l.b16 %v554
    %v2326 = vunpack.c.l.b16 %v555
    %v2327 = vunpack.c.l.b16 %v556
    %v2328 = vunpack.c.l.b16 %v557
    %v2329 = vunpack.c.l.b16 %v558
    %v2330 = vunpack.c.l.b16 %v559
    %v2331 = vunpack.c.l.b16 %v560
    %v2332 = vunpack.c.l.b16 %v561
    %v2333 = vunpack.c.l.b16 %v562
    %v2334 = vunpack.c.l.b16 %v563
    %v2335 = vunpack.c.l.b16 %v564
    %v2336 = vunpack.c.l.b16 %v565
    %v2337 = vunpack.c.l.b16 %v566
    %v2338 = vunpack.c.l.b16 %v567
    %v2339 = vunpack.c.l.b16 %v568
    %v2340 = vunpack.c.l.b16 %v569
    %v2341 = vunpack.c.l.b16 %v570
    %v2342 = vunpack.c.l.b16 %v571
    %v2343 = vunpack.c.l.b16 %v572
    %v2344 = vunpack.c.l.b16 %v573
    %v2345 = vunpack.c.l.b16 %v574
    %v2346 = vunpack.c.l.b16 %v575
    %v2347 = vunpack.c.l.b16 %v576
    %v2348 = vunpack.c.l.b16 %v577
    %v2349 = vunpack.c.l.b16 %v578
    %v2350 = vunpack.c.l.b16 %v579
    %v2351 = vunpack.c.l.b16 %v580
    %v2352 = vunpack.c.l.b16 %v581
    %v2353 = vunpack.c.l.b16 %v582
    %v2354 = vunpack.c.l.b16 %v583
    %v2355 = vunpack.c.l.b16 %v584
    %v2356 = vunpack.c.l.b16 %v585
    %v2357 = vunpack.c.l.b16 %v586
    %v2358 = vunpack.c.l.b16 %v587
    %v2359 = vunpack.c.l.b16 %v588
    %v2360 = vunpack.c.l.b16 %v589
    %v2361 = vunpack.c.l.b16 %v590
    %v2362 = vunpack.c.l.b16 %v591
    %v2363 = vunpack.c.l.b16 %v592
    %v2364 = vunpack.c.l.b16 %v593
    %v2365 = vunpack.c.l.b16 %v594
    %v2366 = vunpack.c.l.b16 %v595
    %v2367 = vunpack.c.l.b16 %v596
    %v2368 = vunpack.c.l.b16 %v597
    %v2369 = vunpack.c.l.b16 %v598
    %v2370 = vunpack.c.l.b16 %v599
    %v2371 = vunpack.c.l.b16 %v600
    %v2372 = vunpack.c.l.b16 %v601
    %v2373 = vunpack.c.l.b16 %v602
    %v2374 = vunpack.c.l.b16 %v603
    %v2375 = vunpack.c.l.b16 %v604
    %v2376 = vunpack.c.l.b16 %v605
    %v2377 = vunpack.c.l.b16 %v606
    %v2378 = vunpack.c.l.b16 %v607
    %v2379 = vunpack.c.l.b16 %v608
    %v2380 = vunpack.c.l.b16 %v609
    %v2381 = vunpack.c.l.b16 %v610
    %v2382 = vunpack.c.l.b16 %v611
    %v2383 = vunpack.c.l.b16 %v612
    %v2384 = vunpack.c.l.b16 %v613
    %v2385 = vunpack.c.l.b16 %v614
    %v2386 = vunpack.c.l.b16 %v615
    %v2387 = vunpack.c.l.b16 %v616
    %v2388 = vunpack.c.l.b16 %v617
    %v2389 = vunpack.c.l.b16 %v618
    %v2390 = vunpack.c.l.b16 %v619
    %v2391 = vunpack.c.l.b16 %v620
    %v2392 = vunpack.c.l.b16 %v621
    %v2393 = vunpack.c.l.b16 %v622
    %v2394 = vunpack.c.l.b16 %v623
    %v2395 = vunpack.c.l.b16 %v624
    %v2396 = vunpack.c.l.b16 %v625
    %v2397 = vunpack.c.l.b16 %v626
    %v2398 = vunpack.c.l.b16 %v627
    %v2399 = vunpack.c.l.b16 %v628
    %v2400 = vunpack.c.l.b16 %v629
    %v2401 = vunpack.c.l.b16 %v630
    %v2402 = vunpack.c.l.b16 %v631
    %v2403 = vunpack.c.l.b16 %v632
    %v2404 = vunpack.c.l.b16 %v633
    %v2405 = vunpack.c.l.b16 %v634
    %v2406 = vunpack.c.l.b16 %v635
    %v2407 = vunpack.c.l.b16 %v636
    %v2408 = vunpack.c.l.b16 %v637
    %v2409 = vunpack.c.l.b16 %v638
    %v2410 = vunpack.c.l.b16 %v639
    %v2411 = vunpack.c.l.b16 %v640
    %v2412 = vunpack.c.l.b16 %v641
    %v2413 = vunpack.c.l.b16 %v642
    %v2414 = vunpack.c.l.b16 %v643
    %v2415 = vunpack.c.l.b16 %v644
    %v2416 = vunpack.c.l.b16 %v645
    %v2417 = vunpack.c.l.b16 %v646
    %v2418 = vunpack.c.l.b16 %v647
    %v2419 = vunpack.c.l.b16 %v648
    %v2420 = vunpack.c.l.b16 %v649
    %v2421 = vunpack.c.l.b16 %v650
    %v2422 = vunpack.c.l.b16 %v651
    %v2423 = vunpack.c.l.b16 %v652
    %v2424 = vunpack.c.l.b16 %v653
    %v2425 = vunpack.c.l.b16 %v654
    %v2426 = vunpack.c.l.b16 %v655
    %v2427 = vunpack.c.l.b16 %v656
    %v2428 = vunpack.c.l.b16 %v657
    %v2429 = vunpack.c.l.b16 %v658
    %v2430 = vunpack.c.l.b16 %v659
    %v2431 = vunpack.c.l.b16 %v660
    %v2432 = vunpack.c.l.b16 %v661
    %v2433 = vunpack.c.l.b16 %v662
    %v2434 = vunpack.c.l.b16 %v663
    %v2435 = vunpack.c.l.b16 %v664
    %v2436 = vunpack.c.l.b16 %v665
    %v2437 = vunpack.c.l.b16 %v666
    %v2438 = vunpack.c.l.b16 %v667
    %v2439 = vunpack.c.l.b16 %v668
    %v2440 = vunpack.c.l.b16 %v669
    %v2441 = vunpack.c.l.b16 %v670
    %v2442 = vunpack.c.l.b16 %v671
    %v2443 = vunpack.c.l.b16 %v672
    %v2444 = vunpack.c.l.b16 %v673
    %v2445 = vunpack.c.l.b16 %v674
    %v2446 = vunpack.c.l.b16 %v675
    %v2447 = vunpack.c.l.b16 %v676
    %v2448 = vunpack.c.l.b16 %v677
    %v2449 = vunpack.c.l.b16 %v678
    %v2450 = vunpack.c.l.b16 %v679
    %v2451 = vunpack.c.l.b16 %v680
    %v2452 = vunpack.c.l.b16 %v681
    %v2453 = vunpack.c.l.b16 %v682
    %v2454 = vunpack.c.l.b16 %v683
    %v2455 = vunpack.c.l.b16 %v684
    %v2456 = vunpack.c.l.b16 %v685
    %v2457 = vunpack.c.l.b16 %v686
    %v2458 = vunpack.c.l.b16 %v687
    %v2459 = vunpack.c.l.b16 %v688
    %v2460 = vunpack.c.l.b16 %v689
    %v2461 = vunpack.c.l.b16 %v690
    %v2462 = vunpack.c.l.b16 %v691
    %v2463 = vunpack.c.l.b16 %v692
    %v2464 = vunpack.c.l.b16 %v693
    %v2465 = vunpack.c.l.b16 %v694
    %v2466 = vunpack.c.l.b16 %v695
    %v2467 = vunpack.c.l.b16 %v696
    %v2468 = vunpack.c.l.b16 %v697
    %v2469 = vunpack.c.l.b16 %v698
    %v2470 = vunpack.c.l.b16 %v699
    %v2471 = vunpack.c.l.b16 %v700
    %v2472 = vunpack.c.l.b16 %v701
    %v2473 = vunpack.c.l.b16 %v702
    %v2474 = vunpack.c.l.b16 %v703
    %v2475 = vunpack.c.l.b16 %v704
    %v2476 = vunpack.c.l.b16 %v705
    %v2477 = vunpack.c.l.b16 %v706
    %v2478 = vunpack.c.l.b16 %v707
    %v2479 = vunpack.c.l.b16 %v708
    %v2480 = vunpack.c.l.b16 %v709
    %v2481 = vunpack.c.l.b16 %v710
    %v2482 = vunpack.c.l.b16 %v711
    %v2483 = vunpack.c.l.b16 %v712
    %v2484 = vunpack.c.l.b16 %v713
    %v2485 = vunpack.c.l.b16 %v714
    %v2486 = vunpack.c.l.b16 %v715
    %v2487 = vunpack.c.l.b16 %v716
    %v2488 = vunpack.c.l.b16 %v717
    %v2489 = vunpack.c.l.b16 %v718
    %v2490 = vunpack.c.l.b16 %v719
    %v2491 = vunpack.c.l.b16 %v720
    %v2492 = vunpack.c.l.b16 %v721
    %v2493 = vunpack.c.l.b16 %v722
    %v2494 = vunpack.c.l.b16 %v723
    %v2495 = vunpack.c.l.b16 %v724
    %v2496 = vunpack.c.l.b16 %v725
    %v2497 = vunpack.c.l.b16 %v726
    %v2498 = vunpack.c.l.b16 %v727
    %v2499 = vunpack.c.l.b16 %v728
    %v2500 = vunpack.c.l.b16 %v729
    %v2501 = vunpack.c.l.b16 %v730
    %v2502 = vunpack.c.l.b16 %v731
    %v2503 = vunpack.c.l.b16 %v732
    %v2504 = vunpack.c.l.b16 %v733
    %v2505 = vunpack.c.l.b16 %v734
    %v2506 = vunpack.c.l.b16 %v735
    %v2507 = vunpack.c.l.b16 %v736
    %v2508 = vunpack.c.l.b16 %v737
    %v2509 = vunpack.c.l.b16 %v738
    %v2510 = vunpack.c.l.b16 %v739
    %v2511 = vunpack.c.l.b16 %v740
    %v2512 = vunpack.c.l.b16 %v741
    %v2513 = vunpack.c.l.b16 %v742
    %v2514 = vunpack.c.l.b16 %v743
    %v2515 = vunpack.c.l.b16 %v744
    %v2516 = vunpack.c.l.b16 %v745
    %v2517 = vunpack.c.l.b16 %v746
    %v2518 = vunpack.c.l.b16 %v747
    %v2519 = vunpack.c.l.b16 %v748
    %v2520 = vunpack.c.l.b16 %v749
    %v2521 = vunpack.c.l.b16 %v750
    %v2522 = vunpack.c.l.b16 %v751
    %v2523 = vunpack.c.l.b16 %v752
    %v2524 = vunpack.c.l.b16 %v753
    %v2525 = vunpack.c.l.b16 %v754
    %v2526 = vunpack.c.l.b16 %v755
    %v2527 = vunpack.c.l.b16 %v756
    %v2528 = vunpack.c.l.b16 %v757
    %v2529 = vunpack.c.l.b16 %v758
    %v2530 = vunpack.c.l.b16 %v759
    %v2531 = vunpack.c.l.b16 %v760
    %v2532 = vunpack.c.l.b16 %v761
    %v2533 = vunpack.c.l.b16 %v762
    %v2534 = vunpack.c.l.b16 %v763
    %v2535 = vunpack.c.l.b16 %v764
    %v2536 = vunpack.c.l.b16 %v765
    %v2537 = vunpack.c.l.b16 %v766
    %v2538 = vunpack.c.l.b16 %v767
    %v2539 = vunpack.c.l.b16 %v768
    %v2540 = vunpack.c.l.b16 %v769
    %v2541 = vunpack.c.l.b16 %v770
    %v2542 = vunpack.c.l.b16 %v771
    %v2543 = vunpack.c.l.b16 %v772
    %v2544 = vunpack.c.l.b16 %v773
    %v2545 = vunpack.c.l.b16 %v774
    %v2546 = vunpack.c.l.b16 %v775
    %v2547 = vunpack.c.l.b16 %v776
    %v2548 = vunpack.c.l.b16 %v777
    %v2549 = vunpack.c.l.b16 %v778
    %v2550 = vunpack.c.l.b16 %v779
    %v2551 = vunpack.c.l.b16 %v780
    %v2552 = vunpack.c.l.b16 %v781
    %v2553 = vunpack.c.l.b16 %v782
    %v2554 = vunpack.c.l.b16 %v783
    %v2555 = vunpack.c.l.b16 %v784
    %v2556 = vunpack.c.l.b16 %v785
    %v2557 = vunpack.c.l.b16 %v786
    %v2558 = vunpack.c.l.b16 %v787
    %v2559 = vunpack.c.l.b16 %v788
    %v2560 = vunpack.c.l.b16 %v789
    %v2561 = vunpack.c.l.b16 %v790
    %v2562 = vunpack.c.l.b16 %v791
    %v2563 = vunpack.c.l.b16 %v792
    %v2564 = vunpack.c.l.b16 %v793
    %v2565 = vunpack.c.l.b16 %v794
    %v2566 = vunpack.c.l.b16 %v795
    %v2567 = vunpack.c.l.b16 %v796
    %v2568 = vunpack.c.l.b16 %v797
    %v2569 = vunpack.c.l.b16 %v798
    %v2570 = vunpack.c.l.b16 %v799
    %v2571 = vunpack.c.l.b16 %v800
    %v2572 = vunpack.c.l.b16 %v801
    %v2573 = vunpack.c.l.b16 %v802
    %v2574 = vunpack.c.l.b16 %v803
    %v2575 = vunpack.c.l.b16 %v804
    %v2576 = vunpack.c.l.b16 %v805
    %v2577 = vunpack.c.l.b16 %v806
    %v2578 = vunpack.c.l.b16 %v807
    %v2579 = vunpack.c.l.b16 %v808
    %v2580 = vunpack.c.l.b16 %v809
    %v2581 = vunpack.c.l.b16 %v810
    %v2582 = vunpack.c.l.b16 %v811
    %v2583 = vunpack.c.l.b16 %v812
    %v2584 = vunpack.c.l.b16 %v813
    %v2585 = vunpack.c.l.b16 %v814
    %v2586 = vunpack.c.l.b16 %v815
    %v2587 = vunpack.c.l.b16 %v816
    %v2588 = vunpack.c.l.b16 %v817
    %v2589 = vunpack.c.l.b16 %v818
    %v2590 = vunpack.c.l.b16 %v819
    %v2591 = vunpack.c.l.b16 %v820
    %v2592 = vunpack.c.l.b16 %v821
    %v2593 = vunpack.c.l.b16 %v822
    %v2594 = vunpack.c.l.b16 %v823
    %v2595 = vunpack.c.l.b16 %v824
    %v2596 = vunpack.c.l.b16 %v825
    %v2597 = vunpack.c.l.b16 %v826
    %v2598 = vunpack.c.l.b16 %v827
    %v2599 = vunpack.c.l.b16 %v828
    %v2600 = vunpack.c.l.b16 %v829
    %v2601 = vunpack.c.l.b16 %v830
    %v2602 = vunpack.c.l.b16 %v831
    %v2603 = vunpack.c.l.b16 %v832
    %v2604 = vunpack.c.l.b16 %v833
    %v2605 = vunpack.c.l.b16 %v834
    %v2606 = vunpack.c.l.b16 %v835
    %v2607 = vunpack.c.l.b16 %v836
    %v2608 = vunpack.c.l.b16 %v837
    %v2609 = vunpack.c.l.b16 %v838
    %v2610 = vunpack.c.l.b16 %v839
    %v2611 = vunpack.c.l.b16 %v840
    %v2612 = vunpack.c.l.b16 %v841
    %v2613 = vunpack.c.l.b16 %v842
    %v2614 = vunpack.c.l.b16 %v843
    %v2615 = vunpack.c.l.b16 %v844
    %v2616 = vunpack.c.l.b16 %v845
    %v2617 = vunpack.c.l.b16 %v846
    %v2618 = vunpack.c.l.b16 %v847
    %v2619 = vunpack.c.l.b16 %v848
    %v2620 = vunpack.c.l.b16 %v849
    %v2621 = vunpack.c.l.b16 %v850
    %v2622 = vunpack.c.l.b16 %v851
    %v2623 = vunpack.c.l.b16 %v852
    %v2624 = vunpack.c.l.b16 %v853
    %v2625 = vunpack.c.l.b16 %v854
    %v2626 = vunpack.c.l.b16 %v855
    %v2627 = vunpack.c.l.b16 %v856
    %v2628 = vunpack.c.l.b16 %v857
    %v2629 = vunpack.c.l.b16 %v858
    %v2630 = vunpack.c.l.b16 %v859
    %v2631 = vunpack.c.l.b16 %v860
    %v2632 = vunpack.c.l.b16 %v861
    %v2633 = vunpack.c.l.b16 %v862
    %v2634 = vunpack.c.l.b16 %v863
    %v2635 = vunpack.c.l.b16 %v864
    %v2636 = vunpack.c.l.b16 %v865
    %v2637 = vunpack.c.l.b16 %v866
    %v2638 = vunpack.c.l.b16 %v867
    %v2639 = vunpack.c.l.b16 %v868
    %v2640 = vunpack.c.l.b16 %v869
    %v2641 = vunpack.c.l.b16 %v870
    %v2642 = vunpack.c.l.b16 %v871
    %v2643 = vunpack.c.l.b16 %v872
    %v2644 = vunpack.c.l.b16 %v873
    %v2645 = vunpack.c.l.b16 %v874
    %v2646 = vunpack.c.l.b16 %v875
    %v2647 = vunpack.c.l.b16 %v876
    %v2648 = vunpack.c.l.b16 %v877
    %v2649 = vunpack.c.l.b16 %v878
    %v2650 = vunpack.c.l.b16 %v879
    %v2651 = vunpack.c.l.b16 %v880
    %v2652 = vunpack.c.l.b16 %v881
    %v2653 = vunpack.c.l.b16 %v882
    %v2654 = vunpack.c.l.b16 %v883
    %v2655 = vunpack.c.l.b16 %v884
    %v2656 = vunpack.c.l.b16 %v885
    %v2657 = vunpack.c.l.b16 %v886
    %v2658 = vunpack.c.l.b16 %v887
    %v2659 = vunpack.c.l.b16 %v888
    %v2660 = vunpack.c.l.b16 %v889
    %v2661 = vunpack.c.l.b16 %v890
    %v2662 = vunpack.c.l.b16 %v891
    %v2663 = vunpack.c.l.b16 %v892
    %v2664 = vunpack.c.l.b16 %v893
    %v2665 = vunpack.c.l.b16 %v894
    %v2666 = vunpack.c.l.b16 %v895
    %v2667 = vunpack.c.l.b16 %v896
    %v2668 = vunpack.c.l.b16 %v897
    %v2669 = vunpack.c.l.b16 %v898
    %v2670 = vunpack.c.l.b16 %v899
    %v2671 = vunpack.c.l.b16 %v900
    %v2672 = vunpack.c.l.b16 %v901
    %v2673 = vunpack.c.l.b16 %v902
    %v2674 = vunpack.c.l.b16 %v903
    %v2675 = vunpack.c.l.b16 %v904
    %v2676 = vunpack.c.l.b16 %v905
    %v2677 = vunpack.c.l.b16 %v906
    %v2678 = vunpack.c.l.b16 %v907
    %v2679 = vunpack.c.l.b16 %v908
    %v2680 = vunpack.c.l.b16 %v909
    %v2681 = vunpack.c.l.b16 %v910
    %v2682 = vunpack.c.l.b16 %v911
    %v2683 = vunpack.c.l.b16 %v912
    %v2684 = vunpack.c.l.b16 %v913
    %v2685 = vunpack.c.l.b16 %v914
    %v2686 = vunpack.c.l.b16 %v915
    %v2687 = vunpack.c.l.b16 %v916
    %v2688 = vunpack.c.l.b16 %v917
    %v2689 = vunpack.c.l.b16 %v918
    %v2690 = vunpack.c.l.b16 %v919
    %v2691 = vunpack.c.l.b16 %v920
    %v2692 = vunpack.c.l.b16 %v921
    %v2693 = vunpack.c.l.b16 %v922
    %v2694 = vunpack.c.l.b16 %v923
    %v2695 = vunpack.c.l.b16 %v924
    %v2696 = vunpack.c.l.b16 %v925
    %v2697 = vunpack.c.l.b16 %v926
    %v2698 = vunpack.c.l.b16 %v927
    %v2699 = vunpack.c.l.b16 %v928
    %v2700 = vunpack.c.l.b16 %v929
    %v2701 = vunpack.c.l.b16 %v930
    %v2702 = vunpack.c.l.b16 %v931
    %v2703 = vunpack.c.l.b16 %v932
    %v2704 = vunpack.c.l.b16 %v933
    %v2705 = vunpack.c.l.b16 %v934
    %v2706 = vunpack.c.l.b16 %v935
    %v2707 = vunpack.c.l.b16 %v936
    %v2708 = vunpack.c.l.b16 %v937
    %v2709 = vunpack.c.l.b16 %v938
    %v2710 = vunpack.c.l.b16 %v939
    %v2711 = vunpack.c.l.b16 %v940
    %v2712 = vunpack.c.l.b16 %v941
    %v2713 = vunpack.c.l.b16 %v942
    %v2714 = vunpack.c.l.b16 %v943
    %v2715 = vunpack.c.l.b16 %v944
    %v2716 = vunpack.c.l.b16 %v945
    %v2717 = vunpack.c.l.b16 %v946
    %v2718 = vunpack.c.l.b16 %v947
    %v2719 = vunpack.c.l.b16 %v948
    %v2720 = vunpack.c.l.b16 %v949
    %v2721 = vunpack.c.l.b16 %v950
    %v2722 = vunpack.c.l.b16 %v951
    %v2723 = vunpack.c.l.b16 %v952
    %v2724 = vunpack.c.l.b16 %v953
    %v2725 = vunpack.c.l.b16 %v954
    %v2726 = vunpack.c.l.b16 %v955
    %v2727 = vunpack.c.l.b16 %v956
    %v2728 = vunpack.c.l.b16 %v957
    %v2729 = vunpack.c.l.b16 %v958
    %v2730 = vunpack.c.l.b16 %v959
    %v2731 = vunpack.c.l.b16 %v960
    %v2732 = vunpack.c.l.b16 %v961
    %v2733 = vunpack.c.l.b16 %v962
    %v2734 = vunpack.c.l.b16 %v963
    %v2735 = vunpack.c.l.b16 %v964
    %v2736 = vunpack.c.l.b16 %v965
    %v2737 = vunpack.c.l.b16 %v966
    %v2738 = vunpack.c.l.b16 %v967
    %v2739 = vunpack.c.l.b16 %v968
    %v2740 = vunpack.c.l.b16 %v969
    %v2741 = vunpack.c.l.b16 %v970
    %v2742 = vunpack.c.l.b16 %v971
    %v2743 = vunpack.c.l.b16 %v972
    %v2744 = vunpack.c.l.b16 %v973
    %v2745 = vunpack.c.l.b16 %v974
    %v2746 = vunpack.c.l.b16 %v975
    %v2747 = vunpack.c.l.b16 %v976
    %v2748 = vunpack.c.l.b16 %v977
    %v2749 = vunpack.c.l.b16 %v978
    %v2750 = vunpack.c.l.b16 %v979
    %v2751 = vunpack.c.l.b16 %v980
    %v2752 = vunpack.c.l.b16 %v981
    %v2753 = vunpack.c.l.b16 %v982
    %v2754 = vunpack.c.l.b16 %v983
    %v2755 = vunpack.c.l.b16 %v984
    %v2756 = vunpack.c.l.b16 %v985
    %v2757 = vunpack.c.l.b16 %v986
    %v2758 = vunpack.c.l.b16 %v987
    %v2759 = vunpack.c.l.b16 %v988
    %v2760 = vunpack.c.l.b16 %v989
    %v2761 = vunpack.c.l.b16 %v990
    %v2762 = vunpack.c.l.b16 %v991
    %v2763 = vunpack.c.l.b16 %v992
    %v2764 = vunpack.c.l.b16 %v993
    %v2765 = vunpack.c.l.b16 %v994
    %v2766 = vunpack.c.l.b16 %v995
    %v2767 = vunpack.c.l.b16 %v996
    %v2768 = vunpack.c.l.b16 %v997
    %v2769 = vunpack.c.l.b16 %v998
    %v2770 = vunpack.c.l.b16 %v999
    %v2771 = vunpack.c.l.b16 %v1000
    %v2772 = vunpack.c.l.b16 %v1001
    %v2773 = vunpack.c.l.b16 %v1002
    %v2774 = vunpack.c.l.b16 %v1003
    %v2775 = vunpack.c.l.b16 %v1004
    %v2776 = vunpack.c.l.b16 %v1005
    %v2777 = vunpack.c.l.b16 %v1006
    %v2778 = vunpack.c.l.b16 %v1007
    %v2779 = vunpack.c.l.b16 %v1008
    %v2780 = vunpack.c.l.b16 %v1009
    %v2781 = vunpack.c.l.b16 %v1010
    %v2782 = vunpack.c.l.b16 %v1011
    %v2783 = vunpack.c.l.b16 %v1012
    %v2784 = vunpack.c.l.b16 %v1013
    %v2785 = vunpack.c.l.b16 %v1014
    %v2786 = vunpack.c.l.b16 %v1015
    %v2787 = vunpack.c.l.b16 %v1016
    %v2788 = vunpack.c.l.b16 %v1017
    %v2789 = vunpack.c.l.b16 %v1018
    %v2790 = vunpack.c.l.b16 %v1019
    %v2791 = vunpack.c.l.b16 %v1020
    %v2792 = vunpack.c.l.b16 %v1021
    %v2793 = vunpack.c.l.b16 %v1022
    %v2794 = vunpack.c.l.b16 %v1023
    %v2795 = vunpack.c.l.b16 %v1024
    %v2796 = vunpack.c.l.b16 %v1025
    %v2797 = vunpack.c.l.b16 %v1026
    %v2798 = vunpack.c.l.b16 %v1027
    %v2799 = vunpack.c.l.b16 %v1028
    %v2800 = vunpack.c.l.b16 %v1029
    %v2801 = vunpack.c.l.b16 %v1030
    %v2802 = vunpack.c.l.b16 %v1031
    %v2803 = vunpack.c.l.b16 %v1032
    %v2804 = vunpack.c.l.b16 %v1033
    %v2805 = vunpack.c.l.b16 %v1034
    %v2806 = vunpack.c.l.b16 %v1035
    %v2807 = vunpack.c.l.b16 %v1036
    %v2808 = vunpack.c.l.b16 %v1037
    %v2809 = vunpack.c.l.b16 %v1038
    %v2810 = vunpack.c.l.b16 %v1039
    %v2811 = vunpack.c.l.b16 %v1040
    %v2812 = vunpack.c.l.b16 %v1041
    %v2813 = vunpack.c.l.b16 %v1042
    %v2814 = vunpack.c.l.b16 %v1043
    %v2815 = vunpack.c.l.b16 %v1044
    %v2816 = vunpack.c.l.b16 %v1045
    %v2817 = vunpack.c.l.b16 %v1046
    %v2818 = vunpack.c.l.b16 %v1047
    %v2819 = vunpack.c.l.b16 %v1048
    %v2820 = vunpack.c.l.b16 %v1049
    %v2821 = vunpack.c.l.b16 %v1050
    %v2822 = vunpack.c.l.b16 %v1051
    %v2823 = vunpack.c.l.b16 %v1052
    %v2824 = vunpack.c.l.b16 %v1053
    %v2825 = vunpack.c.l.b16 %v1054
    %v2826 = vunpack.c.l.b16 %v1055
    %v2827 = vunpack.c.l.b16 %v1056
    %v2828 = vunpack.c.l.b16 %v1057
    %v2829 = vunpack.c.l.b16 %v1058
    %v2830 = vunpack.c.l.b16 %v1059
    %v2831 = vunpack.c.l.b16 %v1060
    %v2832 = vunpack.c.l.b16 %v1061
    %v2833 = vunpack.c.l.b16 %v1062
    %v2834 = vunpack.c.l.b16 %v1063
    %v2835 = vunpack.c.l.b16 %v1064
    %v2836 = vunpack.c.l.b16 %v1065
    %v2837 = vunpack.c.l.b16 %v1066
    %v2838 = vunpack.c.l.b16 %v1067
    %v2839 = vunpack.c.l.b16 %v1068
    %v2840 = vunpack.c.l.b16 %v1069
    %v2841 = vunpack.c.l.b16 %v1070
    %v2842 = vunpack.c.l.b16 %v1071
    %v2843 = vunpack.c.l.b16 %v1072
    %v2844 = vunpack.c.l.b16 %v1073
    %v2845 = vunpack.c.l.b16 %v1074
    %v2846 = vunpack.c.l.b16 %v1075
    %v2847 = vunpack.c.l.b16 %v1076
    %v2848 = vunpack.c.l.b16 %v1077
    %v2849 = vunpack.c.l.b16 %v1078
    %v2850 = vunpack.c.l.b16 %v1079
    %v2851 = vunpack.c.l.b16 %v1080
    %v2852 = vunpack.c.l.b16 %v1081
    %v2853 = vunpack.c.l.b16 %v1082
    %v2854 = vunpack.c.l.b16 %v1083
    %v2855 = vunpack.c.l.b16 %v1084
    %v2856 = vunpack.c.l.b16 %v1085
    %v2857 = vunpack.c.l.b16 %v1086
    %v2858 = vunpack.c.l.b16 %v1087
    %v2859 = vunpack.c.l.b16 %v1088
    %v2860 = vunpack.c.l.b16 %v1089
    %v2861 = vunpack.c.l.b16 %v1090
    %v2862 = vunpack.c.l.b16 %v1091
    %v2863 = vunpack.c.l.b16 %v1092
    %v2864 = vunpack.c.l.b16 %v1093
    %v2865 = vunpack.c.l.b16 %v1094
    %v2866 = vunpack.c.l.b16 %v1095
    %v2867 = vunpack.c.l.b16 %v1096
    %v2868 = vunpack.c.l.b16 %v1097
    %v2869 = vunpack.c.l.b16 %v1098
    %v2870 = vunpack.c.l.b16 %v1099
    %v2871 = vunpack.c.l.b16 %v1100
    %v2872 = vunpack.c.l.b16 %v1101
    %v2873 = vunpack.c.l.b16 %v1102
    %v2874 = vunpack.c.l.b16 %v1103
    %v2875 = vunpack.c.l.b16 %v1104
    %v2876 = vunpack.c.l.b16 %v1105
    %v2877 = vunpack.c.l.b16 %v1106
    %v2878 = vunpack.c.l.b16 %v1107
    %v2879 = vunpack.c.l.b16 %v1108
    %v2880 = vunpack.c.l.b16 %v1109
    %v2881 = vunpack.c.l.b16 %v1110
    %v2882 = vunpack.c.l.b16 %v1111
    %v2883 = vunpack.c.l.b16 %v1112
    %v2884 = vunpack.c.l.b16 %v1113
    %v2885 = vunpack.c.l.b16 %v1114
    %v2886 = vunpack.c.l.b16 %v1115
    %v2887 = vunpack.c.l.b16 %v1116
    %v2888 = vunpack.c.l.b16 %v1117
    %v2889 = vunpack.c.l.b16 %v1118
    %v2890 = vunpack.c.l.b16 %v1119
    %v2891 = vunpack.c.l.b16 %v1120
    %v2892 = vunpack.c.l.b16 %v1121
    %v2893 = vunpack.c.l.b16 %v1122
    %v2894 = vunpack.c.l.b16 %v1123
    %v2895 = vunpack.c.l.b16 %v1124
    %v2896 = vunpack.c.l.b16 %v1125
    %v2897 = vunpack.c.l.b16 %v1126
    %v2898 = vunpack.c.l.b16 %v1127
    %v2899 = vunpack.c.l.b16 %v1128
    %v2900 = vunpack.c.l.b16 %v1129
    %v2901 = vunpack.c.l.b16 %v1130
    %v2902 = vunpack.c.l.b16 %v1131
    %v2903 = vunpack.c.l.b16 %v1132
    %v2904 = vunpack.c.l.b16 %v1133
    %v2905 = vunpack.c.l.b16 %v1134
    %v2906 = vunpack.c.l.b16 %v1135
    %v2907 = vunpack.c.l.b16 %v1136
    %v2908 = vunpack.c.l.b16 %v1137
    %v2909 = vunpack.c.l.b16 %v1138
    %v2910 = vunpack.c.l.b16 %v1139
    %v2911 = vunpack.c.l.b16 %v1140
    %v2912 = vunpack.c.l.b16 %v1141
    %v2913 = vunpack.c.l.b16 %v1142
    %v2914 = vunpack.c.l.b16 %v1143
    %v2915 = vunpack.c.l.b16 %v1144
    %v2916 = vunpack.c.l.b16 %v1145
    %v2917 = vunpack.c.l.b16 %v1146
    %v2918 = vunpack.c.l.b16 %v1147
    %v2919 = vunpack.c.l.b16 %v1148
    %v2920 = vunpack.c.l.b16 %v1149
    %v2921 = vunpack.c.l.b16 %v1150
    %v2922 = vunpack.c.l.b16 %v1151
    %v2923 = vunpack.c.l.b16 %v1152
    %v2924 = vunpack.c.l.b16 %v1153
    %v2925 = vunpack.c.l.b16 %v1154
    %v2926 = vunpack.c.l.b16 %v1155
    %v2927 = vunpack.c.l.b16 %v1156
    %v2928 = vunpack.c.l.b16 %v1157
    %v2929 = vunpack.c.l.b16 %v1158
    %v2930 = vunpack.c.l.b16 %v1159
    %v2931 = vunpack.c.l.b16 %v1160
    %v2932 = vunpack.c.l.b16 %v1161
    %v2933 = vunpack.c.l.b16 %v1162
    %v2934 = vunpack.c.l.b16 %v1163
    %v2935 = vunpack.c.l.b16 %v1164
    %v2936 = vunpack.c.l.b16 %v1165
    %v2937 = vunpack.c.l.b16 %v1166
    %v2938 = vunpack.c.l.b16 %v1167
    %v2939 = vunpack.c.l.b16 %v1168
    %v2940 = vunpack.c.l.b16 %v1169
    %v2941 = vunpack.c.l.b16 %v1170
    %v2942 = vunpack.c.l.b16 %v1171
    %v2943 = vunpack.c.l.b16 %v1172
    %v2944 = vunpack.c.l.b16 %v1173
    %v2945 = vunpack.c.l.b16 %v1174
    %v2946 = vunpack.c.l.b16 %v1175
    %v2947 = vunpack.c.l.b16 %v1176
    %v2948 = vunpack.c.l.b16 %v1177
    %v2949 = vunpack.c.l.b16 %v1178
    %v2950 = vunpack.c.l.b16 %v1179
    %v2951 = vunpack.c.l.b16 %v1180
    %v2952 = vunpack.c.l.b16 %v1181
    %v2953 = vunpack.c.l.b16 %v1182
    %v2954 = vunpack.c.l.b16 %v1183
    %v2955 = vunpack.c.l.b16 %v1184
    %v2956 = vunpack.c.l.b16 %v1185
    %v2957 = vunpack.c.l.b16 %v1186
    %v2958 = vunpack.c.l.b16 %v1187
    %v2959 = vunpack.c.l.b16 %v1188
    %v2960 = vunpack.c.l.b16 %v1189
    %v2961 = vunpack.c.l.b16 %v1190
    %v2962 = vunpack.c.l.b16 %v1191
    %v2963 = vunpack.c.l.b16 %v1192
    %v2964 = vunpack.c.l.b16 %v1193
    %v2965 = vunpack.c.l.b16 %v1194
    %v2966 = vunpack.c.l.b16 %v1195
    %v2967 = vunpack.c.l.b16 %v1196
    %v2968 = vunpack.c.l.b16 %v1197
    %v2969 = vunpack.c.l.b16 %v1198
    %v2970 = vunpack.c.l.b16 %v1199
    %v2971 = vunpack.c.l.b16 %v1200
    %v2972 = vunpack.c.l.b16 %v1201
    %v2973 = vunpack.c.l.b16 %v1202
    %v2974 = vunpack.c.l.b16 %v1203
    %v2975 = vunpack.c.l.b16 %v1204
    %v2976 = vunpack.c.l.b16 %v1205
    %v2977 = vunpack.c.l.b16 %v1206
    %v2978 = vunpack.c.l.b16 %v1207
    %v2979 = vunpack.c.l.b16 %v1208
    %v2980 = vunpack.c.l.b16 %v1209
    %v2981 = vunpack.c.l.b16 %v1210
    %v2982 = vunpack.c.l.b16 %v1211
    %v2983 = vunpack.c.l.b16 %v1212
    %v2984 = vunpack.c.l.b16 %v1213
    %v2985 = vunpack.c.l.b16 %v1214
    %v2986 = vunpack.c.l.b16 %v1215
    %v2987 = vunpack.c.l.b16 %v1216
    %v2988 = vunpack.c.l.b16 %v1217
    %v2989 = vunpack.c.l.b16 %v1218
    %v2990 = vunpack.c.l.b16 %v1219
    %v2991 = vunpack.c.l.b16 %v1220
    %v2992 = vunpack.c.l.b16 %v1221
    %v2993 = vunpack.c.l.b16 %v1222
    %v2994 = vunpack.c.l.b16 %v1223
    %v2995 = vunpack.c.l.b16 %v1224
    %v2996 = vunpack.c.l.b16 %v1225
    %v2997 = vunpack.c.l.b16 %v1226
    %v2998 = vunpack.c.l.b16 %v1227
    %v2999 = vunpack.c.l.b16 %v1228
    %v3000 = vunpack.c.l.b16 %v1229
    %v3001 = vunpack.c.l.b16 %v1230
    %v3002 = vunpack.c.l.b16 %v1231
    %v3003 = vunpack.c.l.b16 %v1232
    %v3004 = vunpack.c.l.b16 %v1233
    %v3005 = vunpack.c.l.b16 %v1234
    %v3006 = vunpack.c.l.b16 %v1235
    %v3007 = vunpack.c.l.b16 %v1236
    %v3008 = vunpack.c.l.b16 %v1237
    %v3009 = vunpack.c.l.b16 %v1238
    %v3010 = vunpack.c.l.b16 %v1239
    %v3011 = vunpack.c.l.b16 %v1240
    %v3012 = vunpack.c.l.b16 %v1241
    %v3013 = vunpack.c.l.b16 %v1242
    %v3014 = vunpack.c.l.b16 %v1243
    %v3015 = vunpack.c.l.b16 %v1244
    %v3016 = vunpack.c.l.b16 %v1245
    %v3017 = vunpack.c.l.b16 %v1246
    %v3018 = vunpack.c.l.b16 %v1247
    %v3019 = vunpack.c.l.b16 %v1248
    %v3020 = vunpack.c.l.b16 %v1249
    %v3021 = vunpack.c.l.b16 %v1250
    %v3022 = vunpack.c.l.b16 %v1251
    %v3023 = vunpack.c.l.b16 %v1252
    %v3024 = vunpack.c.l.b16 %v1253
    %v3025 = vunpack.c.l.b16 %v1254
    %v3026 = vunpack.c.l.b16 %v1255
    %v3027 = vunpack.c.l.b16 %v1256
    %v3028 = vunpack.c.l.b16 %v1257
    %v3029 = vunpack.c.l.b16 %v1258
    %v3030 = vunpack.c.l.b16 %v1259
    %v3031 = vunpack.c.l.b16 %v1260
    %v3032 = vunpack.c.l.b16 %v1261
    %v3033 = vunpack.c.l.b16 %v1262
    %v3034 = vunpack.c.l.b16 %v1263
    %v3035 = vunpack.c.l.b16 %v1264
    %v3036 = vunpack.c.l.b16 %v1265
    %v3037 = vunpack.c.l.b16 %v1266
    %v3038 = vunpack.c.l.b16 %v1267
    %v3039 = vunpack.c.l.b16 %v1268
    %v3040 = vunpack.c.l.b16 %v1269
    %v3041 = vunpack.c.l.b16 %v1270
    %v3042 = vunpack.c.l.b16 %v1271
    %v3043 = vunpack.c.l.b16 %v1272
    %v3044 = vunpack.c.l.b16 %v1273
    %v3045 = vunpack.c.l.b16 %v1274
    %v3046 = vunpack.c.l.b16 %v1275
    %v3047 = vunpack.c.l.b16 %v1276
    %v3048 = vunpack.c.l.b16 %v1277
    %v3049 = vunpack.c.l.b16 %v1278
    %v3050 = vunpack.c.l.b16 %v1279
    %v3051 = vunpack.c.l.b16 %v1280
    %v3052 = vunpack.c.l.b16 %v1281
    %v3053 = vunpack.c.l.b16 %v1282
    %v3054 = vunpack.c.l.b16 %v1283
    %v3055 = vunpack.c.l.b16 %v1284
    %v3056 = vunpack.c.l.b16 %v1285
    %v3057 = vunpack.c.l.b16 %v1286
    %v3058 = vunpack.c.l.b16 %v1287
    %v3059 = vunpack.c.l.b16 %v1288
    %v3060 = vunpack.c.l.b16 %v1289
    %v3061 = vunpack.c.l.b16 %v1290
    %v3062 = vunpack.c.l.b16 %v1291
    %v3063 = vunpack.c.l.b16 %v1292
    %v3064 = vunpack.c.l.b16 %v1293
    %v3065 = vunpack.c.l.b16 %v1294
    %v3066 = vunpack.c.l.b16 %v1295
    %v3067 = vunpack.c.l.b16 %v1296
    %v3068 = vunpack.c.l.b16 %v1297
    %v3069 = vunpack.c.l.b16 %v1298
    %v3070 = vunpack.c.l.b16 %v1299
    %v3071 = vunpack.c.l.b16 %v1300
    %v3072 = vunpack.c.l.b16 %v1301
    %v3073 = vunpack.c.l.b16 %v1302
    %v3074 = vunpack.c.l.b16 %v1303
    %v3075 = vunpack.c.l.b16 %v1304
    %v3076 = vunpack.c.l.b16 %v1305
    %v3077 = vunpack.c.l.b16 %v1306
    %v3078 = vunpack.c.l.b16 %v1307
    %v3079 = vunpack.c.l.b16 %v1308
    %v3080 = vunpack.c.l.b16 %v1309
    %v3081 = vunpack.c.l.b16 %v1310
    %v3082 = vunpack.c.l.b16 %v1311
    %v3083 = vunpack.c.l.b16 %v1312
    %v3084 = vunpack.c.l.b16 %v1313
    %v3085 = vunpack.c.l.b16 %v1314
    %v3086 = vpack.c.b16 %v2205, %v2204
    %v3087 = vpack.c.b16 %v2207, %v2206
    %v3088 = vpack.c.b16 %v2209, %v2208
    %v3089 = vpack.c.b16 %v2211, %v2210
    %v3090 = vpack.c.b16 %v2213, %v2212
    %v3091 = vpack.c.b16 %v2215, %v2214
    %v3092 = vpack.c.b16 %v2217, %v2216
    %v3093 = vpack.c.b16 %v2219, %v2218
    %v3094 = vpack.c.b16 %v2221, %v2220
    %v3095 = vpack.c.b16 %v2223, %v2222
    %v3096 = vpack.c.b16 %v2225, %v2224
    %v3097 = vpack.c.b16 %v2227, %v2226
    %v3098 = vpack.c.b16 %v2229, %v2228
    %v3099 = vpack.c.b16 %v2231, %v2230
    %v3100 = vpack.c.b16 %v2233, %v2232
    %v3101 = vpack.c.b16 %v2235, %v2234
    %v3102 = vpack.c.b16 %v2237, %v2236
    %v3103 = vpack.c.b16 %v2239, %v2238
    %v3104 = vpack.c.b16 %v2241, %v2240
    %v3105 = vpack.c.b16 %v2243, %v2242
    %v3106 = vpack.c.b16 %v2245, %v2244
    %v3107 = vpack.c.b16 %v2247, %v2246
    %v3108 = vpack.c.b16 %v2249, %v2248
    %v3109 = vpack.c.b16 %v2251, %v2250
    %v3110 = vpack.c.b16 %v2253, %v2252
    %v3111 = vpack.c.b16 %v2255, %v2254
    %v3112 = vpack.c.b16 %v2257, %v2256
    %v3113 = vpack.c.b16 %v2259, %v2258
    %v3114 = vpack.c.b16 %v2261, %v2260
    %v3115 = vpack.c.b16 %v2263, %v2262
    %v3116 = vpack.c.b16 %v2265, %v2264
    %v3117 = vpack.c.b16 %v2267, %v2266
    %v3118 = vpack.c.b16 %v2269, %v2268
    %v3119 = vpack.c.b16 %v2271, %v2270
    %v3120 = vpack.c.b16 %v2273, %v2272
    %v3121 = vpack.c.b16 %v2275, %v2274
    %v3122 = vpack.c.b16 %v2277, %v2276
    %v3123 = vpack.c.b16 %v2279, %v2278
    %v3124 = vpack.c.b16 %v2281, %v2280
    %v3125 = vpack.c.b16 %v2283, %v2282
    %v3126 = vpack.c.b16 %v2285, %v2284
    %v3127 = vpack.c.b16 %v2287, %v2286
    %v3128 = vpack.c.b16 %v2289, %v2288
    %v3129 = vpack.c.b16 %v2291, %v2290
    %v3130 = vpack.c.b16 %v2293, %v2292
    %v3131 = vpack.c.b16 %v2295, %v2294
    %v3132 = vpack.c.b16 %v2297, %v2296
    %v3133 = vpack.c.b16 %v2299, %v2298
    %v3134 = vpack.c.b16 %v2301, %v2300
    %v3135 = vpack.c.b16 %v2303, %v2302
    %v3136 = vpack.c.b16 %v2305, %v2304
    %v3137 = vpack.c.b16 %v2307, %v2306
    %v3138 = vpack.c.b16 %v2309, %v2308
    %v3139 = vpack.c.b16 %v2311, %v2310
    %v3140 = vpack.c.b16 %v2313, %v2312
    %v3141 = vpack.c.b16 %v2315, %v2314
    %v3142 = vpack.c.b16 %v2317, %v2316
    %v3143 = vpack.c.b16 %v2319, %v2318
    %v3144 = vpack.c.b16 %v2321, %v2320
    %v3145 = vpack.c.b16 %v2323, %v2322
    %v3146 = vpack.c.b16 %v2325, %v2324
    %v3147 = vpack.c.b16 %v2327, %v2326
    %v3148 = vpack.c.b16 %v2329, %v2328
    %v3149 = vpack.c.b16 %v2331, %v2330
    %v3150 = vpack.c.b16 %v2333, %v2332
    %v3151 = vpack.c.b16 %v2335, %v2334
    %v3152 = vpack.c.b16 %v2337, %v2336
    %v3153 = vpack.c.b16 %v2339, %v2338
    %v3154 = vpack.c.b16 %v2341, %v2340
    %v3155 = vpack.c.b16 %v2343, %v2342
    %v3156 = vpack.c.b16 %v2345, %v2344
    %v3157 = vpack.c.b16 %v2347, %v2346
    %v3158 = vpack.c.b16 %v2349, %v2348
    %v3159 = vpack.c.b16 %v2351, %v2350
    %v3160 = vpack.c.b16 %v2353, %v2352
    %v3161 = vpack.c.b16 %v2355, %v2354
    %v3162 = vpack.c.b16 %v2357, %v2356
    %v3163 = vpack.c.b16 %v2359, %v2358
    %v3164 = vpack.c.b16 %v2361, %v2360
    %v3165 = vpack.c.b16 %v2363, %v2362
    %v3166 = vpack.c.b16 %v2365, %v2364
    %v3167 = vpack.c.b16 %v2367, %v2366
    %v3168 = vpack.c.b16 %v2369, %v2368
    %v3169 = vpack.c.b16 %v2371, %v2370
    %v3170 = vpack.c.b16 %v2373, %v2372
    %v3171 = vpack.c.b16 %v2375, %v2374
    %v3172 = vpack.c.b16 %v2377, %v2376
    %v3173 = vpack.c.b16 %v2379, %v2378
    %v3174 = vpack.c.b16 %v2381, %v2380
    %v3175 = vpack.c.b16 %v2383, %v2382
    %v3176 = vpack.c.b16 %v2385, %v2384
    %v3177 = vpack.c.b16 %v2387, %v2386
    %v3178 = vpack.c.b16 %v2389, %v2388
    %v3179 = vpack.c.b16 %v2391, %v2390
    %v3180 = vpack.c.b16 %v2393, %v2392
    %v3181 = vpack.c.b16 %v2395, %v2394
    %v3182 = vpack.c.b16 %v2397, %v2396
    %v3183 = vpack.c.b16 %v2399, %v2398
    %v3184 = vpack.c.b16 %v2401, %v2400
    %v3185 = vpack.c.b16 %v2403, %v2402
    %v3186 = vpack.c.b16 %v2405, %v2404
    %v3187 = vpack.c.b16 %v2407, %v2406
    %v3188 = vpack.c.b16 %v2409, %v2408
    %v3189 = vpack.c.b16 %v2411, %v2410
    %v3190 = vpack.c.b16 %v2413, %v2412
    %v3191 = vpack.c.b16 %v2415, %v2414
    %v3192 = vpack.c.b16 %v2417, %v2416
    %v3193 = vpack.c.b16 %v2419, %v2418
    %v3194 = vpack.c.b16 %v2421, %v2420
    %v3195 = vpack.c.b16 %v2423, %v2422
    %v3196 = vpack.c.b16 %v2425, %v2424
    %v3197 = vpack.c.b16 %v2427, %v2426
    %v3198 = vpack.c.b16 %v2429, %v2428
    %v3199 = vpack.c.b16 %v2431, %v2430
    %v3200 = vpack.c.b16 %v2433, %v2432
    %v3201 = vpack.c.b16 %v2435, %v2434
    %v3202 = vpack.c.b16 %v2437, %v2436
    %v3203 = vpack.c.b16 %v2439, %v2438
    %v3204 = vpack.c.b16 %v2441, %v2440
    %v3205 = vpack.c.b16 %v2443, %v2442
    %v3206 = vpack.c.b16 %v2445, %v2444
    %v3207 = vpack.c.b16 %v2447, %v2446
    %v3208 = vpack.c.b16 %v2449, %v2448
    %v3209 = vpack.c.b16 %v2451, %v2450
    %v3210 = vpack.c.b16 %v2453, %v2452
    %v3211 = vpack.c.b16 %v2455, %v2454
    %v3212 = vpack.c.b16 %v2457, %v2456
    %v3213 = vpack.c.b16 %v2459, %v2458
    %v3214 = vpack.c.b16 %v2461, %v2460
    %v3215 = vpack.c.b16 %v2463, %v2462
    %v3216 = vpack.c.b16 %v2465, %v2464
    %v3217 = vpack.c.b16 %v2467, %v2466
    %v3218 = vpack.c.b16 %v2469, %v2468
    %v3219 = vpack.c.b16 %v2471, %v2470
    %v3220 = vpack.c.b16 %v2473, %v2472
    %v3221 = vpack.c.b16 %v2475, %v2474
    %v3222 = vpack.c.b16 %v2477, %v2476
    %v3223 = vpack.c.b16 %v2479, %v2478
    %v3224 = vpack.c.b16 %v2481, %v2480
    %v3225 = vpack.c.b16 %v2483, %v2482
    %v3226 = vpack.c.b16 %v2485, %v2484
    %v3227 = vpack.c.b16 %v2487, %v2486
    %v3228 = vpack.c.b16 %v2489, %v2488
    %v3229 = vpack.c.b16 %v2491, %v2490
    %v3230 = vpack.c.b16 %v2493, %v2492
    %v3231 = vpack.c.b16 %v2495, %v2494
    %v3232 = vpack.c.b16 %v2497, %v2496
    %v3233 = vpack.c.b16 %v2499, %v2498
    %v3234 = vpack.c.b16 %v2501, %v2500
    %v3235 = vpack.c.b16 %v2503, %v2502
    %v3236 = vpack.c.b16 %v2505, %v2504
    %v3237 = vpack.c.b16 %v2507, %v2506
    %v3238 = vpack.c.b16 %v2509, %v2508
    %v3239 = vpack.c.b16 %v2511, %v2510
    %v3240 = vpack.c.b16 %v2513, %v2512
    %v3241 = vpack.c.b16 %v2515, %v2514
    %v3242 = vpack.c.b16 %v2517, %v2516
    %v3243 = vpack.c.b16 %v2519, %v2518
    %v3244 = vpack.c.b16 %v2521, %v2520
    %v3245 = vpack.c.b16 %v2523, %v2522
    %v3246 = vpack.c.b16 %v2525, %v2524
    %v3247 = vpack.c.b16 %v2527, %v2526
    %v3248 = vpack.c.b16 %v2529, %v2528
    %v3249 = vpack.c.b16 %v2531, %v2530
    %v3250 = vpack.c.b16 %v2533, %v2532
    %v3251 = vpack.c.b16 %v2535, %v2534
    %v3252 = vpack.c.b16 %v2537, %v2536
    %v3253 = vpack.c.b16 %v2539, %v2538
    %v3254 = vpack.c.b16 %v2541, %v2540
    %v3255 = vpack.c.b16 %v2543, %v2542
    %v3256 = vpack.c.b16 %v2545, %v2544
    %v3257 = vpack.c.b16 %v2547, %v2546
    %v3258 = vpack.c.b16 %v2549, %v2548
    %v3259 = vpack.c.b16 %v2551, %v2550
    %v3260 = vpack.c.b16 %v2553, %v2552
    %v3261 = vpack.c.b16 %v2555, %v2554
    %v3262 = vpack.c.b16 %v2557, %v2556
    %v3263 = vpack.c.b16 %v2559, %v2558
    %v3264 = vpack.c.b16 %v2561, %v2560
    %v3265 = vpack.c.b16 %v2563, %v2562
    %v3266 = vpack.c.b16 %v2565, %v2564
    %v3267 = vpack.c.b16 %v2567, %v2566
    %v3268 = vpack.c.b16 %v2569, %v2568
    %v3269 = vpack.c.b16 %v2571, %v2570
    %v3270 = vpack.c.b16 %v2573, %v2572
    %v3271 = vpack.c.b16 %v2575, %v2574
    %v3272 = vpack.c.b16 %v2577, %v2576
    %v3273 = vpack.c.b16 %v2579, %v2578
    %v3274 = vpack.c.b16 %v2581, %v2580
    %v3275 = vpack.c.b16 %v2583, %v2582
    %v3276 = vpack.c.b16 %v2585, %v2584
    %v3277 = vpack.c.b16 %v2587, %v2586
    %v3278 = vpack.c.b16 %v2589, %v2588
    %v3279 = vpack.c.b16 %v2591, %v2590
    %v3280 = vpack.c.b16 %v2593, %v2592
    %v3281 = vpack.c.b16 %v2595, %v2594
    %v3282 = vpack.c.b16 %v2597, %v2596
    %v3283 = vpack.c.b16 %v2599, %v2598
    %v3284 = vpack.c.b16 %v2601, %v2600
    %v3285 = vpack.c.b16 %v2603, %v2602
    %v3286 = vpack.c.b16 %v2605, %v2604
    %v3287 = vpack.c.b16 %v2607, %v2606
    %v3288 = vpack.c.b16 %v2609, %v2608
    %v3289 = vpack.c.b16 %v2611, %v2610
    %v3290 = vpack.c.b16 %v2613, %v2612
    %v3291 = vpack.c.b16 %v2615, %v2614
    %v3292 = vpack.c.b16 %v2617, %v2616
    %v3293 = vpack.c.b16 %v2619, %v2618
    %v3294 = vpack.c.b16 %v2621, %v2620
    %v3295 = vpack.c.b16 %v2623, %v2622
    %v3296 = vpack.c.b16 %v2625, %v2624
    %v3297 = vpack.c.b16 %v2627, %v2626
    %v3298 = vpack.c.b16 %v2629, %v2628
    %v3299 = vpack.c.b16 %v2631, %v2630
    %v3300 = vpack.c.b16 %v2633, %v2632
    %v3301 = vpack.c.b16 %v2635, %v2634
    %v3302 = vpack.c.b16 %v2637, %v2636
    %v3303 = vpack.c.b16 %v2639, %v2638
    %v3304 = vpack.c.b16 %v2641, %v2640
    %v3305 = vpack.c.b16 %v2643, %v2642
    %v3306 = vpack.c.b16 %v2645, %v2644
    %v3307 = vpack.c.b16 %v2647, %v2646
    %v3308 = vpack.c.b16 %v2649, %v2648
    %v3309 = vpack.c.b16 %v2651, %v2650
    %v3310 = vpack.c.b16 %v2653, %v2652
    %v3311 = vpack.c.b16 %v2655, %v2654
    %v3312 = vpack.c.b16 %v2657, %v2656
    %v3313 = vpack.c.b16 %v2659, %v2658
    %v3314 = vpack.c.b16 %v2661, %v2660
    %v3315 = vpack.c.b16 %v2663, %v2662
    %v3316 = vpack.c.b16 %v2665, %v2664
    %v3317 = vpack.c.b16 %v2667, %v2666
    %v3318 = vpack.c.b16 %v2669, %v2668
    %v3319 = vpack.c.b16 %v2671, %v2670
    %v3320 = vpack.c.b16 %v2673, %v2672
    %v3321 = vpack.c.b16 %v2675, %v2674
    %v3322 = vpack.c.b16 %v2677, %v2676
    %v3323 = vpack.c.b16 %v2679, %v2678
    %v3324 = vpack.c.b16 %v2681, %v2680
    %v3325 = vpack.c.b16 %v2683, %v2682
    %v3326 = vpack.c.b16 %v2685, %v2684
    %v3327 = vpack.c.b16 %v2687, %v2686
    %v3328 = vpack.c.b16 %v2689, %v2688
    %v3329 = vpack.c.b16 %v2691, %v2690
    %v3330 = vpack.c.b16 %v2693, %v2692
    %v3331 = vpack.c.b16 %v2695, %v2694
    %v3332 = vpack.c.b16 %v2697, %v2696
    %v3333 = vpack.c.b16 %v2699, %v2698
    %v3334 = vpack.c.b16 %v2701, %v2700
    %v3335 = vpack.c.b16 %v2703, %v2702
    %v3336 = vpack.c.b16 %v2705, %v2704
    %v3337 = vpack.c.b16 %v2707, %v2706
    %v3338 = vpack.c.b16 %v2709, %v2708
    %v3339 = vpack.c.b16 %v2711, %v2710
    %v3340 = vpack.c.b16 %v2713, %v2712
    %v3341 = vpack.c.b16 %v2715, %v2714
    %v3342 = vpack.c.b16 %v2717, %v2716
    %v3343 = vpack.c.b16 %v2719, %v2718
    %v3344 = vpack.c.b16 %v2721, %v2720
    %v3345 = vpack.c.b16 %v2723, %v2722
    %v3346 = vpack.c.b16 %v2725, %v2724
    %v3347 = vpack.c.b16 %v2727, %v2726
    %v3348 = vpack.c.b16 %v2729, %v2728
    %v3349 = vpack.c.b16 %v2731, %v2730
    %v3350 = vpack.c.b16 %v2733, %v2732
    %v3351 = vpack.c.b16 %v2735, %v2734
    %v3352 = vpack.c.b16 %v2737, %v2736
    %v3353 = vpack.c.b16 %v2739, %v2738
    %v3354 = vpack.c.b16 %v2741, %v2740
    %v3355 = vpack.c.b16 %v2743, %v2742
    %v3356 = vpack.c.b16 %v2745, %v2744
    %v3357 = vpack.c.b16 %v2747, %v2746
    %v3358 = vpack.c.b16 %v2749, %v2748
    %v3359 = vpack.c.b16 %v2751, %v2750
    %v3360 = vpack.c.b16 %v2753, %v2752
    %v3361 = vpack.c.b16 %v2755, %v2754
    %v3362 = vpack.c.b16 %v2757, %v2756
    %v3363 = vpack.c.b16 %v2759, %v2758
    %v3364 = vpack.c.b16 %v2761, %v2760
    %v3365 = vpack.c.b16 %v2763, %v2762
    %v3366 = vpack.c.b16 %v2765, %v2764
    %v3367 = vpack.c.b16 %v2767, %v2766
    %v3368 = vpack.c.b16 %v2769, %v2768
    %v3369 = vpack.c.b16 %v2771, %v2770
    %v3370 = vpack.c.b16 %v2773, %v2772
    %v3371 = vpack.c.b16 %v2775, %v2774
    %v3372 = vpack.c.b16 %v2777, %v2776
    %v3373 = vpack.c.b16 %v2779, %v2778
    %v3374 = vpack.c.b16 %v2781, %v2780
    %v3375 = vpack.c.b16 %v2783, %v2782
    %v3376 = vpack.c.b16 %v2785, %v2784
    %v3377 = vpack.c.b16 %v2787, %v2786
    %v3378 = vpack.c.b16 %v2789, %v2788
    %v3379 = vpack.c.b16 %v2791, %v2790
    %v3380 = vpack.c.b16 %v2793, %v2792
    %v3381 = vpack.c.b16 %v2795, %v2794
    %v3382 = vpack.c.b16 %v2797, %v2796
    %v3383 = vpack.c.b16 %v2799, %v2798
    %v3384 = vpack.c.b16 %v2801, %v2800
    %v3385 = vpack.c.b16 %v2803, %v2802
    %v3386 = vpack.c.b16 %v2805, %v2804
    %v3387 = vpack.c.b16 %v2807, %v2806
    %v3388 = vpack.c.b16 %v2809, %v2808
    %v3389 = vpack.c.b16 %v2811, %v2810
    %v3390 = vpack.c.b16 %v2813, %v2812
    %v3391 = vpack.c.b16 %v2815, %v2814
    %v3392 = vpack.c.b16 %v2817, %v2816
    %v3393 = vpack.c.b16 %v2819, %v2818
    %v3394 = vpack.c.b16 %v2821, %v2820
    %v3395 = vpack.c.b16 %v2823, %v2822
    %v3396 = vpack.c.b16 %v2825, %v2824
    %v3397 = vpack.c.b16 %v2827, %v2826
    %v3398 = vpack.c.b16 %v2829, %v2828
    %v3399 = vpack.c.b16 %v2831, %v2830
    %v3400 = vpack.c.b16 %v2833, %v2832
    %v3401 = vpack.c.b16 %v2835, %v2834
    %v3402 = vpack.c.b16 %v2837, %v2836
    %v3403 = vpack.c.b16 %v2839, %v2838
    %v3404 = vpack.c.b16 %v2841, %v2840
    %v3405 = vpack.c.b16 %v2843, %v2842
    %v3406 = vpack.c.b16 %v2845, %v2844
    %v3407 = vpack.c.b16 %v2847, %v2846
    %v3408 = vpack.c.b16 %v2849, %v2848
    %v3409 = vpack.c.b16 %v2851, %v2850
    %v3410 = vpack.c.b16 %v2853, %v2852
    %v3411 = vpack.c.b16 %v2855, %v2854
    %v3412 = vpack.c.b16 %v2857, %v2856
    %v3413 = vpack.c.b16 %v2859, %v2858
    %v3414 = vpack.c.b16 %v2861, %v2860
    %v3415 = vpack.c.b16 %v2863, %v2862
    %v3416 = vpack.c.b16 %v2865, %v2864
    %v3417 = vpack.c.b16 %v2867, %v2866
    %v3418 = vpack.c.b16 %v2869, %v2868
    %v3419 = vpack.c.b16 %v2871, %v2870
    %v3420 = vpack.c.b16 %v2873, %v2872
    %v3421 = vpack.c.b16 %v2875, %v2874
    %v3422 = vpack.c.b16 %v2877, %v2876
    %v3423 = vpack.c.b16 %v2879, %v2878
    %v3424 = vpack.c.b16 %v2881, %v2880
    %v3425 = vpack.c.b16 %v2883, %v2882
    %v3426 = vpack.c.b16 %v2885, %v2884
    %v3427 = vpack.c.b16 %v2887, %v2886
    %v3428 = vpack.c.b16 %v2889, %v2888
    %v3429 = vpack.c.b16 %v2891, %v2890
    %v3430 = vpack.c.b16 %v2893, %v2892
    %v3431 = vpack.c.b16 %v2895, %v2894
    %v3432 = vpack.c.b16 %v2897, %v2896
    %v3433 = vpack.c.b16 %v2899, %v2898
    %v3434 = vpack.c.b16 %v2901, %v2900
    %v3435 = vpack.c.b16 %v2903, %v2902
    %v3436 = vpack.c.b16 %v2905, %v2904
    %v3437 = vpack.c.b16 %v2907, %v2906
    %v3438 = vpack.c.b16 %v2909, %v2908
    %v3439 = vpack.c.b16 %v2911, %v2910
    %v3440 = vpack.c.b16 %v2913, %v2912
    %v3441 = vpack.c.b16 %v2915, %v2914
    %v3442 = vpack.c.b16 %v2917, %v2916
    %v3443 = vpack.c.b16 %v2919, %v2918
    %v3444 = vpack.c.b16 %v2921, %v2920
    %v3445 = vpack.c.b16 %v2923, %v2922
    %v3446 = vpack.c.b16 %v2925, %v2924
    %v3447 = vpack.c.b16 %v2927, %v2926
    %v3448 = vpack.c.b16 %v2929, %v2928
    %v3449 = vpack.c.b16 %v2931, %v2930
    %v3450 = vpack.c.b16 %v2933, %v2932
    %v3451 = vpack.c.b16 %v2935, %v2934
    %v3452 = vpack.c.b16 %v2937, %v2936
    %v3453 = vpack.c.b16 %v2939, %v2938
    %v3454 = vpack.c.b16 %v2941, %v2940
    %v3455 = vpack.c.b16 %v2943, %v2942
    %v3456 = vpack.c.b16 %v2945, %v2944
    %v3457 = vpack.c.b16 %v2947, %v2946
    %v3458 = vpack.c.b16 %v2949, %v2948
    %v3459 = vpack.c.b16 %v2951, %v2950
    %v3460 = vpack.c.b16 %v2953, %v2952
    %v3461 = vpack.c.b16 %v2955, %v2954
    %v3462 = vpack.c.b16 %v2957, %v2956
    %v3463 = vpack.c.b16 %v2959, %v2958
    %v3464 = vpack.c.b16 %v2961, %v2960
    %v3465 = vpack.c.b16 %v2963, %v2962
    %v3466 = vpack.c.b16 %v2965, %v2964
    %v3467 = vpack.c.b16 %v2967, %v2966
    %v3468 = vpack.c.b16 %v2969, %v2968
    %v3469 = vpack.c.b16 %v2971, %v2970
    %v3470 = vpack.c.b16 %v2973, %v2972
    %v3471 = vpack.c.b16 %v2975, %v2974
    %v3472 = vpack.c.b16 %v2977, %v2976
    %v3473 = vpack.c.b16 %v2979, %v2978
    %v3474 = vpack.c.b16 %v2981, %v2980
    %v3475 = vpack.c.b16 %v2983, %v2982
    %v3476 = vpack.c.b16 %v2985, %v2984
    %v3477 = vpack.c.b16 %v2987, %v2986
    %v3478 = vpack.c.b16 %v2989, %v2988
    %v3479 = vpack.c.b16 %v2991, %v2990
    %v3480 = vpack.c.b16 %v2993, %v2992
    %v3481 = vpack.c.b16 %v2995, %v2994
    %v3482 = vpack.c.b16 %v2997, %v2996
    %v3483 = vpack.c.b16 %v2999, %v2998
    %v3484 = vpack.c.b16 %v3001, %v3000
    %v3485 = vpack.c.b16 %v3003, %v3002
    %v3486 = vpack.c.b16 %v3005, %v3004
    %v3487 = vpack.c.b16 %v3007, %v3006
    %v3488 = vpack.c.b16 %v3009, %v3008
    %v3489 = vpack.c.b16 %v3011, %v3010
    %v3490 = vpack.c.b16 %v3013, %v3012
    %v3491 = vpack.c.b16 %v3015, %v3014
    %v3492 = vpack.c.b16 %v3017, %v3016
    %v3493 = vpack.c.b16 %v3019, %v3018
    %v3494 = vpack.c.b16 %v3021, %v3020
    %v3495 = vpack.c.b16 %v3023, %v3022
    %v3496 = vpack.c.b16 %v3025, %v3024
    %v3497 = vpack.c.b16 %v3027, %v3026
    %v3498 = vpack.c.b16 %v3029, %v3028
    %v3499 = vpack.c.b16 %v3031, %v3030
    %v3500 = vpack.c.b16 %v3033, %v3032
    %v3501 = vpack.c.b16 %v3035, %v3034
    %v3502 = vpack.c.b16 %v3037, %v3036
    %v3503 = vpack.c.b16 %v3039, %v3038
    %v3504 = vpack.c.b16 %v3041, %v3040
    %v3505 = vpack.c.b16 %v3043, %v3042
    %v3506 = vpack.c.b16 %v3045, %v3044
    %v3507 = vpack.c.b16 %v3047, %v3046
    %v3508 = vpack.c.b16 %v3049, %v3048
    %v3509 = vpack.c.b16 %v3051, %v3050
    %v3510 = vpack.c.b16 %v3053, %v3052
    %v3511 = vpack.c.b16 %v3055, %v3054
    %v3512 = vpack.c.b16 %v3057, %v3056
    %v3513 = vpack.c.b16 %v3059, %v3058
    %v3514 = vpack.c.b16 %v3061, %v3060
    %v3515 = vpack.c.b16 %v3063, %v3062
    %v3516 = vpack.c.b16 %v3065, %v3064
    %v3517 = vpack.c.b16 %v3067, %v3066
    %v3518 = vpack.c.b16 %v3069, %v3068
    %v3519 = vpack.c.b16 %v3071, %v3070
    %v3520 = vpack.c.b16 %v3073, %v3072
    %v3521 = vpack.c.b16 %v3075, %v3074
    %v3522 = vpack.c.b16 %v3077, %v3076
    %v3523 = vpack.c.b16 %v3079, %v3078
    %v3524 = vpack.c.b16 %v3081, %v3080
    %v3525 = vpack.c.b16 %v3083, %v3082
    %v3526 = vpack.c.b16 %v3085, %v3084
    %vm3968 = vcmask 130048
    %v3970 = vsel %vm3968, %v432, 0
    %3972 = vmatprep.subr.bf16.mxu0 0
    %3973 = vmatpush1.bf16.msra.mxu0 %v3086
    %3974 = vmatprep.subr.bf16.mxu0 0
    %3975 = vmatpush1.bf16.msra.mxu0 %v3087
    %3976 = vmatprep.subr.bf16.mxu0 0
    %3977 = vmatpush1.bf16.msra.mxu0 %v3088
    %3978 = vmatprep.subr.bf16.mxu0 0
    %3979 = vmatpush1.bf16.msra.mxu0 %v3089
    %3980 = vmatprep.subr.bf16.mxu0 0
    %3981 = vmatpush1.bf16.msra.mxu0 %v3090
    %3982 = vmatprep.subr.bf16.mxu0 0
    %3983 = vmatpush1.bf16.msra.mxu0 %v3091
    %3984 = vmatprep.subr.bf16.mxu0 0
    %3985 = vmatpush1.bf16.msra.mxu0 %v3092
    %3986 = vmatprep.subr.bf16.mxu0 0
    %3987 = vmatpush1.bf16.msra.mxu0 %v3093
    %3988 = vmatprep.subr.bf16.mxu0 0
    %3989 = vmatpush1.bf16.msra.mxu0 %v3094
    %3990 = vmatprep.subr.bf16.mxu0 0
    %3991 = vmatpush1.bf16.msra.mxu0 %v3095
    %3992 = vmatprep.subr.bf16.mxu0 0
    %3993 = vmatpush1.bf16.msra.mxu0 %v3096
    %3994 = vmatprep.subr.bf16.mxu0 0
    %3995 = vmatpush1.bf16.msra.mxu0 %v3097
    %3996 = vmatprep.subr.bf16.mxu0 0
    %3997 = vmatpush1.bf16.msra.mxu0 %v3098
    %3998 = vmatprep.subr.bf16.mxu0 0
    %3999 = vmatpush1.bf16.msra.mxu0 %v3099
    %4000 = vmatprep.subr.bf16.mxu0 0
    %4001 = vmatpush1.bf16.msra.mxu0 %v3100
    %4002 = vmatprep.subr.bf16.mxu0 0
    %4003 = vmatpush1.bf16.msra.mxu0 %v3101
    %4004 = vmatprep.mubr.bf16.mxu0 %v378
    %4005 = vmatmul.mubr.bf16.gmra.mrb[0].mxu0 %v377
    %v4006 = vpop.f32.mrb[0].mxu0
    %v4007 = vadd.f32 %v1320, %v4006
    %v4008 = vpop.f32.mrb[0].mxu0
    %v4009 = vpop.f32.mrb[0].mxu0
    %v4010 = vpop.f32.mrb[0].mxu0
    %4011 = vdwg.mxu0
    %4012 = vmatprep.subr.bf16.mxu0 0
    %4013 = vmatpush1.bf16.msra.mxu0 %v3102
    %4014 = vmatprep.subr.bf16.mxu0 0
    %4015 = vmatpush1.bf16.msra.mxu0 %v3103
    %4016 = vmatprep.subr.bf16.mxu0 0
    %4017 = vmatpush1.bf16.msra.mxu0 %v3104
    %4018 = vmatprep.subr.bf16.mxu0 0
    %4019 = vmatpush1.bf16.msra.mxu0 %v3105
    %4020 = vmatprep.subr.bf16.mxu0 0
    %4021 = vmatpush1.bf16.msra.mxu0 %v3106
    %4022 = vmatprep.subr.bf16.mxu0 0
    %4023 = vmatpush1.bf16.msra.mxu0 %v3107
    %4024 = vmatprep.subr.bf16.mxu0 0
    %4025 = vmatpush1.bf16.msra.mxu0 %v3108
    %4026 = vmatprep.subr.bf16.mxu0 0
    %4027 = vmatpush1.bf16.msra.mxu0 %v3109
    %4028 = vmatprep.subr.bf16.mxu0 0
    %4029 = vmatpush1.bf16.msra.mxu0 %v3110
    %4030 = vmatprep.subr.bf16.mxu0 0
    %4031 = vmatpush1.bf16.msra.mxu0 %v3111
    %4032 = vmatprep.subr.bf16.mxu0 0
    %4033 = vmatpush1.bf16.msra.mxu0 %v3112
    %4034 = vmatprep.subr.bf16.mxu0 0
    %4035 = vmatpush1.bf16.msra.mxu0 %v3113
    %4036 = vmatprep.subr.bf16.mxu0 0
    %4037 = vmatpush1.bf16.msra.mxu0 %v3114
    %4038 = vmatprep.subr.bf16.mxu0 0
    %4039 = vmatpush1.bf16.msra.mxu0 %v3115
    %4040 = vmatprep.subr.bf16.mxu0 0
    %4041 = vmatpush1.bf16.msra.mxu0 %v3116
    %4042 = vmatprep.subr.bf16.mxu0 0
    %4043 = vmatpush1.bf16.msra.mxu0 %v3117
    %4044 = vmatprep.mubr.bf16.mxu0 %v380
    %4045 = vmatmul.mubr.bf16.gmra.mrb[0].mxu0 %v379
    %v4046 = vpop.f32.mrb[0].mxu0
    %v4047 = vadd.f32 %v4007, %v4046
    %v4048 = vpop.f32.mrb[0].mxu0
    %v4049 = vpop.f32.mrb[0].mxu0
    %v4050 = vpop.f32.mrb[0].mxu0
    %4051 = vdwg.mxu0
    %4052 = vmatprep.subr.bf16.mxu0 0
    %4053 = vmatpush1.bf16.msra.mxu0 %v3118
    %4054 = vmatprep.subr.bf16.mxu0 0
    %4055 = vmatpush1.bf16.msra.mxu0 %v3119
    %4056 = vmatprep.subr.bf16.mxu0 0
    %4057 = vmatpush1.bf16.msra.mxu0 %v3120
    %4058 = vmatprep.subr.bf16.mxu0 0
    %4059 = vmatpush1.bf16.msra.mxu0 %v3121
    %4060 = vmatprep.subr.bf16.mxu0 0
    %4061 = vmatpush1.bf16.msra.mxu0 %v3122
    %4062 = vmatprep.subr.bf16.mxu0 0
    %4063 = vmatpush1.bf16.msra.mxu0 %v3123
    %4064 = vmatprep.subr.bf16.mxu0 0
    %4065 = vmatpush1.bf16.msra.mxu0 %v3124
    %4066 = vmatprep.subr.bf16.mxu0 0
    %4067 = vmatpush1.bf16.msra.mxu0 %v3125
    %4068 = vmatprep.subr.bf16.mxu0 0
    %4069 = vmatpush1.bf16.msra.mxu0 %v3126
    %4070 = vmatprep.subr.bf16.mxu0 0
    %4071 = vmatpush1.bf16.msra.mxu0 %v3127
    %4072 = vmatprep.subr.bf16.mxu0 0
    %4073 = vmatpush1.bf16.msra.mxu0 %v3128
    %4074 = vmatprep.subr.bf16.mxu0 0
    %4075 = vmatpush1.bf16.msra.mxu0 %v3129
    %4076 = vmatprep.subr.bf16.mxu0 0
    %4077 = vmatpush1.bf16.msra.mxu0 %v3130
    %4078 = vmatprep.subr.bf16.mxu0 0
    %4079 = vmatpush1.bf16.msra.mxu0 %v3131
    %4080 = vmatprep.subr.bf16.mxu0 0
    %4081 = vmatpush1.bf16.msra.mxu0 %v3132
    %4082 = vmatprep.subr.bf16.mxu0 0
    %4083 = vmatpush1.bf16.msra.mxu0 %v3133
    %4084 = vmatprep.mubr.bf16.mxu0 %v382
    %4085 = vmatmul.mubr.bf16.gmra.mrb[0].mxu0 %v381
    %v4086 = vpop.f32.mrb[0].mxu0
    %v4087 = vadd.f32 %v4047, %v4086
    %v4088 = vpop.f32.mrb[0].mxu0
    %v4089 = vpop.f32.mrb[0].mxu0
    %v4090 = vpop.f32.mrb[0].mxu0
    %4091 = vdwg.mxu0
    %4092 = vmatprep.subr.bf16.mxu0 0
    %4093 = vmatpush1.bf16.msra.mxu0 %v3134
    %4094 = vmatprep.subr.bf16.mxu0 0
    %4095 = vmatpush1.bf16.msra.mxu0 %v3135
    %4096 = vmatprep.subr.bf16.mxu0 0
    %4097 = vmatpush1.bf16.msra.mxu0 %v3136
    %4098 = vmatprep.subr.bf16.mxu0 0
    %4099 = vmatpush1.bf16.msra.mxu0 %v3137
    %4100 = vmatprep.subr.bf16.mxu0 0
    %4101 = vmatpush1.bf16.msra.mxu0 %v3138
    %4102 = vmatprep.subr.bf16.mxu0 0
    %4103 = vmatpush1.bf16.msra.mxu0 %v3139
    %4104 = vmatprep.subr.bf16.mxu0 0
    %4105 = vmatpush1.bf16.msra.mxu0 %v3140
    %4106 = vmatprep.subr.bf16.mxu0 0
    %4107 = vmatpush1.bf16.msra.mxu0 %v3141
    %4108 = vmatprep.subr.bf16.mxu0 0
    %4109 = vmatpush1.bf16.msra.mxu0 %v3142
    %4110 = vmatprep.subr.bf16.mxu0 0
    %4111 = vmatpush1.bf16.msra.mxu0 %v3143
    %4112 = vmatprep.subr.bf16.mxu0 0
    %4113 = vmatpush1.bf16.msra.mxu0 %v3144
    %4114 = vmatprep.subr.bf16.mxu0 0
    %4115 = vmatpush1.bf16.msra.mxu0 %v3145
    %4116 = vmatprep.subr.bf16.mxu0 0
    %4117 = vmatpush1.bf16.msra.mxu0 %v3146
    %4118 = vmatprep.subr.bf16.mxu0 0
    %4119 = vmatpush1.bf16.msra.mxu0 %v3147
    %4120 = vmatprep.subr.bf16.mxu0 0
    %4121 = vmatpush1.bf16.msra.mxu0 %v3148
    %4122 = vmatprep.subr.bf16.mxu0 0
    %4123 = vmatpush1.bf16.msra.mxu0 %v3149
    %4124 = vmatprep.mubr.bf16.mxu0 %v384
    %4125 = vmatmul.mubr.bf16.gmra.mrb[0].mxu0 %v383
    %v4126 = vpop.f32.mrb[0].mxu0
    %v4127 = vadd.f32 %v4087, %v4126
    %v4128 = vpop.f32.mrb[0].mxu0
    %v4129 = vpop.f32.mrb[0].mxu0
    %v4130 = vpop.f32.mrb[0].mxu0
    %4131 = vdwg.mxu0
    %4132 = vmatprep.subr.bf16.mxu0 0
    %4133 = vmatpush1.bf16.msra.mxu0 %v3150
    %4134 = vmatprep.subr.bf16.mxu0 0
    %4135 = vmatpush1.bf16.msra.mxu0 %v3151
    %4136 = vmatprep.subr.bf16.mxu0 0
    %4137 = vmatpush1.bf16.msra.mxu0 %v3152
    %4138 = vmatprep.subr.bf16.mxu0 0
    %4139 = vmatpush1.bf16.msra.mxu0 %v3153
    %4140 = vmatprep.subr.bf16.mxu0 0
    %4141 = vmatpush1.bf16.msra.mxu0 %v3154
    %4142 = vmatprep.subr.bf16.mxu0 0
    %4143 = vmatpush1.bf16.msra.mxu0 %v3155
    %4144 = vmatprep.subr.bf16.mxu0 0
    %4145 = vmatpush1.bf16.msra.mxu0 %v3156
    %4146 = vmatprep.subr.bf16.mxu0 0
    %4147 = vmatpush1.bf16.msra.mxu0 %v3157
    %4148 = vmatprep.subr.bf16.mxu0 0
    %4149 = vmatpush1.bf16.msra.mxu0 %v3158
    %4150 = vmatprep.subr.bf16.mxu0 0
    %4151 = vmatpush1.bf16.msra.mxu0 %v3159
    %4152 = vmatprep.subr.bf16.mxu0 0
    %4153 = vmatpush1.bf16.msra.mxu0 %v3160
    %4154 = vmatprep.subr.bf16.mxu0 0
    %4155 = vmatpush1.bf16.msra.mxu0 %v3161
    %4156 = vmatprep.subr.bf16.mxu0 0
    %4157 = vmatpush1.bf16.msra.mxu0 %v3162
    %4158 = vmatprep.subr.bf16.mxu0 0
    %4159 = vmatpush1.bf16.msra.mxu0 %v3163
    %4160 = vmatprep.subr.bf16.mxu0 0
    %4161 = vmatpush1.bf16.msra.mxu0 %v3164
    %4162 = vmatprep.subr.bf16.mxu0 0
    %4163 = vmatpush1.bf16.msra.mxu0 %v3165
    %4164 = vmatprep.mubr.bf16.mxu0 %v386
    %4165 = vmatmul.mubr.bf16.gmra.mrb[0].mxu0 %v385
    %v4166 = vpop.f32.mrb[0].mxu0
    %v4167 = vadd.f32 %v4127, %v4166
    %v4168 = vpop.f32.mrb[0].mxu0
    %v4169 = vpop.f32.mrb[0].mxu0
    %v4170 = vpop.f32.mrb[0].mxu0
    %4171 = vdwg.mxu0
    %4172 = vmatprep.subr.bf16.mxu0 0
    %4173 = vmatpush1.bf16.msra.mxu0 %v3166
    %4174 = vmatprep.subr.bf16.mxu0 0
    %4175 = vmatpush1.bf16.msra.mxu0 %v3167
    %4176 = vmatprep.subr.bf16.mxu0 0
    %4177 = vmatpush1.bf16.msra.mxu0 %v3168
    %4178 = vmatprep.subr.bf16.mxu0 0
    %4179 = vmatpush1.bf16.msra.mxu0 %v3169
    %4180 = vmatprep.subr.bf16.mxu0 0
    %4181 = vmatpush1.bf16.msra.mxu0 %v3170
    %4182 = vmatprep.subr.bf16.mxu0 0
    %4183 = vmatpush1.bf16.msra.mxu0 %v3171
    %4184 = vmatprep.subr.bf16.mxu0 0
    %4185 = vmatpush1.bf16.msra.mxu0 %v3172
    %4186 = vmatprep.subr.bf16.mxu0 0
    %4187 = vmatpush1.bf16.msra.mxu0 %v3173
    %4188 = vmatprep.subr.bf16.mxu0 0
    %4189 = vmatpush1.bf16.msra.mxu0 %v3174
    %4190 = vmatprep.subr.bf16.mxu0 0
    %4191 = vmatpush1.bf16.msra.mxu0 %v3175
    %4192 = vmatprep.subr.bf16.mxu0 0
    %4193 = vmatpush1.bf16.msra.mxu0 %v3176
    %4194 = vmatprep.subr.bf16.mxu0 0
    %4195 = vmatpush1.bf16.msra.mxu0 %v3177
    %4196 = vmatprep.subr.bf16.mxu0 0
    %4197 = vmatpush1.bf16.msra.mxu0 %v3178
    %4198 = vmatprep.subr.bf16.mxu0 0
    %4199 = vmatpush1.bf16.msra.mxu0 %v3179
    %4200 = vmatprep.subr.bf16.mxu0 0
    %4201 = vmatpush1.bf16.msra.mxu0 %v3180
    %4202 = vmatprep.subr.bf16.mxu0 0
    %4203 = vmatpush1.bf16.msra.mxu0 %v3181
    %4204 = vmatprep.mubr.bf16.mxu0 %v388
    %4205 = vmatmul.mubr.bf16.gmra.mrb[0].mxu0 %v387
    %v4206 = vpop.f32.mrb[0].mxu0
    %v4207 = vadd.f32 %v4167, %v4206
    %v4208 = vpop.f32.mrb[0].mxu0
    %v4209 = vpop.f32.mrb[0].mxu0
    %v4210 = vpop.f32.mrb[0].mxu0
    %4211 = vdwg.mxu0
    %4212 = vmatprep.subr.bf16.mxu0 0
    %4213 = vmatpush1.bf16.msra.mxu0 %v3182
    %4214 = vmatprep.subr.bf16.mxu0 0
    %4215 = vmatpush1.bf16.msra.mxu0 %v3183
    %4216 = vmatprep.subr.bf16.mxu0 0
    %4217 = vmatpush1.bf16.msra.mxu0 %v3184
    %4218 = vmatprep.subr.bf16.mxu0 0
    %4219 = vmatpush1.bf16.msra.mxu0 %v3185
    %4220 = vmatprep.subr.bf16.mxu0 0
    %4221 = vmatpush1.bf16.msra.mxu0 %v3186
    %4222 = vmatprep.subr.bf16.mxu0 0
    %4223 = vmatpush1.bf16.msra.mxu0 %v3187
    %4224 = vmatprep.subr.bf16.mxu0 0
    %4225 = vmatpush1.bf16.msra.mxu0 %v3188
    %4226 = vmatprep.subr.bf16.mxu0 0
    %4227 = vmatpush1.bf16.msra.mxu0 %v3189
    %4228 = vmatprep.subr.bf16.mxu0 0
    %4229 = vmatpush1.bf16.msra.mxu0 %v3190
    %4230 = vmatprep.subr.bf16.mxu0 0
    %4231 = vmatpush1.bf16.msra.mxu0 %v3191
    %4232 = vmatprep.subr.bf16.mxu0 0
    %4233 = vmatpush1.bf16.msra.mxu0 %v3192
    %4234 = vmatprep.subr.bf16.mxu0 0
    %4235 = vmatpush1.bf16.msra.mxu0 %v3193
    %4236 = vmatprep.subr.bf16.mxu0 0
    %4237 = vmatpush1.bf16.msra.mxu0 %v3194
    %4238 = vmatprep.subr.bf16.mxu0 0
    %4239 = vmatpush1.bf16.msra.mxu0 %v3195
    %4240 = vmatprep.subr.bf16.mxu0 0
    %4241 = vmatpush1.bf16.msra.mxu0 %v3196
    %4242 = vmatprep.subr.bf16.mxu0 0
    %4243 = vmatpush1.bf16.msra.mxu0 %v3197
    %4244 = vmatprep.mubr.bf16.mxu0 %v390
    %4245 = vmatmul.mubr.bf16.gmra.mrb[0].mxu0 %v389
    %v4246 = vpop.f32.mrb[0].mxu0
    %v4247 = vadd.f32 %v4207, %v4246
    %v4248 = vpop.f32.mrb[0].mxu0
    %v4249 = vpop.f32.mrb[0].mxu0
    %v4250 = vpop.f32.mrb[0].mxu0
    %4251 = vdwg.mxu0
    %4252 = vmatprep.subr.bf16.mxu0 0
    %4253 = vmatpush1.bf16.msra.mxu0 %v3198
    %4254 = vmatprep.subr.bf16.mxu0 0
    %4255 = vmatpush1.bf16.msra.mxu0 %v3199
    %4256 = vmatprep.subr.bf16.mxu0 0
    %4257 = vmatpush1.bf16.msra.mxu0 %v3200
    %4258 = vmatprep.subr.bf16.mxu0 0
    %4259 = vmatpush1.bf16.msra.mxu0 %v3201
    %4260 = vmatprep.subr.bf16.mxu0 0
    %4261 = vmatpush1.bf16.msra.mxu0 %v3202
    %4262 = vmatprep.subr.bf16.mxu0 0
    %4263 = vmatpush1.bf16.msra.mxu0 %v3203
    %4264 = vmatprep.subr.bf16.mxu0 0
    %4265 = vmatpush1.bf16.msra.mxu0 %v3204
    %4266 = vmatprep.subr.bf16.mxu0 0
    %4267 = vmatpush1.bf16.msra.mxu0 %v3205
    %4268 = vmatprep.subr.bf16.mxu0 0
    %4269 = vmatpush1.bf16.msra.mxu0 %v3206
    %4270 = vmatprep.subr.bf16.mxu0 0
    %4271 = vmatpush1.bf16.msra.mxu0 %v3207
    %4272 = vmatprep.subr.bf16.mxu0 0
    %4273 = vmatpush1.bf16.msra.mxu0 %v3208
    %4274 = vmatprep.subr.bf16.mxu0 0
    %4275 = vmatpush1.bf16.msra.mxu0 %v3209
    %4276 = vmatprep.subr.bf16.mxu0 0
    %4277 = vmatpush1.bf16.msra.mxu0 %v3210
    %4278 = vmatprep.subr.bf16.mxu0 0
    %4279 = vmatpush1.bf16.msra.mxu0 %v3211
    %4280 = vmatprep.subr.bf16.mxu0 0
    %4281 = vmatpush1.bf16.msra.mxu0 %v3212
    %4282 = vmatprep.subr.bf16.mxu0 0
    %4283 = vmatpush1.bf16.msra.mxu0 %v3213
    %4284 = vmatprep.mubr.bf16.mxu0 %v392
    %4285 = vmatmul.mubr.bf16.gmra.mrb[0].mxu0 %v391
    %v4286 = vpop.f32.mrb[0].mxu0
    %v4287 = vadd.f32 %v4247, %v4286
    %v4288 = vpop.f32.mrb[0].mxu0
    %v4289 = vpop.f32.mrb[0].mxu0
    %v4290 = vpop.f32.mrb[0].mxu0
    %4291 = vdwg.mxu0
    %4292 = vmatprep.subr.bf16.mxu0 0
    %4293 = vmatpush1.bf16.msra.mxu0 %v3214
    %4294 = vmatprep.subr.bf16.mxu0 0
    %4295 = vmatpush1.bf16.msra.mxu0 %v3215
    %4296 = vmatprep.subr.bf16.mxu0 0
    %4297 = vmatpush1.bf16.msra.mxu0 %v3216
    %4298 = vmatprep.subr.bf16.mxu0 0
    %4299 = vmatpush1.bf16.msra.mxu0 %v3217
    %4300 = vmatprep.subr.bf16.mxu0 0
    %4301 = vmatpush1.bf16.msra.mxu0 %v3218
    %4302 = vmatprep.subr.bf16.mxu0 0
    %4303 = vmatpush1.bf16.msra.mxu0 %v3219
    %4304 = vmatprep.subr.bf16.mxu0 0
    %4305 = vmatpush1.bf16.msra.mxu0 %v3220
    %4306 = vmatprep.subr.bf16.mxu0 0
    %4307 = vmatpush1.bf16.msra.mxu0 %v3221
    %4308 = vmatprep.subr.bf16.mxu0 0
    %4309 = vmatpush1.bf16.msra.mxu0 %v3222
    %4310 = vmatprep.subr.bf16.mxu0 0
    %4311 = vmatpush1.bf16.msra.mxu0 %v3223
    %4312 = vmatprep.subr.bf16.mxu0 0
    %4313 = vmatpush1.bf16.msra.mxu0 %v3224
    %4314 = vmatprep.subr.bf16.mxu0 0
    %4315 = vmatpush1.bf16.msra.mxu0 %v3225
    %4316 = vmatprep.subr.bf16.mxu0 0
    %4317 = vmatpush1.bf16.msra.mxu0 %v3226
    %4318 = vmatprep.subr.bf16.mxu0 0
    %4319 = vmatpush1.bf16.msra.mxu0 %v3227
    %4320 = vmatprep.subr.bf16.mxu0 0
    %4321 = vmatpush1.bf16.msra.mxu0 %v3228
    %4322 = vmatprep.subr.bf16.mxu0 0
    %4323 = vmatpush1.bf16.msra.mxu0 %v3229
    %4324 = vmatprep.mubr.bf16.mxu0 %v394
    %4325 = vmatmul.mubr.bf16.gmra.mrb[0].mxu0 %v393
    %v4326 = vpop.f32.mrb[0].mxu0
    %v4327 = vadd.f32 %v4287, %v4326
    %v4328 = vpop.f32.mrb[0].mxu0
    %v4329 = vpop.f32.mrb[0].mxu0
    %v4330 = vpop.f32.mrb[0].mxu0
    %4331 = vdwg.mxu0
    %4332 = vmatprep.subr.bf16.mxu0 0
    %4333 = vmatpush1.bf16.msra.mxu0 %v3230
    %4334 = vmatprep.subr.bf16.mxu0 0
    %4335 = vmatpush1.bf16.msra.mxu0 %v3231
    %4336 = vmatprep.subr.bf16.mxu0 0
    %4337 = vmatpush1.bf16.msra.mxu0 %v3232
    %4338 = vmatprep.subr.bf16.mxu0 0
    %4339 = vmatpush1.bf16.msra.mxu0 %v3233
    %4340 = vmatprep.subr.bf16.mxu0 0
    %4341 = vmatpush1.bf16.msra.mxu0 %v3234
    %4342 = vmatprep.subr.bf16.mxu0 0
    %4343 = vmatpush1.bf16.msra.mxu0 %v3235
    %4344 = vmatprep.subr.bf16.mxu0 0
    %4345 = vmatpush1.bf16.msra.mxu0 %v3236
    %4346 = vmatprep.subr.bf16.mxu0 0
    %4347 = vmatpush1.bf16.msra.mxu0 %v3237
    %4348 = vmatprep.subr.bf16.mxu0 0
    %4349 = vmatpush1.bf16.msra.mxu0 %v3238
    %4350 = vmatprep.subr.bf16.mxu0 0
    %4351 = vmatpush1.bf16.msra.mxu0 %v3239
    %4352 = vmatprep.subr.bf16.mxu0 0
    %4353 = vmatpush1.bf16.msra.mxu0 %v3240
    %4354 = vmatprep.subr.bf16.mxu0 0
    %4355 = vmatpush1.bf16.msra.mxu0 %v3241
    %4356 = vmatprep.subr.bf16.mxu0 0
    %4357 = vmatpush1.bf16.msra.mxu0 %v3242
    %4358 = vmatprep.subr.bf16.mxu0 0
    %4359 = vmatpush1.bf16.msra.mxu0 %v3243
    %4360 = vmatprep.subr.bf16.mxu0 0
    %4361 = vmatpush1.bf16.msra.mxu0 %v3244
    %4362 = vmatprep.subr.bf16.mxu0 0
    %4363 = vmatpush1.bf16.msra.mxu0 %v3245
    %4364 = vmatprep.mubr.bf16.mxu0 %v396
    %4365 = vmatmul.mubr.bf16.gmra.mrb[0].mxu0 %v395
    %v4366 = vpop.f32.mrb[0].mxu0
    %v4367 = vadd.f32 %v4327, %v4366
    %v4368 = vpop.f32.mrb[0].mxu0
    %v4369 = vpop.f32.mrb[0].mxu0
    %v4370 = vpop.f32.mrb[0].mxu0
    %4371 = vdwg.mxu0
    %4372 = vmatprep.subr.bf16.mxu0 0
    %4373 = vmatpush1.bf16.msra.mxu0 %v3246
    %4374 = vmatprep.subr.bf16.mxu0 0
    %4375 = vmatpush1.bf16.msra.mxu0 %v3247
    %4376 = vmatprep.subr.bf16.mxu0 0
    %4377 = vmatpush1.bf16.msra.mxu0 %v3248
    %4378 = vmatprep.subr.bf16.mxu0 0
    %4379 = vmatpush1.bf16.msra.mxu0 %v3249
    %4380 = vmatprep.subr.bf16.mxu0 0
    %4381 = vmatpush1.bf16.msra.mxu0 %v3250
    %4382 = vmatprep.subr.bf16.mxu0 0
    %4383 = vmatpush1.bf16.msra.mxu0 %v3251
    %4384 = vmatprep.subr.bf16.mxu0 0
    %4385 = vmatpush1.bf16.msra.mxu0 %v3252
    %4386 = vmatprep.subr.bf16.mxu0 0
    %4387 = vmatpush1.bf16.msra.mxu0 %v3253
    %4388 = vmatprep.subr.bf16.mxu0 0
    %4389 = vmatpush1.bf16.msra.mxu0 %v3254
    %4390 = vmatprep.subr.bf16.mxu0 0
    %4391 = vmatpush1.bf16.msra.mxu0 %v3255
    %4392 = vmatprep.subr.bf16.mxu0 0
    %4393 = vmatpush1.bf16.msra.mxu0 %v3256
    %4394 = vmatprep.subr.bf16.mxu0 0
    %4395 = vmatpush1.bf16.msra.mxu0 %v3257
    %4396 = vmatprep.subr.bf16.mxu0 0
    %4397 = vmatpush1.bf16.msra.mxu0 %v3258
    %4398 = vmatprep.subr.bf16.mxu0 0
    %4399 = vmatpush1.bf16.msra.mxu0 %v3259
    %4400 = vmatprep.subr.bf16.mxu0 0
    %4401 = vmatpush1.bf16.msra.mxu0 %v3260
    %4402 = vmatprep.subr.bf16.mxu0 0
    %4403 = vmatpush1.bf16.msra.mxu0 %v3261
    %4404 = vmatprep.mubr.bf16.mxu0 %v398
    %4405 = vmatmul.mubr.bf16.gmra.mrb[0].mxu0 %v397
    %v4406 = vpop.f32.mrb[0].mxu0
    %v4407 = vadd.f32 %v4367, %v4406
    %v4408 = vpop.f32.mrb[0].mxu0
    %v4409 = vpop.f32.mrb[0].mxu0
    %v4410 = vpop.f32.mrb[0].mxu0
    %4411 = vdwg.mxu0
    %4412 = vmatprep.subr.bf16.mxu0 0
    %4413 = vmatpush1.bf16.msra.mxu0 %v3262
    %4414 = vmatprep.subr.bf16.mxu0 0
    %4415 = vmatpush1.bf16.msra.mxu0 %v3263
    %4416 = vmatprep.subr.bf16.mxu0 0
    %4417 = vmatpush1.bf16.msra.mxu0 %v3264
    %4418 = vmatprep.subr.bf16.mxu0 0
    %4419 = vmatpush1.bf16.msra.mxu0 %v3265
    %4420 = vmatprep.subr.bf16.mxu0 0
    %4421 = vmatpush1.bf16.msra.mxu0 %v3266
    %4422 = vmatprep.subr.bf16.mxu0 0
    %4423 = vmatpush1.bf16.msra.mxu0 %v3267
    %4424 = vmatprep.subr.bf16.mxu0 0
    %4425 = vmatpush1.bf16.msra.mxu0 %v3268
    %4426 = vmatprep.subr.bf16.mxu0 0
    %4427 = vmatpush1.bf16.msra.mxu0 %v3269
    %4428 = vmatprep.subr.bf16.mxu0 0
    %4429 = vmatpush1.bf16.msra.mxu0 %v3270
    %4430 = vmatprep.subr.bf16.mxu0 0
    %4431 = vmatpush1.bf16.msra.mxu0 %v3271
    %4432 = vmatprep.subr.bf16.mxu0 0
    %4433 = vmatpush1.bf16.msra.mxu0 %v3272
    %4434 = vmatprep.subr.bf16.mxu0 0
    %4435 = vmatpush1.bf16.msra.mxu0 %v3273
    %4436 = vmatprep.subr.bf16.mxu0 0
    %4437 = vmatpush1.bf16.msra.mxu0 %v3274
    %4438 = vmatprep.subr.bf16.mxu0 0
    %4439 = vmatpush1.bf16.msra.mxu0 %v3275
    %4440 = vmatprep.subr.bf16.mxu0 0
    %4441 = vmatpush1.bf16.msra.mxu0 %v3276
    %4442 = vmatprep.subr.bf16.mxu0 0
    %4443 = vmatpush1.bf16.msra.mxu0 %v3277
    %4444 = vmatprep.mubr.bf16.mxu0 %v400
    %4445 = vmatmul.mubr.bf16.gmra.mrb[0].mxu0 %v399
    %v4446 = vpop.f32.mrb[0].mxu0
    %v4447 = vadd.f32 %v4407, %v4446
    %v4448 = vpop.f32.mrb[0].mxu0
    %v4449 = vpop.f32.mrb[0].mxu0
    %v4450 = vpop.f32.mrb[0].mxu0
    %4451 = vdwg.mxu0
    %4452 = vmatprep.subr.bf16.mxu0 0
    %4453 = vmatpush1.bf16.msra.mxu0 %v3278
    %4454 = vmatprep.subr.bf16.mxu0 0
    %4455 = vmatpush1.bf16.msra.mxu0 %v3279
    %4456 = vmatprep.subr.bf16.mxu0 0
    %4457 = vmatpush1.bf16.msra.mxu0 %v3280
    %4458 = vmatprep.subr.bf16.mxu0 0
    %4459 = vmatpush1.bf16.msra.mxu0 %v3281
    %4460 = vmatprep.subr.bf16.mxu0 0
    %4461 = vmatpush1.bf16.msra.mxu0 %v3282
    %4462 = vmatprep.subr.bf16.mxu0 0
    %4463 = vmatpush1.bf16.msra.mxu0 %v3283
    %4464 = vmatprep.subr.bf16.mxu0 0
    %4465 = vmatpush1.bf16.msra.mxu0 %v3284
    %4466 = vmatprep.subr.bf16.mxu0 0
    %4467 = vmatpush1.bf16.msra.mxu0 %v3285
    %4468 = vmatprep.subr.bf16.mxu0 0
    %4469 = vmatpush1.bf16.msra.mxu0 %v3286
    %4470 = vmatprep.subr.bf16.mxu0 0
    %4471 = vmatpush1.bf16.msra.mxu0 %v3287
    %4472 = vmatprep.subr.bf16.mxu0 0
    %4473 = vmatpush1.bf16.msra.mxu0 %v3288
    %4474 = vmatprep.subr.bf16.mxu0 0
    %4475 = vmatpush1.bf16.msra.mxu0 %v3289
    %4476 = vmatprep.subr.bf16.mxu0 0
    %4477 = vmatpush1.bf16.msra.mxu0 %v3290
    %4478 = vmatprep.subr.bf16.mxu0 0
    %4479 = vmatpush1.bf16.msra.mxu0 %v3291
    %4480 = vmatprep.subr.bf16.mxu0 0
    %4481 = vmatpush1.bf16.msra.mxu0 %v3292
    %4482 = vmatprep.subr.bf16.mxu0 0
    %4483 = vmatpush1.bf16.msra.mxu0 %v3293
    %4484 = vmatprep.mubr.bf16.mxu0 %v402
    %4485 = vmatmul.mubr.bf16.gmra.mrb[0].mxu0 %v401
    %v4486 = vpop.f32.mrb[0].mxu0
    %v4487 = vadd.f32 %v4447, %v4486
    %v4488 = vpop.f32.mrb[0].mxu0
    %v4489 = vpop.f32.mrb[0].mxu0
    %v4490 = vpop.f32.mrb[0].mxu0
    %4491 = vdwg.mxu0
    %4492 = vmatprep.subr.bf16.mxu0 0
    %4493 = vmatpush1.bf16.msra.mxu0 %v3294
    %4494 = vmatprep.subr.bf16.mxu0 0
    %4495 = vmatpush1.bf16.msra.mxu0 %v3295
    %4496 = vmatprep.subr.bf16.mxu0 0
    %4497 = vmatpush1.bf16.msra.mxu0 %v3296
    %4498 = vmatprep.subr.bf16.mxu0 0
    %4499 = vmatpush1.bf16.msra.mxu0 %v3297
    %4500 = vmatprep.subr.bf16.mxu0 0
    %4501 = vmatpush1.bf16.msra.mxu0 %v3298
    %4502 = vmatprep.subr.bf16.mxu0 0
    %4503 = vmatpush1.bf16.msra.mxu0 %v3299
    %4504 = vmatprep.subr.bf16.mxu0 0
    %4505 = vmatpush1.bf16.msra.mxu0 %v3300
    %4506 = vmatprep.subr.bf16.mxu0 0
    %4507 = vmatpush1.bf16.msra.mxu0 %v3301
    %4508 = vmatprep.subr.bf16.mxu0 0
    %4509 = vmatpush1.bf16.msra.mxu0 %v3302
    %4510 = vmatprep.subr.bf16.mxu0 0
    %4511 = vmatpush1.bf16.msra.mxu0 %v3303
    %4512 = vmatprep.subr.bf16.mxu0 0
    %4513 = vmatpush1.bf16.msra.mxu0 %v3304
    %4514 = vmatprep.subr.bf16.mxu0 0
    %4515 = vmatpush1.bf16.msra.mxu0 %v3305
    %4516 = vmatprep.subr.bf16.mxu0 0
    %4517 = vmatpush1.bf16.msra.mxu0 %v3306
    %4518 = vmatprep.subr.bf16.mxu0 0
    %4519 = vmatpush1.bf16.msra.mxu0 %v3307
    %4520 = vmatprep.subr.bf16.mxu0 0
    %4521 = vmatpush1.bf16.msra.mxu0 %v3308
    %4522 = vmatprep.subr.bf16.mxu0 0
    %4523 = vmatpush1.bf16.msra.mxu0 %v3309
    %4524 = vmatprep.mubr.bf16.mxu0 %v404
    %4525 = vmatmul.mubr.bf16.gmra.mrb[0].mxu0 %v403
    %v4526 = vpop.f32.mrb[0].mxu0
    %v4527 = vadd.f32 %v4487, %v4526
    %v4528 = vpop.f32.mrb[0].mxu0
    %v4529 = vpop.f32.mrb[0].mxu0
    %v4530 = vpop.f32.mrb[0].mxu0
    %4531 = vdwg.mxu0
    %4532 = vmatprep.subr.bf16.mxu0 0
    %4533 = vmatpush1.bf16.msra.mxu0 %v3310
    %4534 = vmatprep.subr.bf16.mxu0 0
    %4535 = vmatpush1.bf16.msra.mxu0 %v3311
    %4536 = vmatprep.subr.bf16.mxu0 0
    %4537 = vmatpush1.bf16.msra.mxu0 %v3312
    %4538 = vmatprep.subr.bf16.mxu0 0
    %4539 = vmatpush1.bf16.msra.mxu0 %v3313
    %4540 = vmatprep.subr.bf16.mxu0 0
    %4541 = vmatpush1.bf16.msra.mxu0 %v3314
    %4542 = vmatprep.subr.bf16.mxu0 0
    %4543 = vmatpush1.bf16.msra.mxu0 %v3315
    %4544 = vmatprep.subr.bf16.mxu0 0
    %4545 = vmatpush1.bf16.msra.mxu0 %v3316
    %4546 = vmatprep.subr.bf16.mxu0 0
    %4547 = vmatpush1.bf16.msra.mxu0 %v3317
    %4548 = vmatprep.subr.bf16.mxu0 0
    %4549 = vmatpush1.bf16.msra.mxu0 %v3318
    %4550 = vmatprep.subr.bf16.mxu0 0
    %4551 = vmatpush1.bf16.msra.mxu0 %v3319
    %4552 = vmatprep.subr.bf16.mxu0 0
    %4553 = vmatpush1.bf16.msra.mxu0 %v3320
    %4554 = vmatprep.subr.bf16.mxu0 0
    %4555 = vmatpush1.bf16.msra.mxu0 %v3321
    %4556 = vmatprep.subr.bf16.mxu0 0
    %4557 = vmatpush1.bf16.msra.mxu0 %v3322
    %4558 = vmatprep.subr.bf16.mxu0 0
    %4559 = vmatpush1.bf16.msra.mxu0 %v3323
    %4560 = vmatprep.subr.bf16.mxu0 0
    %4561 = vmatpush1.bf16.msra.mxu0 %v3324
    %4562 = vmatprep.subr.bf16.mxu0 0
    %4563 = vmatpush1.bf16.msra.mxu0 %v3325
    %4564 = vmatprep.mubr.bf16.mxu0 %v406
    %4565 = vmatmul.mubr.bf16.gmra.mrb[0].mxu0 %v405
    %v4566 = vpop.f32.mrb[0].mxu0
    %v4567 = vadd.f32 %v4527, %v4566
    %v4568 = vpop.f32.mrb[0].mxu0
    %v4569 = vpop.f32.mrb[0].mxu0
    %v4570 = vpop.f32.mrb[0].mxu0
    %4571 = vdwg.mxu0
    %4572 = vmatprep.subr.bf16.mxu0 0
    %4573 = vmatpush1.bf16.msra.mxu0 %v3326
    %4574 = vmatprep.subr.bf16.mxu0 0
    %4575 = vmatpush1.bf16.msra.mxu0 %v3327
    %4576 = vmatprep.subr.bf16.mxu0 0
    %4577 = vmatpush1.bf16.msra.mxu0 %v3328
    %4578 = vmatprep.subr.bf16.mxu0 0
    %4579 = vmatpush1.bf16.msra.mxu0 %v3329
    %4580 = vmatprep.subr.bf16.mxu0 0
    %4581 = vmatpush1.bf16.msra.mxu0 %v3330
    %4582 = vmatprep.subr.bf16.mxu0 0
    %4583 = vmatpush1.bf16.msra.mxu0 %v3331
    %4584 = vmatprep.subr.bf16.mxu0 0
    %4585 = vmatpush1.bf16.msra.mxu0 %v3332
    %4586 = vmatprep.subr.bf16.mxu0 0
    %4587 = vmatpush1.bf16.msra.mxu0 %v3333
    %4588 = vmatprep.subr.bf16.mxu0 0
    %4589 = vmatpush1.bf16.msra.mxu0 %v3334
    %4590 = vmatprep.subr.bf16.mxu0 0
    %4591 = vmatpush1.bf16.msra.mxu0 %v3335
    %4592 = vmatprep.subr.bf16.mxu0 0
    %4593 = vmatpush1.bf16.msra.mxu0 %v3336
    %4594 = vmatprep.subr.bf16.mxu0 0
    %4595 = vmatpush1.bf16.msra.mxu0 %v3337
    %4596 = vmatprep.subr.bf16.mxu0 0
    %4597 = vmatpush1.bf16.msra.mxu0 %v3338
    %4598 = vmatprep.subr.bf16.mxu0 0
    %4599 = vmatpush1.bf16.msra.mxu0 %v3339
    %4600 = vmatprep.subr.bf16.mxu0 0
    %4601 = vmatpush1.bf16.msra.mxu0 %v3340
    %4602 = vmatprep.subr.bf16.mxu0 0
    %4603 = vmatpush1.bf16.msra.mxu0 %v3341
    %4604 = vmatprep.mubr.bf16.mxu0 %v408
    %4605 = vmatmul.mubr.bf16.gmra.mrb[0].mxu0 %v407
    %v4606 = vpop.f32.mrb[0].mxu0
    %v4607 = vadd.f32 %v4567, %v4606
    %v4608 = vpop.f32.mrb[0].mxu0
    %v4609 = vpop.f32.mrb[0].mxu0
    %v4610 = vpop.f32.mrb[0].mxu0
    %4611 = vdwg.mxu0
    %4612 = vmatprep.subr.bf16.mxu0 0
    %4613 = vmatpush1.bf16.msra.mxu0 %v3342
    %4614 = vmatprep.subr.bf16.mxu0 0
    %4615 = vmatpush1.bf16.msra.mxu0 %v3343
    %4616 = vmatprep.subr.bf16.mxu0 0
    %4617 = vmatpush1.bf16.msra.mxu0 %v3344
    %4618 = vmatprep.subr.bf16.mxu0 0
    %4619 = vmatpush1.bf16.msra.mxu0 %v3345
    %4620 = vmatprep.subr.bf16.mxu0 0
    %4621 = vmatpush1.bf16.msra.mxu0 %v3346
    %4622 = vmatprep.subr.bf16.mxu0 0
    %4623 = vmatpush1.bf16.msra.mxu0 %v3347
    %4624 = vmatprep.subr.bf16.mxu0 0
    %4625 = vmatpush1.bf16.msra.mxu0 %v3348
    %4626 = vmatprep.subr.bf16.mxu0 0
    %4627 = vmatpush1.bf16.msra.mxu0 %v3349
    %4628 = vmatprep.subr.bf16.mxu0 0
    %4629 = vmatpush1.bf16.msra.mxu0 %v3350
    %4630 = vmatprep.subr.bf16.mxu0 0
    %4631 = vmatpush1.bf16.msra.mxu0 %v3351
    %4632 = vmatprep.subr.bf16.mxu0 0
    %4633 = vmatpush1.bf16.msra.mxu0 %v3352
    %4634 = vmatprep.subr.bf16.mxu0 0
    %4635 = vmatpush1.bf16.msra.mxu0 %v3353
    %4636 = vmatprep.subr.bf16.mxu0 0
    %4637 = vmatpush1.bf16.msra.mxu0 %v3354
    %4638 = vmatprep.subr.bf16.mxu0 0
    %4639 = vmatpush1.bf16.msra.mxu0 %v3355
    %4640 = vmatprep.subr.bf16.mxu0 0
    %4641 = vmatpush1.bf16.msra.mxu0 %v3356
    %4642 = vmatprep.subr.bf16.mxu0 0
    %4643 = vmatpush1.bf16.msra.mxu0 %v3357
    %4644 = vmatprep.mubr.bf16.mxu0 %v410
    %4645 = vmatmul.mubr.bf16.gmra.mrb[0].mxu0 %v409
    %v4646 = vpop.f32.mrb[0].mxu0
    %v4647 = vadd.f32 %v4607, %v4646
    %v4648 = vpop.f32.mrb[0].mxu0
    %v4649 = vpop.f32.mrb[0].mxu0
    %v4650 = vpop.f32.mrb[0].mxu0
    %4651 = vdwg.mxu0
    %4652 = vmatprep.subr.bf16.mxu0 0
    %4653 = vmatpush1.bf16.msra.mxu0 %v3358
    %4654 = vmatprep.subr.bf16.mxu0 0
    %4655 = vmatpush1.bf16.msra.mxu0 %v3359
    %4656 = vmatprep.subr.bf16.mxu0 0
    %4657 = vmatpush1.bf16.msra.mxu0 %v3360
    %4658 = vmatprep.subr.bf16.mxu0 0
    %4659 = vmatpush1.bf16.msra.mxu0 %v3361
    %4660 = vmatprep.subr.bf16.mxu0 0
    %4661 = vmatpush1.bf16.msra.mxu0 %v3362
    %4662 = vmatprep.subr.bf16.mxu0 0
    %4663 = vmatpush1.bf16.msra.mxu0 %v3363
    %4664 = vmatprep.subr.bf16.mxu0 0
    %4665 = vmatpush1.bf16.msra.mxu0 %v3364
    %4666 = vmatprep.subr.bf16.mxu0 0
    %4667 = vmatpush1.bf16.msra.mxu0 %v3365
    %4668 = vmatprep.subr.bf16.mxu0 0
    %4669 = vmatpush1.bf16.msra.mxu0 %v3366
    %4670 = vmatprep.subr.bf16.mxu0 0
    %4671 = vmatpush1.bf16.msra.mxu0 %v3367
    %4672 = vmatprep.subr.bf16.mxu0 0
    %4673 = vmatpush1.bf16.msra.mxu0 %v3368
    %4674 = vmatprep.subr.bf16.mxu0 0
    %4675 = vmatpush1.bf16.msra.mxu0 %v3369
    %4676 = vmatprep.subr.bf16.mxu0 0
    %4677 = vmatpush1.bf16.msra.mxu0 %v3370
    %4678 = vmatprep.subr.bf16.mxu0 0
    %4679 = vmatpush1.bf16.msra.mxu0 %v3371
    %4680 = vmatprep.subr.bf16.mxu0 0
    %4681 = vmatpush1.bf16.msra.mxu0 %v3372
    %4682 = vmatprep.subr.bf16.mxu0 0
    %4683 = vmatpush1.bf16.msra.mxu0 %v3373
    %4684 = vmatprep.mubr.bf16.mxu0 %v412
    %4685 = vmatmul.mubr.bf16.gmra.mrb[0].mxu0 %v411
    %v4686 = vpop.f32.mrb[0].mxu0
    %v4687 = vadd.f32 %v4647, %v4686
    %v4688 = vpop.f32.mrb[0].mxu0
    %v4689 = vpop.f32.mrb[0].mxu0
    %v4690 = vpop.f32.mrb[0].mxu0
    %4691 = vdwg.mxu0
    %4692 = vmatprep.subr.bf16.mxu0 0
    %4693 = vmatpush1.bf16.msra.mxu0 %v3374
    %4694 = vmatprep.subr.bf16.mxu0 0
    %4695 = vmatpush1.bf16.msra.mxu0 %v3375
    %4696 = vmatprep.subr.bf16.mxu0 0
    %4697 = vmatpush1.bf16.msra.mxu0 %v3376
    %4698 = vmatprep.subr.bf16.mxu0 0
    %4699 = vmatpush1.bf16.msra.mxu0 %v3377
    %4700 = vmatprep.subr.bf16.mxu0 0
    %4701 = vmatpush1.bf16.msra.mxu0 %v3378
    %4702 = vmatprep.subr.bf16.mxu0 0
    %4703 = vmatpush1.bf16.msra.mxu0 %v3379
    %4704 = vmatprep.subr.bf16.mxu0 0
    %4705 = vmatpush1.bf16.msra.mxu0 %v3380
    %4706 = vmatprep.subr.bf16.mxu0 0
    %4707 = vmatpush1.bf16.msra.mxu0 %v3381
    %4708 = vmatprep.subr.bf16.mxu0 0
    %4709 = vmatpush1.bf16.msra.mxu0 %v3382
    %4710 = vmatprep.subr.bf16.mxu0 0
    %4711 = vmatpush1.bf16.msra.mxu0 %v3383
    %4712 = vmatprep.subr.bf16.mxu0 0
    %4713 = vmatpush1.bf16.msra.mxu0 %v3384
    %4714 = vmatprep.subr.bf16.mxu0 0
    %4715 = vmatpush1.bf16.msra.mxu0 %v3385
    %4716 = vmatprep.subr.bf16.mxu0 0
    %4717 = vmatpush1.bf16.msra.mxu0 %v3386
    %4718 = vmatprep.subr.bf16.mxu0 0
    %4719 = vmatpush1.bf16.msra.mxu0 %v3387
    %4720 = vmatprep.subr.bf16.mxu0 0
    %4721 = vmatpush1.bf16.msra.mxu0 %v3388
    %4722 = vmatprep.subr.bf16.mxu0 0
    %4723 = vmatpush1.bf16.msra.mxu0 %v3389
    %4724 = vmatprep.mubr.bf16.mxu0 %v414
    %4725 = vmatmul.mubr.bf16.gmra.mrb[0].mxu0 %v413
    %v4726 = vpop.f32.mrb[0].mxu0
    %v4727 = vadd.f32 %v4687, %v4726
    %v4728 = vpop.f32.mrb[0].mxu0
    %v4729 = vpop.f32.mrb[0].mxu0
    %v4730 = vpop.f32.mrb[0].mxu0
    %4731 = vdwg.mxu0
    %4732 = vmatprep.subr.bf16.mxu0 0
    %4733 = vmatpush1.bf16.msra.mxu0 %v3390
    %4734 = vmatprep.subr.bf16.mxu0 0
    %4735 = vmatpush1.bf16.msra.mxu0 %v3391
    %4736 = vmatprep.subr.bf16.mxu0 0
    %4737 = vmatpush1.bf16.msra.mxu0 %v3392
    %4738 = vmatprep.subr.bf16.mxu0 0
    %4739 = vmatpush1.bf16.msra.mxu0 %v3393
    %4740 = vmatprep.subr.bf16.mxu0 0
    %4741 = vmatpush1.bf16.msra.mxu0 %v3394
    %4742 = vmatprep.subr.bf16.mxu0 0
    %4743 = vmatpush1.bf16.msra.mxu0 %v3395
    %4744 = vmatprep.subr.bf16.mxu0 0
    %4745 = vmatpush1.bf16.msra.mxu0 %v3396
    %4746 = vmatprep.subr.bf16.mxu0 0
    %4747 = vmatpush1.bf16.msra.mxu0 %v3397
    %4748 = vmatprep.subr.bf16.mxu0 0
    %4749 = vmatpush1.bf16.msra.mxu0 %v3398
    %4750 = vmatprep.subr.bf16.mxu0 0
    %4751 = vmatpush1.bf16.msra.mxu0 %v3399
    %4752 = vmatprep.subr.bf16.mxu0 0
    %4753 = vmatpush1.bf16.msra.mxu0 %v3400
    %4754 = vmatprep.subr.bf16.mxu0 0
    %4755 = vmatpush1.bf16.msra.mxu0 %v3401
    %4756 = vmatprep.subr.bf16.mxu0 0
    %4757 = vmatpush1.bf16.msra.mxu0 %v3402
    %4758 = vmatprep.subr.bf16.mxu0 0
    %4759 = vmatpush1.bf16.msra.mxu0 %v3403
    %4760 = vmatprep.subr.bf16.mxu0 0
    %4761 = vmatpush1.bf16.msra.mxu0 %v3404
    %4762 = vmatprep.subr.bf16.mxu0 0
    %4763 = vmatpush1.bf16.msra.mxu0 %v3405
    %4764 = vmatprep.mubr.bf16.mxu0 %v416
    %4765 = vmatmul.mubr.bf16.gmra.mrb[0].mxu0 %v415
    %v4766 = vpop.f32.mrb[0].mxu0
    %v4767 = vadd.f32 %v4727, %v4766
    %v4768 = vpop.f32.mrb[0].mxu0
    %v4769 = vpop.f32.mrb[0].mxu0
    %v4770 = vpop.f32.mrb[0].mxu0
    %4771 = vdwg.mxu0
    %4772 = vmatprep.subr.bf16.mxu0 0
    %4773 = vmatpush1.bf16.msra.mxu0 %v3406
    %4774 = vmatprep.subr.bf16.mxu0 0
    %4775 = vmatpush1.bf16.msra.mxu0 %v3407
    %4776 = vmatprep.subr.bf16.mxu0 0
    %4777 = vmatpush1.bf16.msra.mxu0 %v3408
    %4778 = vmatprep.subr.bf16.mxu0 0
    %4779 = vmatpush1.bf16.msra.mxu0 %v3409
    %4780 = vmatprep.subr.bf16.mxu0 0
    %4781 = vmatpush1.bf16.msra.mxu0 %v3410
    %4782 = vmatprep.subr.bf16.mxu0 0
    %4783 = vmatpush1.bf16.msra.mxu0 %v3411
    %4784 = vmatprep.subr.bf16.mxu0 0
    %4785 = vmatpush1.bf16.msra.mxu0 %v3412
    %4786 = vmatprep.subr.bf16.mxu0 0
    %4787 = vmatpush1.bf16.msra.mxu0 %v3413
    %4788 = vmatprep.subr.bf16.mxu0 0
    %4789 = vmatpush1.bf16.msra.mxu0 %v3414
    %4790 = vmatprep.subr.bf16.mxu0 0
    %4791 = vmatpush1.bf16.msra.mxu0 %v3415
    %4792 = vmatprep.subr.bf16.mxu0 0
    %4793 = vmatpush1.bf16.msra.mxu0 %v3416
    %4794 = vmatprep.subr.bf16.mxu0 0
    %4795 = vmatpush1.bf16.msra.mxu0 %v3417
    %4796 = vmatprep.subr.bf16.mxu0 0
    %4797 = vmatpush1.bf16.msra.mxu0 %v3418
    %4798 = vmatprep.subr.bf16.mxu0 0
    %4799 = vmatpush1.bf16.msra.mxu0 %v3419
    %4800 = vmatprep.subr.bf16.mxu0 0
    %4801 = vmatpush1.bf16.msra.mxu0 %v3420
    %4802 = vmatprep.subr.bf16.mxu0 0
    %4803 = vmatpush1.bf16.msra.mxu0 %v3421
    %4804 = vmatprep.mubr.bf16.mxu0 %v418
    %4805 = vmatmul.mubr.bf16.gmra.mrb[0].mxu0 %v417
    %v4806 = vpop.f32.mrb[0].mxu0
    %v4807 = vadd.f32 %v4767, %v4806
    %v4808 = vpop.f32.mrb[0].mxu0
    %v4809 = vpop.f32.mrb[0].mxu0
    %v4810 = vpop.f32.mrb[0].mxu0
    %4811 = vdwg.mxu0
    %4812 = vmatprep.subr.bf16.mxu0 0
    %4813 = vmatpush1.bf16.msra.mxu0 %v3422
    %4814 = vmatprep.subr.bf16.mxu0 0
    %4815 = vmatpush1.bf16.msra.mxu0 %v3423
    %4816 = vmatprep.subr.bf16.mxu0 0
    %4817 = vmatpush1.bf16.msra.mxu0 %v3424
    %4818 = vmatprep.subr.bf16.mxu0 0
    %4819 = vmatpush1.bf16.msra.mxu0 %v3425
    %4820 = vmatprep.subr.bf16.mxu0 0
    %4821 = vmatpush1.bf16.msra.mxu0 %v3426
    %4822 = vmatprep.subr.bf16.mxu0 0
    %4823 = vmatpush1.bf16.msra.mxu0 %v3427
    %4824 = vmatprep.subr.bf16.mxu0 0
    %4825 = vmatpush1.bf16.msra.mxu0 %v3428
    %4826 = vmatprep.subr.bf16.mxu0 0
    %4827 = vmatpush1.bf16.msra.mxu0 %v3429
    %4828 = vmatprep.subr.bf16.mxu0 0
    %4829 = vmatpush1.bf16.msra.mxu0 %v3430
    %4830 = vmatprep.subr.bf16.mxu0 0
    %4831 = vmatpush1.bf16.msra.mxu0 %v3431
    %4832 = vmatprep.subr.bf16.mxu0 0
    %4833 = vmatpush1.bf16.msra.mxu0 %v3432
    %4834 = vmatprep.subr.bf16.mxu0 0
    %4835 = vmatpush1.bf16.msra.mxu0 %v3433
    %4836 = vmatprep.subr.bf16.mxu0 0
    %4837 = vmatpush1.bf16.msra.mxu0 %v3434
    %4838 = vmatprep.subr.bf16.mxu0 0
    %4839 = vmatpush1.bf16.msra.mxu0 %v3435
    %4840 = vmatprep.subr.bf16.mxu0 0
    %4841 = vmatpush1.bf16.msra.mxu0 %v3436
    %4842 = vmatprep.subr.bf16.mxu0 0
    %4843 = vmatpush1.bf16.msra.mxu0 %v3437
    %4844 = vmatprep.mubr.bf16.mxu0 %v420
    %4845 = vmatmul.mubr.bf16.gmra.mrb[0].mxu0 %v419
    %v4846 = vpop.f32.mrb[0].mxu0
    %v4847 = vadd.f32 %v4807, %v4846
    %v4848 = vpop.f32.mrb[0].mxu0
    %v4849 = vpop.f32.mrb[0].mxu0
    %v4850 = vpop.f32.mrb[0].mxu0
    %4851 = vdwg.mxu0
    %4852 = vmatprep.subr.bf16.mxu0 0
    %4853 = vmatpush1.bf16.msra.mxu0 %v3438
    %4854 = vmatprep.subr.bf16.mxu0 0
    %4855 = vmatpush1.bf16.msra.mxu0 %v3439
    %4856 = vmatprep.subr.bf16.mxu0 0
    %4857 = vmatpush1.bf16.msra.mxu0 %v3440
    %4858 = vmatprep.subr.bf16.mxu0 0
    %4859 = vmatpush1.bf16.msra.mxu0 %v3441
    %4860 = vmatprep.subr.bf16.mxu0 0
    %4861 = vmatpush1.bf16.msra.mxu0 %v3442
    %4862 = vmatprep.subr.bf16.mxu0 0
    %4863 = vmatpush1.bf16.msra.mxu0 %v3443
    %4864 = vmatprep.subr.bf16.mxu0 0
    %4865 = vmatpush1.bf16.msra.mxu0 %v3444
    %4866 = vmatprep.subr.bf16.mxu0 0
    %4867 = vmatpush1.bf16.msra.mxu0 %v3445
    %4868 = vmatprep.subr.bf16.mxu0 0
    %4869 = vmatpush1.bf16.msra.mxu0 %v3446
    %4870 = vmatprep.subr.bf16.mxu0 0
    %4871 = vmatpush1.bf16.msra.mxu0 %v3447
    %4872 = vmatprep.subr.bf16.mxu0 0
    %4873 = vmatpush1.bf16.msra.mxu0 %v3448
    %4874 = vmatprep.subr.bf16.mxu0 0
    %4875 = vmatpush1.bf16.msra.mxu0 %v3449
    %4876 = vmatprep.subr.bf16.mxu0 0
    %4877 = vmatpush1.bf16.msra.mxu0 %v3450
    %4878 = vmatprep.subr.bf16.mxu0 0
    %4879 = vmatpush1.bf16.msra.mxu0 %v3451
    %4880 = vmatprep.subr.bf16.mxu0 0
    %4881 = vmatpush1.bf16.msra.mxu0 %v3452
    %4882 = vmatprep.subr.bf16.mxu0 0
    %4883 = vmatpush1.bf16.msra.mxu0 %v3453
    %4884 = vmatprep.mubr.bf16.mxu0 %v422
    %4885 = vmatmul.mubr.bf16.gmra.mrb[0].mxu0 %v421
    %v4886 = vpop.f32.mrb[0].mxu0
    %v4887 = vadd.f32 %v4847, %v4886
    %v4888 = vpop.f32.mrb[0].mxu0
    %v4889 = vpop.f32.mrb[0].mxu0
    %v4890 = vpop.f32.mrb[0].mxu0
    %4891 = vdwg.mxu0
    %4892 = vmatprep.subr.bf16.mxu0 0
    %4893 = vmatpush1.bf16.msra.mxu0 %v3454
    %4894 = vmatprep.subr.bf16.mxu0 0
    %4895 = vmatpush1.bf16.msra.mxu0 %v3455
    %4896 = vmatprep.subr.bf16.mxu0 0
    %4897 = vmatpush1.bf16.msra.mxu0 %v3456
    %4898 = vmatprep.subr.bf16.mxu0 0
    %4899 = vmatpush1.bf16.msra.mxu0 %v3457
    %4900 = vmatprep.subr.bf16.mxu0 0
    %4901 = vmatpush1.bf16.msra.mxu0 %v3458
    %4902 = vmatprep.subr.bf16.mxu0 0
    %4903 = vmatpush1.bf16.msra.mxu0 %v3459
    %4904 = vmatprep.subr.bf16.mxu0 0
    %4905 = vmatpush1.bf16.msra.mxu0 %v3460
    %4906 = vmatprep.subr.bf16.mxu0 0
    %4907 = vmatpush1.bf16.msra.mxu0 %v3461
    %4908 = vmatprep.subr.bf16.mxu0 0
    %4909 = vmatpush1.bf16.msra.mxu0 %v3462
    %4910 = vmatprep.subr.bf16.mxu0 0
    %4911 = vmatpush1.bf16.msra.mxu0 %v3463
    %4912 = vmatprep.subr.bf16.mxu0 0
    %4913 = vmatpush1.bf16.msra.mxu0 %v3464
    %4914 = vmatprep.subr.bf16.mxu0 0
    %4915 = vmatpush1.bf16.msra.mxu0 %v3465
    %4916 = vmatprep.subr.bf16.mxu0 0
    %4917 = vmatpush1.bf16.msra.mxu0 %v3466
    %4918 = vmatprep.subr.bf16.mxu0 0
    %4919 = vmatpush1.bf16.msra.mxu0 %v3467
    %4920 = vmatprep.subr.bf16.mxu0 0
    %4921 = vmatpush1.bf16.msra.mxu0 %v3468
    %4922 = vmatprep.subr.bf16.mxu0 0
    %4923 = vmatpush1.bf16.msra.mxu0 %v3469
    %4924 = vmatprep.mubr.bf16.mxu0 %v424
    %4925 = vmatmul.mubr.bf16.gmra.mrb[0].mxu0 %v423
    %v4926 = vpop.f32.mrb[0].mxu0
    %v4927 = vadd.f32 %v4887, %v4926
    %v4928 = vpop.f32.mrb[0].mxu0
    %v4929 = vpop.f32.mrb[0].mxu0
    %v4930 = vpop.f32.mrb[0].mxu0
    %4931 = vdwg.mxu0
    %4932 = vmatprep.subr.bf16.mxu0 0
    %4933 = vmatpush1.bf16.msra.mxu0 %v3470
    %4934 = vmatprep.subr.bf16.mxu0 0
    %4935 = vmatpush1.bf16.msra.mxu0 %v3471
    %4936 = vmatprep.subr.bf16.mxu0 0
    %4937 = vmatpush1.bf16.msra.mxu0 %v3472
    %4938 = vmatprep.subr.bf16.mxu0 0
    %4939 = vmatpush1.bf16.msra.mxu0 %v3473
    %4940 = vmatprep.subr.bf16.mxu0 0
    %4941 = vmatpush1.bf16.msra.mxu0 %v3474
    %4942 = vmatprep.subr.bf16.mxu0 0
    %4943 = vmatpush1.bf16.msra.mxu0 %v3475
    %4944 = vmatprep.subr.bf16.mxu0 0
    %4945 = vmatpush1.bf16.msra.mxu0 %v3476
    %4946 = vmatprep.subr.bf16.mxu0 0
    %4947 = vmatpush1.bf16.msra.mxu0 %v3477
    %4948 = vmatprep.subr.bf16.mxu0 0
    %4949 = vmatpush1.bf16.msra.mxu0 %v3478
    %4950 = vmatprep.subr.bf16.mxu0 0
    %4951 = vmatpush1.bf16.msra.mxu0 %v3479
    %4952 = vmatprep.subr.bf16.mxu0 0
    %4953 = vmatpush1.bf16.msra.mxu0 %v3480
    %4954 = vmatprep.subr.bf16.mxu0 0
    %4955 = vmatpush1.bf16.msra.mxu0 %v3481
    %4956 = vmatprep.subr.bf16.mxu0 0
    %4957 = vmatpush1.bf16.msra.mxu0 %v3482
    %4958 = vmatprep.subr.bf16.mxu0 0
    %4959 = vmatpush1.bf16.msra.mxu0 %v3483
    %4960 = vmatprep.subr.bf16.mxu0 0
    %4961 = vmatpush1.bf16.msra.mxu0 %v3484
    %4962 = vmatprep.subr.bf16.mxu0 0
    %4963 = vmatpush1.bf16.msra.mxu0 %v3485
    %4964 = vmatprep.mubr.bf16.mxu0 %v426
    %4965 = vmatmul.mubr.bf16.gmra.mrb[0].mxu0 %v425
    %v4966 = vpop.f32.mrb[0].mxu0
    %v4967 = vadd.f32 %v4927, %v4966
    %v4968 = vpop.f32.mrb[0].mxu0
    %v4969 = vpop.f32.mrb[0].mxu0
    %v4970 = vpop.f32.mrb[0].mxu0
    %4971 = vdwg.mxu0
    %4972 = vmatprep.subr.bf16.mxu0 0
    %4973 = vmatpush1.bf16.msra.mxu0 %v3486
    %4974 = vmatprep.subr.bf16.mxu0 0
    %4975 = vmatpush1.bf16.msra.mxu0 %v3487
    %4976 = vmatprep.subr.bf16.mxu0 0
    %4977 = vmatpush1.bf16.msra.mxu0 %v3488
    %4978 = vmatprep.subr.bf16.mxu0 0
    %4979 = vmatpush1.bf16.msra.mxu0 %v3489
    %4980 = vmatprep.subr.bf16.mxu0 0
    %4981 = vmatpush1.bf16.msra.mxu0 %v3490
    %4982 = vmatprep.subr.bf16.mxu0 0
    %4983 = vmatpush1.bf16.msra.mxu0 %v3491
    %4984 = vmatprep.subr.bf16.mxu0 0
    %4985 = vmatpush1.bf16.msra.mxu0 %v3492
    %4986 = vmatprep.subr.bf16.mxu0 0
    %4987 = vmatpush1.bf16.msra.mxu0 %v3493
    %4988 = vmatprep.subr.bf16.mxu0 0
    %4989 = vmatpush1.bf16.msra.mxu0 %v3494
    %4990 = vmatprep.subr.bf16.mxu0 0
    %4991 = vmatpush1.bf16.msra.mxu0 %v3495
    %4992 = vmatprep.subr.bf16.mxu0 0
    %4993 = vmatpush1.bf16.msra.mxu0 %v3496
    %4994 = vmatprep.subr.bf16.mxu0 0
    %4995 = vmatpush1.bf16.msra.mxu0 %v3497
    %4996 = vmatprep.subr.bf16.mxu0 0
    %4997 = vmatpush1.bf16.msra.mxu0 %v3498
    %4998 = vmatprep.subr.bf16.mxu0 0
    %4999 = vmatpush1.bf16.msra.mxu0 %v3499
    %5000 = vmatprep.subr.bf16.mxu0 0
    %5001 = vmatpush1.bf16.msra.mxu0 %v3500
    %5002 = vmatprep.subr.bf16.mxu0 0
    %5003 = vmatpush1.bf16.msra.mxu0 %v3501
    %5004 = vmatprep.mubr.bf16.mxu0 %v428
    %5005 = vmatmul.mubr.bf16.gmra.mrb[0].mxu0 %v427
    %v5006 = vpop.f32.mrb[0].mxu0
    %v5007 = vadd.f32 %v4967, %v5006
    %v5008 = vpop.f32.mrb[0].mxu0
    %v5009 = vpop.f32.mrb[0].mxu0
    %v5010 = vpop.f32.mrb[0].mxu0
    %5011 = vdwg.mxu0
    %5012 = vmatprep.subr.bf16.mxu0 0
    %5013 = vmatpush1.bf16.msra.mxu0 %v3502
    %5014 = vmatprep.subr.bf16.mxu0 0
    %5015 = vmatpush1.bf16.msra.mxu0 %v3503
    %5016 = vmatprep.subr.bf16.mxu0 0
    %5017 = vmatpush1.bf16.msra.mxu0 %v3504
    %5018 = vmatprep.subr.bf16.mxu0 0
    %5019 = vmatpush1.bf16.msra.mxu0 %v3505
    %5020 = vmatprep.subr.bf16.mxu0 0
    %5021 = vmatpush1.bf16.msra.mxu0 %v3506
    %5022 = vmatprep.subr.bf16.mxu0 0
    %5023 = vmatpush1.bf16.msra.mxu0 %v3507
    %5024 = vmatprep.subr.bf16.mxu0 0
    %5025 = vmatpush1.bf16.msra.mxu0 %v3508
    %5026 = vmatprep.subr.bf16.mxu0 0
    %5027 = vmatpush1.bf16.msra.mxu0 %v3509
    %5028 = vmatprep.subr.bf16.mxu0 0
    %5029 = vmatpush1.bf16.msra.mxu0 %v3510
    %5030 = vmatprep.subr.bf16.mxu0 0
    %5031 = vmatpush1.bf16.msra.mxu0 %v3511
    %5032 = vmatprep.subr.bf16.mxu0 0
    %5033 = vmatpush1.bf16.msra.mxu0 %v3512
    %5034 = vmatprep.subr.bf16.mxu0 0
    %5035 = vmatpush1.bf16.msra.mxu0 %v3513
    %5036 = vmatprep.subr.bf16.mxu0 0
    %5037 = vmatpush1.bf16.msra.mxu0 %v3514
    %5038 = vmatprep.subr.bf16.mxu0 0
    %5039 = vmatpush1.bf16.msra.mxu0 %v3515
    %5040 = vmatprep.subr.bf16.mxu0 0
    %5041 = vmatpush1.bf16.msra.mxu0 %v3516
    %5042 = vmatprep.subr.bf16.mxu0 0
    %5043 = vmatpush1.bf16.msra.mxu0 %v3517
    %5044 = vmatprep.mubr.bf16.mxu0 %v430
    %5045 = vmatmul.mubr.bf16.gmra.mrb[0].mxu0 %v429
    %v5046 = vpop.f32.mrb[0].mxu0
    %v5047 = vadd.f32 %v5007, %v5046
    %v5048 = vpop.f32.mrb[0].mxu0
    %v5049 = vpop.f32.mrb[0].mxu0
    %v5050 = vpop.f32.mrb[0].mxu0
    %5051 = vdwg.mxu0
    %5052 = vmatprep.subr.bf16.mxu0 0
    %5053 = vmatpush1.bf16.msra.mxu0 %v3518
    %5054 = vmatprep.subr.bf16.mxu0 0
    %5055 = vmatpush1.bf16.msra.mxu0 %v3519
    %5056 = vmatprep.subr.bf16.mxu0 0
    %5057 = vmatpush1.bf16.msra.mxu0 %v3520
    %5058 = vmatprep.subr.bf16.mxu0 0
    %5059 = vmatpush1.bf16.msra.mxu0 %v3521
    %5060 = vmatprep.subr.bf16.mxu0 0
    %5061 = vmatpush1.bf16.msra.mxu0 %v3522
    %5062 = vmatprep.subr.bf16.mxu0 0
    %5063 = vmatpush1.bf16.msra.mxu0 %v3523
    %5064 = vmatprep.subr.bf16.mxu0 0
    %5065 = vmatpush1.bf16.msra.mxu0 %v3524
    %5066 = vmatprep.subr.bf16.mxu0 0
    %5067 = vmatpush1.bf16.msra.mxu0 %v3525
    %5068 = vmatprep.subr.bf16.mxu0 0
    %5069 = vmatpush1.bf16.msra.mxu0 %v3526
    %5070 = vmatprep.subr.bf16.mxu0 0
    %5071 = vmatpush1.bf16.msra.mxu0 0
    %5072 = vmatprep.subr.bf16.mxu0 0
    %5073 = vmatpush1.bf16.msra.mxu0 0
    %5074 = vmatprep.subr.bf16.mxu0 0
    %5075 = vmatpush1.bf16.msra.mxu0 0
    %5076 = vmatprep.subr.bf16.mxu0 0
    %5077 = vmatpush1.bf16.msra.mxu0 0
    %5078 = vmatprep.subr.bf16.mxu0 0
    %5079 = vmatpush1.bf16.msra.mxu0 0
    %5080 = vmatprep.subr.bf16.mxu0 0
    %5081 = vmatpush1.bf16.msra.mxu0 0
    %5082 = vmatprep.subr.bf16.mxu0 0
    %5083 = vmatpush1.bf16.msra.mxu0 0
    %5084 = vmatprep.mubr.bf16.mxu0 %v3970
    %5085 = vmatmul.mubr.bf16.gmra.mrb[0].mxu0 %v431
    %v5086 = vpop.f32.mrb[0].mxu0
    %v5087 = vadd.f32 %v5047, %v5086
    %v5088 = vpop.f32.mrb[0].mxu0
    %v5089 = vpop.f32.mrb[0].mxu0
    %v5090 = vpop.f32.mrb[0].mxu0
    %5091 = vdwg.mxu0
    %5092 = vst [vmem:[#allocation8] sm:$0x3] %v5087
    %v5093 = vlaneseq
    %v5094 = vand.u32 %v5093, 127
    %vm5095 = vcmp.lt.s32.totalorder %v5094, 6
    %v5096 = vsel %vm5095, %v5087, -inf
    %vm5097 = vcmask 1041408
    %v5098 = vsel %vm5097, %v5096, -inf
    %5099 = vmax.xlane.f32.xlu0 %v5098
    %v5100 = vpop.xlane.xlu0 %5099
    %vm5101 = vcmp.eq.f32.partialorder %v5096, %v5100
    %v5102 = vsel %vm5101, %v5094, 128
    %v5103 = vsel %vm5097, %v5102, 2147483647
    %v5104 = vand.u32 %v5103, 65535
    %v5105 = vshra.s32 %v5103, 16
    %v5106 = vcvt.s32.f32 %v5104
    %v5107 = vcvt.s32.f32 %v5105
    %5108 = vmin.xlane.f32.xlu0 %v5107
    %v5109 = vpop.xlane.xlu0 %5108
    %vm5110 = vcmp.eq.f32.partialorder %v5107, %v5109
    %v5111 = vsel %vm5110, %v5106, inf
    %5112 = vmin.xlane.f32.xlu0 %v5111
    %v5113 = vpop.xlane.xlu0 %5112
    %v5114 = vcvt.f32.s32 %v5113
    %v5115 = vcvt.f32.s32 %v5109
    %v5116 = vshll.u32 %v5115, 16
    %v5117 = vadd.s32 %v5116, %v5114
    %vm5118 = vcmask 1024
    %5119 = vst.msk [vmem:[%s4] sm:$0x3] %vm5118, %v5117
    // Predicated region
    $region26: #{tpu_custom_call.1} parent=1 // pred_check
      _
    $region27: #{tpu_custom_call.1} parent=1 // pred_check_branch
      %5121 = sbr.rel (0) target = $region29
    $region28: #{tpu_custom_call.1} parent=1 // pred_region
      %s5123 = ssub.s32 32, 32
      %5124 = vsyncadd [#allocation4], %s5123
      %s5126 = sshll.u32 [#allocation8], 4
      %s5127 = int_to_ptr.vmem [resolvable:$true] %s5126
      %5129 = dma.vmem_to_hbm [thread:$0]  %s5127, 32, %s3, [#allocation4]
    $region29: #{tpu_custom_call.1} parent=1 // pred_fallthru
      _
    // Predicated region
    $region30: #{tpu_custom_call.1} parent=1 // pred_check
      _
    $region31: #{tpu_custom_call.1} parent=1 // pred_check_branch
      %5131 = sbr.rel (0) target = $region33
    $region32: #{tpu_custom_call.1} parent=1 // pred_region
      _
    $region33: #{tpu_custom_call.1} parent=1 // pred_fallthru
      _
    // Predicated region
    $region34: #{tpu_custom_call.1} parent=1 // pred_check
      _
    $region35: #{tpu_custom_call.1} parent=1 // pred_check_branch
      %5133 = sbr.rel (0) target = $region37
    $region36: #{tpu_custom_call.1} parent=1 // pred_region
      %5134 = dma.done [#allocation4], 32
    $region37: #{tpu_custom_call.1} parent=1 // pred_fallthru
      _
    // Predicated region
    $region38: #{tpu_custom_call.1} parent=1 // pred_check
      _
    $region39: #{tpu_custom_call.1} parent=1 // pred_check_branch
      %5136 = sbr.rel (0) target = $region41
    $region40: #{tpu_custom_call.1} parent=1 // pred_region
      _
    $region41: #{tpu_custom_call.1} parent=1 // pred_fallthru
      _
    %5137 = vsyncpa [#allocation3], 1
    %5138 = vsyncpa [#allocation6], 1
    %5139 = vsyncpa [#allocation4], 1

</llo_original>
